<compile_context>
chip_gen: v7x
topology: tpu7x:2x2x1
jax: 0.10.0
libtpu: 0.0.40
codegen_flags: <defaults>
</compile_context>

<pallas_src>
import math

import jax
import jax.numpy as jnp
import numpy as np
from jax.experimental import pallas as pl
from jax.experimental.pallas import tpu as pltpu


# ----------------------------------------------------------------------------
# In-kernel helpers (pure jnp on values already loaded from VMEM refs)
# ----------------------------------------------------------------------------
def _layer_norm(x, w, b, eps=1e-5):
    mu = jnp.mean(x, axis=-1, keepdims=True)
    var = jnp.mean(jnp.square(x - mu), axis=-1, keepdims=True)
    return (x - mu) * jax.lax.rsqrt(var + eps) * w + b


def _attention(q_in, k_in, v_in, wq, bq, wk, bk, wv, bv, wo, bo, nhead):
    """PyTorch-style MultiheadAttention for a single batch element.

    q_in: (T, E) f32; k_in / v_in: (S, E) f32.
    wq/wk/wv/wo: (E, E) bf16 right-multiply matrices (wq already scaled by
    1/sqrt(head_dim)); bq/bk/bv/bo: (1, E) f32 (bq already scaled).
    """
    T, E = q_in.shape
    hd = E // nhead
    bf = jnp.bfloat16
    f32 = jnp.float32

    # Full-width projections (K = E -> good MXU utilization), f32 accumulate.
    q = jnp.dot(q_in.astype(bf), wq, preferred_element_type=f32) + bq
    k = jnp.dot(k_in.astype(bf), wk, preferred_element_type=f32) + bk
    v = jnp.dot(v_in.astype(bf), wv, preferred_element_type=f32) + bv
    q = q.astype(bf)
    k = k.astype(bf)
    v = v.astype(bf)

    # Per-head scores / attn-value (small matmuls), outputs concatenated so the
    # output projection below is a single K=E matmul.
    head_outs = []
    for h in range(nhead):
        sl = slice(h * hd, (h + 1) * hd)
        s = jax.lax.dot_general(q[:, sl], k[:, sl],
                                (((1,), (1,)), ((), ())),
                                preferred_element_type=f32)      # (T, S)
        s = s - jnp.max(s, axis=-1, keepdims=True)
        p = jnp.exp(s)
        p = p * pl.reciprocal(jnp.sum(p, axis=-1, keepdims=True), approx=True)
        head_outs.append(
            jnp.dot(p.astype(bf), v[:, sl], preferred_element_type=f32))
    o = jnp.concatenate(head_outs, axis=-1)                       # (T, E) f32

    return jnp.dot(o.astype(bf), wo, preferred_element_type=f32) + bo


# ----------------------------------------------------------------------------
# Pallas kernel: one full decoder layer per batch element
# ----------------------------------------------------------------------------
def make_decoder_layer_kernel(nhead):
    def kernel(tgt_ref, mem_ref, qpos_ref, pos_ref,
               sa_wq, sa_bq, sa_wk, sa_bk, sa_wv, sa_bv, sa_wo, sa_bo,
               ca_wq, ca_bq, ca_wk, ca_bk, ca_wv, ca_bv, ca_wo, ca_bo,
               w1, b1, w2, b2,
               ln1w, ln1b, ln2w, ln2b, ln3w, ln3b,
               out_ref):
        bf = jnp.bfloat16
        f32 = jnp.float32

        tgt = tgt_ref[0]      # (T, D) f32
        mem = mem_ref[0]      # (S, D) f32
        qpos = qpos_ref[0]    # (T, D)
        pos = pos_ref[0]      # (S, D)

        # --- self attention (q = k = tgt + query_pos, v = tgt) ---
        qk_in = tgt + qpos
        sa = _attention(qk_in, qk_in, tgt,
                        sa_wq[...], sa_bq[...], sa_wk[...], sa_bk[...],
                        sa_wv[...], sa_bv[...], sa_wo[...], sa_bo[...], nhead)
        x = _layer_norm(tgt + sa, ln1w[...], ln1b[...])

        # --- cross attention (q = x + query_pos, k = mem + pos, v = mem) ---
        ca = _attention(x + qpos, mem + pos, mem,
                        ca_wq[...], ca_bq[...], ca_wk[...], ca_bk[...],
                        ca_wv[...], ca_bv[...], ca_wo[...], ca_bo[...], nhead)
        x = _layer_norm(x + ca, ln2w[...], ln2b[...])

        # --- feed-forward: linear1 -> relu -> linear2 ---
        h = jnp.dot(x.astype(bf), w1[...], preferred_element_type=f32) + b1[...]
        h = jnp.maximum(h, 0.0)
        ff = jnp.dot(h.astype(bf), w2[...], preferred_element_type=f32) + b2[...]
        x = _layer_norm(x + ff, ln3w[...], ln3b[...])

        out_ref[0] = x
    return kernel


# ----------------------------------------------------------------------------
# Wrapper
# ----------------------------------------------------------------------------
def transformer_decoder_layer(tgt, memory, query_pos, pos, kparams, nhead):
    """tgt/query_pos: (T, B, D); memory/pos: (S, B, D) — PyTorch seq-first."""
    T, B, D = tgt.shape
    S = memory.shape[0]
    assert D % nhead == 0, "d_model must be divisible by nhead"

    # kernel works batch-first; transpose once outside the kernel
    tgt_b = jnp.transpose(tgt, (1, 0, 2))
    mem_b = jnp.transpose(memory, (1, 0, 2))
    qpos_b = jnp.transpose(query_pos, (1, 0, 2))
    pos_b = jnp.transpose(pos, (1, 0, 2))

    def seq_spec(L):
        return pl.BlockSpec((1, L, D), lambda b: (b, 0, 0))

    def w_spec(shape):
        nd = len(shape)
        return pl.BlockSpec(shape, lambda b, _nd=nd: (0,) * _nd)

    in_specs = ([seq_spec(T), seq_spec(S), seq_spec(T), seq_spec(S)]
                + [w_spec(p.shape) for p in kparams])

    out_b = pl.pallas_call(
        make_decoder_layer_kernel(nhead),
        out_shape=jax.ShapeDtypeStruct((B, T, D), jnp.float32),
        grid_spec=pltpu.PrefetchScalarGridSpec(
            num_scalar_prefetch=0,
            grid=(B,),
            in_specs=in_specs,
            out_specs=seq_spec(T),
        ),
        compiler_params=pltpu.CompilerParams(
            dimension_semantics=("parallel",),
            vmem_limit_bytes=32 * 1024 * 1024),
    )(tgt_b, mem_b, qpos_b, pos_b, *kparams)

    return jnp.transpose(out_b, (1, 0, 2))


# ----------------------------------------------------------------------------
# Parameters: PyTorch-layout init + kernel-layout preparation
# ----------------------------------------------------------------------------
def init_params(key, d_model, dim_feedforward):
    d, f = d_model, dim_feedforward
    ks = jax.random.split(key, 12)

    def uni(k, shape, fan_in):
        bound = 1.0 / math.sqrt(fan_in)
        return jax.random.uniform(k, shape, jnp.float32, -bound, bound)

    return dict(
        sa_in_w=uni(ks[0], (3 * d, d), d),
        sa_in_b=uni(ks[1], (3 * d,), d),
        sa_out_w=uni(ks[2], (d, d), d),
        sa_out_b=uni(ks[3], (d,), d),
        ca_in_w=uni(ks[4], (3 * d, d), d),
        ca_in_b=uni(ks[5], (3 * d,), d),
        ca_out_w=uni(ks[6], (d, d), d),
        ca_out_b=uni(ks[7], (d,), d),
        w1=uni(ks[8], (f, d), d),
        b1=uni(ks[9], (f,), d),
        w2=uni(ks[10], (d, f), f),
        b2=uni(ks[11], (d,), f),
        ln1_w=jnp.ones((d,), jnp.float32), ln1_b=jnp.zeros((d,), jnp.float32),
        ln2_w=jnp.ones((d,), jnp.float32), ln2_b=jnp.zeros((d,), jnp.float32),
        ln3_w=jnp.ones((d,), jnp.float32), ln3_b=jnp.zeros((d,), jnp.float32),
    )


def prepare_kernel_params(p, d_model, nhead):
    """Pre-split / pre-transpose / pre-scale / bf16-cast weights (one-time)."""
    E = d_model
    hd = E // nhead
    scale = 1.0 / math.sqrt(hd)
    bf = jnp.bfloat16

    def attn(prefix):
        in_w, in_b = p[prefix + "_in_w"], p[prefix + "_in_b"]
        out_w, out_b = p[prefix + "_out_w"], p[prefix + "_out_b"]
        wq = (in_w[:E].T * scale).astype(bf)          # scale folded into Wq
        wk = in_w[E:2 * E].T.astype(bf)
        wv = in_w[2 * E:].T.astype(bf)
        bq = (in_b[:E] * scale).reshape(1, E)
        bk = in_b[E:2 * E].reshape(1, E)
        bv = in_b[2 * E:].reshape(1, E)
        wo = out_w.T.astype(bf)
        bo = out_b.reshape(1, E)
        return [wq, bq, wk, bk, wv, bv, wo, bo]

    ffn = [p["w1"].T.astype(bf), p["b1"].reshape(1, -1),
           p["w2"].T.astype(bf), p["b2"].reshape(1, -1)]
    lns = [p["ln1_w"].reshape(1, -1), p["ln1_b"].reshape(1, -1),
           p["ln2_w"].reshape(1, -1), p["ln2_b"].reshape(1, -1),
           p["ln3_w"].reshape(1, -1), p["ln3_b"].reshape(1, -1)]
    return attn("sa") + attn("ca") + ffn + lns


# ----------------------------------------------------------------------------
# Pure-JAX reference (batch-first, f32 HIGHEST precision) for correctness
# ----------------------------------------------------------------------------
def reference_forward(tgt_b, mem_b, qpos_b, pos_b, p, nhead):
    hp = jax.lax.Precision.HIGHEST

    def mha(q_in, k_in, v_in, in_w, in_b, out_w, out_b):
        B, T, E = q_in.shape
        hd = E // nhead
        q = jnp.einsum("btd,ed->bte", q_in, in_w[:E], precision=hp) + in_b[:E]
        k = jnp.einsum("bsd,ed->bse", k_in, in_w[E:2 * E], precision=hp) + in_b[E:2 * E]
        v = jnp.einsum("bsd,ed->bse", v_in, in_w[2 * E:], precision=hp) + in_b[2 * E:]
        q = q.reshape(B, T, nhead, hd).transpose(0, 2, 1, 3) / math.sqrt(hd)
        k = k.reshape(B, -1, nhead, hd).transpose(0, 2, 1, 3)
        v = v.reshape(B, -1, nhead, hd).transpose(0, 2, 1, 3)
        s = jnp.einsum("bhtd,bhsd->bhts", q, k, precision=hp)
        a = jax.nn.softmax(s, axis=-1)
        o = jnp.einsum("bhts,bhsd->bhtd", a, v, precision=hp)
        o = o.transpose(0, 2, 1, 3).reshape(B, T, E)
        return jnp.einsum("bte,oe->bto", o, out_w, precision=hp) + out_b

    def ln(x, w, b):
        mu = x.mean(-1, keepdims=True)
        var = ((x - mu) ** 2).mean(-1, keepdims=True)
        return (x - mu) / jnp.sqrt(var + 1e-5) * w + b

    x = tgt_b
    qk = x + qpos_b
    x = ln(x + mha(qk, qk, x, p["sa_in_w"], p["sa_in_b"],
                   p["sa_out_w"], p["sa_out_b"]), p["ln1_w"], p["ln1_b"])
    x = ln(x + mha(x + qpos_b, mem_b + pos_b, mem_b, p["ca_in_w"], p["ca_in_b"],
                   p["ca_out_w"], p["ca_out_b"]), p["ln2_w"], p["ln2_b"])
    h = jnp.maximum(jnp.einsum("btd,fd->btf", x, p["w1"], precision=hp) + p["b1"], 0.0)
    ff = jnp.einsum("btf,df->btd", h, p["w2"], precision=hp) + p["b2"]
    return ln(x + ff, p["ln3_w"], p["ln3_b"])


# ----------------------------------------------------------------------------
if __name__ == "__main__":
    d_model, nhead, dim_feedforward = 128, 8, 256
    T, S, B = 8, 16, 2   # num queries, memory length, batch

    key = jax.random.PRNGKey(0)
    k1, k2, k3, k4, kp = jax.random.split(key, 5)
    tgt = jax.random.normal(k1, (T, B, d_model), jnp.float32)
    memory = jax.random.normal(k2, (S, B, d_model), jnp.float32)
    query_pos = jax.random.normal(k3, (T, B, d_model), jnp.float32)
    pos = jax.random.normal(k4, (S, B, d_model), jnp.float32)

    params = init_params(kp, d_model, dim_feedforward)
    kparams = prepare_kernel_params(params, d_model, nhead)

    out = transformer_decoder_layer(tgt, memory, query_pos, pos, kparams, nhead)
    out = jax.block_until_ready(out)
    assert out.shape == (T, B, d_model)

    ref_b = reference_forward(
        jnp.transpose(tgt, (1, 0, 2)), jnp.transpose(memory, (1, 0, 2)),
        jnp.transpose(query_pos, (1, 0, 2)), jnp.transpose(pos, (1, 0, 2)),
        params, nhead)
    ref = jnp.transpose(ref_b, (1, 0, 2))

    # bf16 matmul inputs + approx reciprocal -> slightly looser tolerance
    np.testing.assert_allclose(np.asarray(out), np.asarray(ref),
                               rtol=3e-2, atol=3e-2)
    print("KERNEL_OK")
</pallas_src>

<mosaic_0001>
module attributes {stable_mosaic.version = 11 : i64} {
  func.func @kernel(%arg0: i32, %arg1: memref<1x8x128xf32, #tpu.memory_space<vmem>>, %arg2: memref<1x16x128xf32, #tpu.memory_space<vmem>>, %arg3: memref<1x8x128xf32, #tpu.memory_space<vmem>>, %arg4: memref<1x16x128xf32, #tpu.memory_space<vmem>>, %arg5: memref<128x128xbf16, #tpu.memory_space<vmem>>, %arg6: memref<1x128xf32, #tpu.memory_space<vmem>>, %arg7: memref<128x128xbf16, #tpu.memory_space<vmem>>, %arg8: memref<1x128xf32, #tpu.memory_space<vmem>>, %arg9: memref<128x128xbf16, #tpu.memory_space<vmem>>, %arg10: memref<1x128xf32, #tpu.memory_space<vmem>>, %arg11: memref<128x128xbf16, #tpu.memory_space<vmem>>, %arg12: memref<1x128xf32, #tpu.memory_space<vmem>>, %arg13: memref<128x128xbf16, #tpu.memory_space<vmem>>, %arg14: memref<1x128xf32, #tpu.memory_space<vmem>>, %arg15: memref<128x128xbf16, #tpu.memory_space<vmem>>, %arg16: memref<1x128xf32, #tpu.memory_space<vmem>>, %arg17: memref<128x128xbf16, #tpu.memory_space<vmem>>, %arg18: memref<1x128xf32, #tpu.memory_space<vmem>>, %arg19: memref<128x128xbf16, #tpu.memory_space<vmem>>, %arg20: memref<1x128xf32, #tpu.memory_space<vmem>>, %arg21: memref<128x256xbf16, #tpu.memory_space<vmem>>, %arg22: memref<1x256xf32, #tpu.memory_space<vmem>>, %arg23: memref<256x128xbf16, #tpu.memory_space<vmem>>, %arg24: memref<1x128xf32, #tpu.memory_space<vmem>>, %arg25: memref<1x128xf32, #tpu.memory_space<vmem>>, %arg26: memref<1x128xf32, #tpu.memory_space<vmem>>, %arg27: memref<1x128xf32, #tpu.memory_space<vmem>>, %arg28: memref<1x128xf32, #tpu.memory_space<vmem>>, %arg29: memref<1x128xf32, #tpu.memory_space<vmem>>, %arg30: memref<1x128xf32, #tpu.memory_space<vmem>>, %arg31: memref<1x8x128xf32, #tpu.memory_space<vmem>>) attributes {dimension_semantics = [#tpu.dimension_semantics<parallel>], iteration_bounds = array<i64: 2>, scalar_prefetch = 0 : i64, scratch_operands = 0 : i64, tpu.core_type = #tpu.core_type<tc>, window_params = [{transform_indices = @transform_0, window_bounds = array<i64: 1, 8, 128>}, {transform_indices = @transform_1, window_bounds = array<i64: 1, 16, 128>}, {transform_indices = @transform_2, window_bounds = array<i64: 1, 8, 128>}, {transform_indices = @transform_3, window_bounds = array<i64: 1, 16, 128>}, {pipeline_mode = #tpu.pipeline_mode<synchronous>, transform_indices = @transform_4, window_bounds = array<i64: 128, 128>}, {pipeline_mode = #tpu.pipeline_mode<synchronous>, transform_indices = @transform_5, window_bounds = array<i64: 1, 128>}, {pipeline_mode = #tpu.pipeline_mode<synchronous>, transform_indices = @transform_6, window_bounds = array<i64: 128, 128>}, {pipeline_mode = #tpu.pipeline_mode<synchronous>, transform_indices = @transform_7, window_bounds = array<i64: 1, 128>}, {pipeline_mode = #tpu.pipeline_mode<synchronous>, transform_indices = @transform_8, window_bounds = array<i64: 128, 128>}, {pipeline_mode = #tpu.pipeline_mode<synchronous>, transform_indices = @transform_9, window_bounds = array<i64: 1, 128>}, {pipeline_mode = #tpu.pipeline_mode<synchronous>, transform_indices = @transform_10, window_bounds = array<i64: 128, 128>}, {pipeline_mode = #tpu.pipeline_mode<synchronous>, transform_indices = @transform_11, window_bounds = array<i64: 1, 128>}, {pipeline_mode = #tpu.pipeline_mode<synchronous>, transform_indices = @transform_12, window_bounds = array<i64: 128, 128>}, {pipeline_mode = #tpu.pipeline_mode<synchronous>, transform_indices = @transform_13, window_bounds = array<i64: 1, 128>}, {pipeline_mode = #tpu.pipeline_mode<synchronous>, transform_indices = @transform_14, window_bounds = array<i64: 128, 128>}, {pipeline_mode = #tpu.pipeline_mode<synchronous>, transform_indices = @transform_15, window_bounds = array<i64: 1, 128>}, {pipeline_mode = #tpu.pipeline_mode<synchronous>, transform_indices = @transform_16, window_bounds = array<i64: 128, 128>}, {pipeline_mode = #tpu.pipeline_mode<synchronous>, transform_indices = @transform_17, window_bounds = array<i64: 1, 128>}, {pipeline_mode = #tpu.pipeline_mode<synchronous>, transform_indices = @transform_18, window_bounds = array<i64: 128, 128>}, {pipeline_mode = #tpu.pipeline_mode<synchronous>, transform_indices = @transform_19, window_bounds = array<i64: 1, 128>}, {pipeline_mode = #tpu.pipeline_mode<synchronous>, transform_indices = @transform_20, window_bounds = array<i64: 128, 256>}, {pipeline_mode = #tpu.pipeline_mode<synchronous>, transform_indices = @transform_21, window_bounds = array<i64: 1, 256>}, {pipeline_mode = #tpu.pipeline_mode<synchronous>, transform_indices = @transform_22, window_bounds = array<i64: 256, 128>}, {pipeline_mode = #tpu.pipeline_mode<synchronous>, transform_indices = @transform_23, window_bounds = array<i64: 1, 128>}, {pipeline_mode = #tpu.pipeline_mode<synchronous>, transform_indices = @transform_24, window_bounds = array<i64: 1, 128>}, {pipeline_mode = #tpu.pipeline_mode<synchronous>, transform_indices = @transform_25, window_bounds = array<i64: 1, 128>}, {pipeline_mode = #tpu.pipeline_mode<synchronous>, transform_indices = @transform_26, window_bounds = array<i64: 1, 128>}, {pipeline_mode = #tpu.pipeline_mode<synchronous>, transform_indices = @transform_27, window_bounds = array<i64: 1, 128>}, {pipeline_mode = #tpu.pipeline_mode<synchronous>, transform_indices = @transform_28, window_bounds = array<i64: 1, 128>}, {pipeline_mode = #tpu.pipeline_mode<synchronous>, transform_indices = @transform_29, window_bounds = array<i64: 1, 128>}, {transform_indices = @transform_30, window_bounds = array<i64: 1, 8, 128>}]} {
    %c0 = arith.constant 0 : index
    %c0_0 = arith.constant 0 : index
    %c0_1 = arith.constant 0 : index
    %0 = vector.load %arg1[%c0, %c0_0, %c0_1] : memref<1x8x128xf32, #tpu.memory_space<vmem>>, vector<1x8x128xf32>
    %1 = vector.shape_cast %0 : vector<1x8x128xf32> to vector<8x128xf32>
    %c0_2 = arith.constant 0 : index
    %c0_3 = arith.constant 0 : index
    %c0_4 = arith.constant 0 : index
    %2 = vector.load %arg2[%c0_2, %c0_3, %c0_4] : memref<1x16x128xf32, #tpu.memory_space<vmem>>, vector<1x16x128xf32>
    %3 = vector.shape_cast %2 : vector<1x16x128xf32> to vector<16x128xf32>
    %c0_5 = arith.constant 0 : index
    %c0_6 = arith.constant 0 : index
    %c0_7 = arith.constant 0 : index
    %4 = vector.load %arg3[%c0_5, %c0_6, %c0_7] : memref<1x8x128xf32, #tpu.memory_space<vmem>>, vector<1x8x128xf32>
    %5 = vector.shape_cast %4 : vector<1x8x128xf32> to vector<8x128xf32>
    %c0_8 = arith.constant 0 : index
    %c0_9 = arith.constant 0 : index
    %c0_10 = arith.constant 0 : index
    %6 = vector.load %arg4[%c0_8, %c0_9, %c0_10] : memref<1x16x128xf32, #tpu.memory_space<vmem>>, vector<1x16x128xf32>
    %7 = vector.shape_cast %6 : vector<1x16x128xf32> to vector<16x128xf32>
    %8 = arith.addf %1, %5 : vector<8x128xf32>
    %c0_11 = arith.constant 0 : index
    %c0_12 = arith.constant 0 : index
    %9 = vector.load %arg5[%c0_11, %c0_12] : memref<128x128xbf16, #tpu.memory_space<vmem>>, vector<128x128xbf16>
    %c0_13 = arith.constant 0 : index
    %c0_14 = arith.constant 0 : index
    %10 = vector.load %arg6[%c0_13, %c0_14] : memref<1x128xf32, #tpu.memory_space<vmem>>, vector<1x128xf32>
    %c0_15 = arith.constant 0 : index
    %c0_16 = arith.constant 0 : index
    %11 = vector.load %arg7[%c0_15, %c0_16] : memref<128x128xbf16, #tpu.memory_space<vmem>>, vector<128x128xbf16>
    %c0_17 = arith.constant 0 : index
    %c0_18 = arith.constant 0 : index
    %12 = vector.load %arg8[%c0_17, %c0_18] : memref<1x128xf32, #tpu.memory_space<vmem>>, vector<1x128xf32>
    %c0_19 = arith.constant 0 : index
    %c0_20 = arith.constant 0 : index
    %13 = vector.load %arg9[%c0_19, %c0_20] : memref<128x128xbf16, #tpu.memory_space<vmem>>, vector<128x128xbf16>
    %c0_21 = arith.constant 0 : index
    %c0_22 = arith.constant 0 : index
    %14 = vector.load %arg10[%c0_21, %c0_22] : memref<1x128xf32, #tpu.memory_space<vmem>>, vector<1x128xf32>
    %c0_23 = arith.constant 0 : index
    %c0_24 = arith.constant 0 : index
    %15 = vector.load %arg11[%c0_23, %c0_24] : memref<128x128xbf16, #tpu.memory_space<vmem>>, vector<128x128xbf16>
    %c0_25 = arith.constant 0 : index
    %c0_26 = arith.constant 0 : index
    %16 = vector.load %arg12[%c0_25, %c0_26] : memref<1x128xf32, #tpu.memory_space<vmem>>, vector<1x128xf32>
    %17 = arith.truncf %8 : vector<8x128xf32> to vector<8x128xbf16>
    %cst = arith.constant dense<0.000000e+00> : vector<8x128xf32>
    %18 = tpu.matmul %17, %9, %cst {dimension_numbers = #tpu.dot_dimension_numbers<[1], [0], [0], [1], [0, 0, 1, 1], [], []>} : vector<8x128xbf16>, vector<128x128xbf16>, vector<8x128xf32> -> vector<8x128xf32>
    %19 = vector.broadcast %10 : vector<1x128xf32> to vector<8x128xf32>
    %20 = arith.addf %18, %19 : vector<8x128xf32>
    %21 = arith.truncf %8 : vector<8x128xf32> to vector<8x128xbf16>
    %cst_27 = arith.constant dense<0.000000e+00> : vector<8x128xf32>
    %22 = tpu.matmul %21, %11, %cst_27 {dimension_numbers = #tpu.dot_dimension_numbers<[1], [0], [0], [1], [0, 0, 1, 1], [], []>} : vector<8x128xbf16>, vector<128x128xbf16>, vector<8x128xf32> -> vector<8x128xf32>
    %23 = vector.broadcast %12 : vector<1x128xf32> to vector<8x128xf32>
    %24 = arith.addf %22, %23 : vector<8x128xf32>
    %25 = arith.truncf %1 : vector<8x128xf32> to vector<8x128xbf16>
    %cst_28 = arith.constant dense<0.000000e+00> : vector<8x128xf32>
    %26 = tpu.matmul %25, %13, %cst_28 {dimension_numbers = #tpu.dot_dimension_numbers<[1], [0], [0], [1], [0, 0, 1, 1], [], []>} : vector<8x128xbf16>, vector<128x128xbf16>, vector<8x128xf32> -> vector<8x128xf32>
    %27 = vector.broadcast %14 : vector<1x128xf32> to vector<8x128xf32>
    %28 = arith.addf %26, %27 : vector<8x128xf32>
    %29 = arith.truncf %20 : vector<8x128xf32> to vector<8x128xbf16>
    %30 = arith.truncf %24 : vector<8x128xf32> to vector<8x128xbf16>
    %31 = arith.truncf %28 : vector<8x128xf32> to vector<8x128xbf16>
    %32 = vector.extract_strided_slice %29 {offsets = [0, 0], sizes = [8, 16], strides = [1, 1]} : vector<8x128xbf16> to vector<8x16xbf16>
    %33 = vector.extract_strided_slice %30 {offsets = [0, 0], sizes = [8, 16], strides = [1, 1]} : vector<8x128xbf16> to vector<8x16xbf16>
    %cst_29 = arith.constant dense<0.000000e+00> : vector<8x8xf32>
    %34 = tpu.matmul %32, %33, %cst_29 {dimension_numbers = #tpu.dot_dimension_numbers<[1], [1], [0], [0], [0, 0, 1, 0], [], []>} : vector<8x16xbf16>, vector<8x16xbf16>, vector<8x8xf32> -> vector<8x8xf32>
    %cst_30 = arith.constant dense<0xFF800000> : vector<8xf32>
    %35 = vector.multi_reduction <maximumf>, %34, %cst_30 [1] : vector<8x8xf32> to vector<8xf32>
    %36 = vector.shape_cast %35 : vector<8xf32> to vector<8x1xf32>
    %37 = vector.broadcast %36 : vector<8x1xf32> to vector<8x8xf32>
    %38 = arith.subf %34, %37 : vector<8x8xf32>
    %39 = math.exp %38 : vector<8x8xf32>
    %cst_31 = arith.constant dense<0.000000e+00> : vector<8xf32>
    %40 = vector.multi_reduction <add>, %39, %cst_31 [1] : vector<8x8xf32> to vector<8xf32>
    %41 = vector.shape_cast %40 : vector<8xf32> to vector<8x1xf32>
    %42 = tpu.reciprocal %41 {approx = true} : vector<8x1xf32> -> vector<8x1xf32>
    %43 = vector.broadcast %42 : vector<8x1xf32> to vector<8x8xf32>
    %44 = arith.mulf %39, %43 : vector<8x8xf32>
    %45 = arith.truncf %44 : vector<8x8xf32> to vector<8x8xbf16>
    %46 = vector.extract_strided_slice %31 {offsets = [0, 0], sizes = [8, 16], strides = [1, 1]} : vector<8x128xbf16> to vector<8x16xbf16>
    %cst_32 = arith.constant dense<0.000000e+00> : vector<8x16xf32>
    %47 = tpu.matmul %45, %46, %cst_32 {dimension_numbers = #tpu.dot_dimension_numbers<[1], [0], [0], [1], [0, 0, 1, 1], [], []>} : vector<8x8xbf16>, vector<8x16xbf16>, vector<8x16xf32> -> vector<8x16xf32>
    %48 = vector.extract_strided_slice %29 {offsets = [0, 16], sizes = [8, 16], strides = [1, 1]} : vector<8x128xbf16> to vector<8x16xbf16>
    %49 = vector.extract_strided_slice %30 {offsets = [0, 16], sizes = [8, 16], strides = [1, 1]} : vector<8x128xbf16> to vector<8x16xbf16>
    %cst_33 = arith.constant dense<0.000000e+00> : vector<8x8xf32>
    %50 = tpu.matmul %48, %49, %cst_33 {dimension_numbers = #tpu.dot_dimension_numbers<[1], [1], [0], [0], [0, 0, 1, 0], [], []>} : vector<8x16xbf16>, vector<8x16xbf16>, vector<8x8xf32> -> vector<8x8xf32>
    %cst_34 = arith.constant dense<0xFF800000> : vector<8xf32>
    %51 = vector.multi_reduction <maximumf>, %50, %cst_34 [1] : vector<8x8xf32> to vector<8xf32>
    %52 = vector.shape_cast %51 : vector<8xf32> to vector<8x1xf32>
    %53 = vector.broadcast %52 : vector<8x1xf32> to vector<8x8xf32>
    %54 = arith.subf %50, %53 : vector<8x8xf32>
    %55 = math.exp %54 : vector<8x8xf32>
    %cst_35 = arith.constant dense<0.000000e+00> : vector<8xf32>
    %56 = vector.multi_reduction <add>, %55, %cst_35 [1] : vector<8x8xf32> to vector<8xf32>
    %57 = vector.shape_cast %56 : vector<8xf32> to vector<8x1xf32>
    %58 = tpu.reciprocal %57 {approx = true} : vector<8x1xf32> -> vector<8x1xf32>
    %59 = vector.broadcast %58 : vector<8x1xf32> to vector<8x8xf32>
    %60 = arith.mulf %55, %59 : vector<8x8xf32>
    %61 = arith.truncf %60 : vector<8x8xf32> to vector<8x8xbf16>
    %62 = vector.extract_strided_slice %31 {offsets = [0, 16], sizes = [8, 16], strides = [1, 1]} : vector<8x128xbf16> to vector<8x16xbf16>
    %cst_36 = arith.constant dense<0.000000e+00> : vector<8x16xf32>
    %63 = tpu.matmul %61, %62, %cst_36 {dimension_numbers = #tpu.dot_dimension_numbers<[1], [0], [0], [1], [0, 0, 1, 1], [], []>} : vector<8x8xbf16>, vector<8x16xbf16>, vector<8x16xf32> -> vector<8x16xf32>
    %64 = vector.extract_strided_slice %29 {offsets = [0, 32], sizes = [8, 16], strides = [1, 1]} : vector<8x128xbf16> to vector<8x16xbf16>
    %65 = vector.extract_strided_slice %30 {offsets = [0, 32], sizes = [8, 16], strides = [1, 1]} : vector<8x128xbf16> to vector<8x16xbf16>
    %cst_37 = arith.constant dense<0.000000e+00> : vector<8x8xf32>
    %66 = tpu.matmul %64, %65, %cst_37 {dimension_numbers = #tpu.dot_dimension_numbers<[1], [1], [0], [0], [0, 0, 1, 0], [], []>} : vector<8x16xbf16>, vector<8x16xbf16>, vector<8x8xf32> -> vector<8x8xf32>
    %cst_38 = arith.constant dense<0xFF800000> : vector<8xf32>
    %67 = vector.multi_reduction <maximumf>, %66, %cst_38 [1] : vector<8x8xf32> to vector<8xf32>
    %68 = vector.shape_cast %67 : vector<8xf32> to vector<8x1xf32>
    %69 = vector.broadcast %68 : vector<8x1xf32> to vector<8x8xf32>
    %70 = arith.subf %66, %69 : vector<8x8xf32>
    %71 = math.exp %70 : vector<8x8xf32>
    %cst_39 = arith.constant dense<0.000000e+00> : vector<8xf32>
    %72 = vector.multi_reduction <add>, %71, %cst_39 [1] : vector<8x8xf32> to vector<8xf32>
    %73 = vector.shape_cast %72 : vector<8xf32> to vector<8x1xf32>
    %74 = tpu.reciprocal %73 {approx = true} : vector<8x1xf32> -> vector<8x1xf32>
    %75 = vector.broadcast %74 : vector<8x1xf32> to vector<8x8xf32>
    %76 = arith.mulf %71, %75 : vector<8x8xf32>
    %77 = arith.truncf %76 : vector<8x8xf32> to vector<8x8xbf16>
    %78 = vector.extract_strided_slice %31 {offsets = [0, 32], sizes = [8, 16], strides = [1, 1]} : vector<8x128xbf16> to vector<8x16xbf16>
    %cst_40 = arith.constant dense<0.000000e+00> : vector<8x16xf32>
    %79 = tpu.matmul %77, %78, %cst_40 {dimension_numbers = #tpu.dot_dimension_numbers<[1], [0], [0], [1], [0, 0, 1, 1], [], []>} : vector<8x8xbf16>, vector<8x16xbf16>, vector<8x16xf32> -> vector<8x16xf32>
    %80 = vector.extract_strided_slice %29 {offsets = [0, 48], sizes = [8, 16], strides = [1, 1]} : vector<8x128xbf16> to vector<8x16xbf16>
    %81 = vector.extract_strided_slice %30 {offsets = [0, 48], sizes = [8, 16], strides = [1, 1]} : vector<8x128xbf16> to vector<8x16xbf16>
    %cst_41 = arith.constant dense<0.000000e+00> : vector<8x8xf32>
    %82 = tpu.matmul %80, %81, %cst_41 {dimension_numbers = #tpu.dot_dimension_numbers<[1], [1], [0], [0], [0, 0, 1, 0], [], []>} : vector<8x16xbf16>, vector<8x16xbf16>, vector<8x8xf32> -> vector<8x8xf32>
    %cst_42 = arith.constant dense<0xFF800000> : vector<8xf32>
    %83 = vector.multi_reduction <maximumf>, %82, %cst_42 [1] : vector<8x8xf32> to vector<8xf32>
    %84 = vector.shape_cast %83 : vector<8xf32> to vector<8x1xf32>
    %85 = vector.broadcast %84 : vector<8x1xf32> to vector<8x8xf32>
    %86 = arith.subf %82, %85 : vector<8x8xf32>
    %87 = math.exp %86 : vector<8x8xf32>
    %cst_43 = arith.constant dense<0.000000e+00> : vector<8xf32>
    %88 = vector.multi_reduction <add>, %87, %cst_43 [1] : vector<8x8xf32> to vector<8xf32>
    %89 = vector.shape_cast %88 : vector<8xf32> to vector<8x1xf32>
    %90 = tpu.reciprocal %89 {approx = true} : vector<8x1xf32> -> vector<8x1xf32>
    %91 = vector.broadcast %90 : vector<8x1xf32> to vector<8x8xf32>
    %92 = arith.mulf %87, %91 : vector<8x8xf32>
    %93 = arith.truncf %92 : vector<8x8xf32> to vector<8x8xbf16>
    %94 = vector.extract_strided_slice %31 {offsets = [0, 48], sizes = [8, 16], strides = [1, 1]} : vector<8x128xbf16> to vector<8x16xbf16>
    %cst_44 = arith.constant dense<0.000000e+00> : vector<8x16xf32>
    %95 = tpu.matmul %93, %94, %cst_44 {dimension_numbers = #tpu.dot_dimension_numbers<[1], [0], [0], [1], [0, 0, 1, 1], [], []>} : vector<8x8xbf16>, vector<8x16xbf16>, vector<8x16xf32> -> vector<8x16xf32>
    %96 = vector.extract_strided_slice %29 {offsets = [0, 64], sizes = [8, 16], strides = [1, 1]} : vector<8x128xbf16> to vector<8x16xbf16>
    %97 = vector.extract_strided_slice %30 {offsets = [0, 64], sizes = [8, 16], strides = [1, 1]} : vector<8x128xbf16> to vector<8x16xbf16>
    %cst_45 = arith.constant dense<0.000000e+00> : vector<8x8xf32>
    %98 = tpu.matmul %96, %97, %cst_45 {dimension_numbers = #tpu.dot_dimension_numbers<[1], [1], [0], [0], [0, 0, 1, 0], [], []>} : vector<8x16xbf16>, vector<8x16xbf16>, vector<8x8xf32> -> vector<8x8xf32>
    %cst_46 = arith.constant dense<0xFF800000> : vector<8xf32>
    %99 = vector.multi_reduction <maximumf>, %98, %cst_46 [1] : vector<8x8xf32> to vector<8xf32>
    %100 = vector.shape_cast %99 : vector<8xf32> to vector<8x1xf32>
    %101 = vector.broadcast %100 : vector<8x1xf32> to vector<8x8xf32>
    %102 = arith.subf %98, %101 : vector<8x8xf32>
    %103 = math.exp %102 : vector<8x8xf32>
    %cst_47 = arith.constant dense<0.000000e+00> : vector<8xf32>
    %104 = vector.multi_reduction <add>, %103, %cst_47 [1] : vector<8x8xf32> to vector<8xf32>
    %105 = vector.shape_cast %104 : vector<8xf32> to vector<8x1xf32>
    %106 = tpu.reciprocal %105 {approx = true} : vector<8x1xf32> -> vector<8x1xf32>
    %107 = vector.broadcast %106 : vector<8x1xf32> to vector<8x8xf32>
    %108 = arith.mulf %103, %107 : vector<8x8xf32>
    %109 = arith.truncf %108 : vector<8x8xf32> to vector<8x8xbf16>
    %110 = vector.extract_strided_slice %31 {offsets = [0, 64], sizes = [8, 16], strides = [1, 1]} : vector<8x128xbf16> to vector<8x16xbf16>
    %cst_48 = arith.constant dense<0.000000e+00> : vector<8x16xf32>
    %111 = tpu.matmul %109, %110, %cst_48 {dimension_numbers = #tpu.dot_dimension_numbers<[1], [0], [0], [1], [0, 0, 1, 1], [], []>} : vector<8x8xbf16>, vector<8x16xbf16>, vector<8x16xf32> -> vector<8x16xf32>
    %112 = vector.extract_strided_slice %29 {offsets = [0, 80], sizes = [8, 16], strides = [1, 1]} : vector<8x128xbf16> to vector<8x16xbf16>
    %113 = vector.extract_strided_slice %30 {offsets = [0, 80], sizes = [8, 16], strides = [1, 1]} : vector<8x128xbf16> to vector<8x16xbf16>
    %cst_49 = arith.constant dense<0.000000e+00> : vector<8x8xf32>
    %114 = tpu.matmul %112, %113, %cst_49 {dimension_numbers = #tpu.dot_dimension_numbers<[1], [1], [0], [0], [0, 0, 1, 0], [], []>} : vector<8x16xbf16>, vector<8x16xbf16>, vector<8x8xf32> -> vector<8x8xf32>
    %cst_50 = arith.constant dense<0xFF800000> : vector<8xf32>
    %115 = vector.multi_reduction <maximumf>, %114, %cst_50 [1] : vector<8x8xf32> to vector<8xf32>
    %116 = vector.shape_cast %115 : vector<8xf32> to vector<8x1xf32>
    %117 = vector.broadcast %116 : vector<8x1xf32> to vector<8x8xf32>
    %118 = arith.subf %114, %117 : vector<8x8xf32>
    %119 = math.exp %118 : vector<8x8xf32>
    %cst_51 = arith.constant dense<0.000000e+00> : vector<8xf32>
    %120 = vector.multi_reduction <add>, %119, %cst_51 [1] : vector<8x8xf32> to vector<8xf32>
    %121 = vector.shape_cast %120 : vector<8xf32> to vector<8x1xf32>
    %122 = tpu.reciprocal %121 {approx = true} : vector<8x1xf32> -> vector<8x1xf32>
    %123 = vector.broadcast %122 : vector<8x1xf32> to vector<8x8xf32>
    %124 = arith.mulf %119, %123 : vector<8x8xf32>
    %125 = arith.truncf %124 : vector<8x8xf32> to vector<8x8xbf16>
    %126 = vector.extract_strided_slice %31 {offsets = [0, 80], sizes = [8, 16], strides = [1, 1]} : vector<8x128xbf16> to vector<8x16xbf16>
    %cst_52 = arith.constant dense<0.000000e+00> : vector<8x16xf32>
    %127 = tpu.matmul %125, %126, %cst_52 {dimension_numbers = #tpu.dot_dimension_numbers<[1], [0], [0], [1], [0, 0, 1, 1], [], []>} : vector<8x8xbf16>, vector<8x16xbf16>, vector<8x16xf32> -> vector<8x16xf32>
    %128 = vector.extract_strided_slice %29 {offsets = [0, 96], sizes = [8, 16], strides = [1, 1]} : vector<8x128xbf16> to vector<8x16xbf16>
    %129 = vector.extract_strided_slice %30 {offsets = [0, 96], sizes = [8, 16], strides = [1, 1]} : vector<8x128xbf16> to vector<8x16xbf16>
    %cst_53 = arith.constant dense<0.000000e+00> : vector<8x8xf32>
    %130 = tpu.matmul %128, %129, %cst_53 {dimension_numbers = #tpu.dot_dimension_numbers<[1], [1], [0], [0], [0, 0, 1, 0], [], []>} : vector<8x16xbf16>, vector<8x16xbf16>, vector<8x8xf32> -> vector<8x8xf32>
    %cst_54 = arith.constant dense<0xFF800000> : vector<8xf32>
    %131 = vector.multi_reduction <maximumf>, %130, %cst_54 [1] : vector<8x8xf32> to vector<8xf32>
    %132 = vector.shape_cast %131 : vector<8xf32> to vector<8x1xf32>
    %133 = vector.broadcast %132 : vector<8x1xf32> to vector<8x8xf32>
    %134 = arith.subf %130, %133 : vector<8x8xf32>
    %135 = math.exp %134 : vector<8x8xf32>
    %cst_55 = arith.constant dense<0.000000e+00> : vector<8xf32>
    %136 = vector.multi_reduction <add>, %135, %cst_55 [1] : vector<8x8xf32> to vector<8xf32>
    %137 = vector.shape_cast %136 : vector<8xf32> to vector<8x1xf32>
    %138 = tpu.reciprocal %137 {approx = true} : vector<8x1xf32> -> vector<8x1xf32>
    %139 = vector.broadcast %138 : vector<8x1xf32> to vector<8x8xf32>
    %140 = arith.mulf %135, %139 : vector<8x8xf32>
    %141 = arith.truncf %140 : vector<8x8xf32> to vector<8x8xbf16>
    %142 = vector.extract_strided_slice %31 {offsets = [0, 96], sizes = [8, 16], strides = [1, 1]} : vector<8x128xbf16> to vector<8x16xbf16>
    %cst_56 = arith.constant dense<0.000000e+00> : vector<8x16xf32>
    %143 = tpu.matmul %141, %142, %cst_56 {dimension_numbers = #tpu.dot_dimension_numbers<[1], [0], [0], [1], [0, 0, 1, 1], [], []>} : vector<8x8xbf16>, vector<8x16xbf16>, vector<8x16xf32> -> vector<8x16xf32>
    %144 = vector.extract_strided_slice %29 {offsets = [0, 112], sizes = [8, 16], strides = [1, 1]} : vector<8x128xbf16> to vector<8x16xbf16>
    %145 = vector.extract_strided_slice %30 {offsets = [0, 112], sizes = [8, 16], strides = [1, 1]} : vector<8x128xbf16> to vector<8x16xbf16>
    %cst_57 = arith.constant dense<0.000000e+00> : vector<8x8xf32>
    %146 = tpu.matmul %144, %145, %cst_57 {dimension_numbers = #tpu.dot_dimension_numbers<[1], [1], [0], [0], [0, 0, 1, 0], [], []>} : vector<8x16xbf16>, vector<8x16xbf16>, vector<8x8xf32> -> vector<8x8xf32>
    %cst_58 = arith.constant dense<0xFF800000> : vector<8xf32>
    %147 = vector.multi_reduction <maximumf>, %146, %cst_58 [1] : vector<8x8xf32> to vector<8xf32>
    %148 = vector.shape_cast %147 : vector<8xf32> to vector<8x1xf32>
    %149 = vector.broadcast %148 : vector<8x1xf32> to vector<8x8xf32>
    %150 = arith.subf %146, %149 : vector<8x8xf32>
    %151 = math.exp %150 : vector<8x8xf32>
    %cst_59 = arith.constant dense<0.000000e+00> : vector<8xf32>
    %152 = vector.multi_reduction <add>, %151, %cst_59 [1] : vector<8x8xf32> to vector<8xf32>
    %153 = vector.shape_cast %152 : vector<8xf32> to vector<8x1xf32>
    %154 = tpu.reciprocal %153 {approx = true} : vector<8x1xf32> -> vector<8x1xf32>
    %155 = vector.broadcast %154 : vector<8x1xf32> to vector<8x8xf32>
    %156 = arith.mulf %151, %155 : vector<8x8xf32>
    %157 = arith.truncf %156 : vector<8x8xf32> to vector<8x8xbf16>
    %158 = vector.extract_strided_slice %31 {offsets = [0, 112], sizes = [8, 16], strides = [1, 1]} : vector<8x128xbf16> to vector<8x16xbf16>
    %cst_60 = arith.constant dense<0.000000e+00> : vector<8x16xf32>
    %159 = tpu.matmul %157, %158, %cst_60 {dimension_numbers = #tpu.dot_dimension_numbers<[1], [0], [0], [1], [0, 0, 1, 1], [], []>} : vector<8x8xbf16>, vector<8x16xbf16>, vector<8x16xf32> -> vector<8x16xf32>
    %160 = tpu.concatenate %47, %63, %79, %95, %111, %127, %143, %159 in 1 : vector<8x16xf32>, vector<8x16xf32>, vector<8x16xf32>, vector<8x16xf32>, vector<8x16xf32>, vector<8x16xf32>, vector<8x16xf32>, vector<8x16xf32> -> vector<8x128xf32>
    %161 = arith.truncf %160 : vector<8x128xf32> to vector<8x128xbf16>
    %cst_61 = arith.constant dense<0.000000e+00> : vector<8x128xf32>
    %162 = tpu.matmul %161, %15, %cst_61 {dimension_numbers = #tpu.dot_dimension_numbers<[1], [0], [0], [1], [0, 0, 1, 1], [], []>} : vector<8x128xbf16>, vector<128x128xbf16>, vector<8x128xf32> -> vector<8x128xf32>
    %163 = vector.broadcast %16 : vector<1x128xf32> to vector<8x128xf32>
    %164 = arith.addf %162, %163 : vector<8x128xf32>
    %165 = arith.addf %1, %164 : vector<8x128xf32>
    %c0_62 = arith.constant 0 : index
    %c0_63 = arith.constant 0 : index
    %166 = vector.load %arg25[%c0_62, %c0_63] : memref<1x128xf32, #tpu.memory_space<vmem>>, vector<1x128xf32>
    %c0_64 = arith.constant 0 : index
    %c0_65 = arith.constant 0 : index
    %167 = vector.load %arg26[%c0_64, %c0_65] : memref<1x128xf32, #tpu.memory_space<vmem>>, vector<1x128xf32>
    %cst_66 = arith.constant dense<0.000000e+00> : vector<8xf32>
    %168 = vector.multi_reduction <add>, %165, %cst_66 [1] : vector<8x128xf32> to vector<8xf32>
    %169 = vector.shape_cast %168 : vector<8xf32> to vector<8x1xf32>
    %cst_67 = arith.constant 1.280000e+02 : f32
    %170 = vector.broadcast %cst_67 : f32 to vector<8x1xf32>
    %171 = arith.divf %169, %170 : vector<8x1xf32>
    %172 = vector.broadcast %171 : vector<8x1xf32> to vector<8x128xf32>
    %173 = arith.subf %165, %172 : vector<8x128xf32>
    %174 = arith.mulf %173, %173 : vector<8x128xf32>
    %cst_68 = arith.constant dense<0.000000e+00> : vector<8xf32>
    %175 = vector.multi_reduction <add>, %174, %cst_68 [1] : vector<8x128xf32> to vector<8xf32>
    %176 = vector.shape_cast %175 : vector<8xf32> to vector<8x1xf32>
    %cst_69 = arith.constant 1.280000e+02 : f32
    %177 = vector.broadcast %cst_69 : f32 to vector<8x1xf32>
    %178 = arith.divf %176, %177 : vector<8x1xf32>
    %179 = vector.broadcast %171 : vector<8x1xf32> to vector<8x128xf32>
    %180 = arith.subf %165, %179 : vector<8x128xf32>
    %cst_70 = arith.constant 9.99999974E-6 : f32
    %181 = vector.broadcast %cst_70 : f32 to vector<8x1xf32>
    %182 = arith.addf %178, %181 : vector<8x1xf32>
    %183 = math.rsqrt %182 : vector<8x1xf32>
    %184 = vector.broadcast %183 : vector<8x1xf32> to vector<8x128xf32>
    %185 = arith.mulf %180, %184 : vector<8x128xf32>
    %186 = vector.broadcast %166 : vector<1x128xf32> to vector<8x128xf32>
    %187 = arith.mulf %185, %186 : vector<8x128xf32>
    %188 = vector.broadcast %167 : vector<1x128xf32> to vector<8x128xf32>
    %189 = arith.addf %187, %188 : vector<8x128xf32>
    %190 = arith.addf %189, %5 : vector<8x128xf32>
    %191 = arith.addf %3, %7 : vector<16x128xf32>
    %c0_71 = arith.constant 0 : index
    %c0_72 = arith.constant 0 : index
    %192 = vector.load %arg13[%c0_71, %c0_72] : memref<128x128xbf16, #tpu.memory_space<vmem>>, vector<128x128xbf16>
    %c0_73 = arith.constant 0 : index
    %c0_74 = arith.constant 0 : index
    %193 = vector.load %arg14[%c0_73, %c0_74] : memref<1x128xf32, #tpu.memory_space<vmem>>, vector<1x128xf32>
    %c0_75 = arith.constant 0 : index
    %c0_76 = arith.constant 0 : index
    %194 = vector.load %arg15[%c0_75, %c0_76] : memref<128x128xbf16, #tpu.memory_space<vmem>>, vector<128x128xbf16>
    %c0_77 = arith.constant 0 : index
    %c0_78 = arith.constant 0 : index
    %195 = vector.load %arg16[%c0_77, %c0_78] : memref<1x128xf32, #tpu.memory_space<vmem>>, vector<1x128xf32>
    %c0_79 = arith.constant 0 : index
    %c0_80 = arith.constant 0 : index
    %196 = vector.load %arg17[%c0_79, %c0_80] : memref<128x128xbf16, #tpu.memory_space<vmem>>, vector<128x128xbf16>
    %c0_81 = arith.constant 0 : index
    %c0_82 = arith.constant 0 : index
    %197 = vector.load %arg18[%c0_81, %c0_82] : memref<1x128xf32, #tpu.memory_space<vmem>>, vector<1x128xf32>
    %c0_83 = arith.constant 0 : index
    %c0_84 = arith.constant 0 : index
    %198 = vector.load %arg19[%c0_83, %c0_84] : memref<128x128xbf16, #tpu.memory_space<vmem>>, vector<128x128xbf16>
    %c0_85 = arith.constant 0 : index
    %c0_86 = arith.constant 0 : index
    %199 = vector.load %arg20[%c0_85, %c0_86] : memref<1x128xf32, #tpu.memory_space<vmem>>, vector<1x128xf32>
    %200 = arith.truncf %190 : vector<8x128xf32> to vector<8x128xbf16>
    %cst_87 = arith.constant dense<0.000000e+00> : vector<8x128xf32>
    %201 = tpu.matmul %200, %192, %cst_87 {dimension_numbers = #tpu.dot_dimension_numbers<[1], [0], [0], [1], [0, 0, 1, 1], [], []>} : vector<8x128xbf16>, vector<128x128xbf16>, vector<8x128xf32> -> vector<8x128xf32>
    %202 = vector.broadcast %193 : vector<1x128xf32> to vector<8x128xf32>
    %203 = arith.addf %201, %202 : vector<8x128xf32>
    %204 = arith.truncf %191 : vector<16x128xf32> to vector<16x128xbf16>
    %cst_88 = arith.constant dense<0.000000e+00> : vector<16x128xf32>
    %205 = tpu.matmul %204, %194, %cst_88 {dimension_numbers = #tpu.dot_dimension_numbers<[1], [0], [0], [1], [0, 0, 1, 1], [], []>} : vector<16x128xbf16>, vector<128x128xbf16>, vector<16x128xf32> -> vector<16x128xf32>
    %206 = vector.broadcast %195 : vector<1x128xf32> to vector<16x128xf32>
    %207 = arith.addf %205, %206 : vector<16x128xf32>
    %208 = arith.truncf %3 : vector<16x128xf32> to vector<16x128xbf16>
    %cst_89 = arith.constant dense<0.000000e+00> : vector<16x128xf32>
    %209 = tpu.matmul %208, %196, %cst_89 {dimension_numbers = #tpu.dot_dimension_numbers<[1], [0], [0], [1], [0, 0, 1, 1], [], []>} : vector<16x128xbf16>, vector<128x128xbf16>, vector<16x128xf32> -> vector<16x128xf32>
    %210 = vector.broadcast %197 : vector<1x128xf32> to vector<16x128xf32>
    %211 = arith.addf %209, %210 : vector<16x128xf32>
    %212 = arith.truncf %203 : vector<8x128xf32> to vector<8x128xbf16>
    %213 = arith.truncf %207 : vector<16x128xf32> to vector<16x128xbf16>
    %214 = arith.truncf %211 : vector<16x128xf32> to vector<16x128xbf16>
    %215 = vector.extract_strided_slice %212 {offsets = [0, 0], sizes = [8, 16], strides = [1, 1]} : vector<8x128xbf16> to vector<8x16xbf16>
    %216 = vector.extract_strided_slice %213 {offsets = [0, 0], sizes = [16, 16], strides = [1, 1]} : vector<16x128xbf16> to vector<16x16xbf16>
    %cst_90 = arith.constant dense<0.000000e+00> : vector<8x16xf32>
    %217 = tpu.matmul %215, %216, %cst_90 {dimension_numbers = #tpu.dot_dimension_numbers<[1], [1], [0], [0], [0, 0, 1, 0], [], []>} : vector<8x16xbf16>, vector<16x16xbf16>, vector<8x16xf32> -> vector<8x16xf32>
    %cst_91 = arith.constant dense<0xFF800000> : vector<8xf32>
    %218 = vector.multi_reduction <maximumf>, %217, %cst_91 [1] : vector<8x16xf32> to vector<8xf32>
    %219 = vector.shape_cast %218 : vector<8xf32> to vector<8x1xf32>
    %220 = vector.broadcast %219 : vector<8x1xf32> to vector<8x16xf32>
    %221 = arith.subf %217, %220 : vector<8x16xf32>
    %222 = math.exp %221 : vector<8x16xf32>
    %cst_92 = arith.constant dense<0.000000e+00> : vector<8xf32>
    %223 = vector.multi_reduction <add>, %222, %cst_92 [1] : vector<8x16xf32> to vector<8xf32>
    %224 = vector.shape_cast %223 : vector<8xf32> to vector<8x1xf32>
    %225 = tpu.reciprocal %224 {approx = true} : vector<8x1xf32> -> vector<8x1xf32>
    %226 = vector.broadcast %225 : vector<8x1xf32> to vector<8x16xf32>
    %227 = arith.mulf %222, %226 : vector<8x16xf32>
    %228 = arith.truncf %227 : vector<8x16xf32> to vector<8x16xbf16>
    %229 = vector.extract_strided_slice %214 {offsets = [0, 0], sizes = [16, 16], strides = [1, 1]} : vector<16x128xbf16> to vector<16x16xbf16>
    %cst_93 = arith.constant dense<0.000000e+00> : vector<8x16xf32>
    %230 = tpu.matmul %228, %229, %cst_93 {dimension_numbers = #tpu.dot_dimension_numbers<[1], [0], [0], [1], [0, 0, 1, 1], [], []>} : vector<8x16xbf16>, vector<16x16xbf16>, vector<8x16xf32> -> vector<8x16xf32>
    %231 = vector.extract_strided_slice %212 {offsets = [0, 16], sizes = [8, 16], strides = [1, 1]} : vector<8x128xbf16> to vector<8x16xbf16>
    %232 = vector.extract_strided_slice %213 {offsets = [0, 16], sizes = [16, 16], strides = [1, 1]} : vector<16x128xbf16> to vector<16x16xbf16>
    %cst_94 = arith.constant dense<0.000000e+00> : vector<8x16xf32>
    %233 = tpu.matmul %231, %232, %cst_94 {dimension_numbers = #tpu.dot_dimension_numbers<[1], [1], [0], [0], [0, 0, 1, 0], [], []>} : vector<8x16xbf16>, vector<16x16xbf16>, vector<8x16xf32> -> vector<8x16xf32>
    %cst_95 = arith.constant dense<0xFF800000> : vector<8xf32>
    %234 = vector.multi_reduction <maximumf>, %233, %cst_95 [1] : vector<8x16xf32> to vector<8xf32>
    %235 = vector.shape_cast %234 : vector<8xf32> to vector<8x1xf32>
    %236 = vector.broadcast %235 : vector<8x1xf32> to vector<8x16xf32>
    %237 = arith.subf %233, %236 : vector<8x16xf32>
    %238 = math.exp %237 : vector<8x16xf32>
    %cst_96 = arith.constant dense<0.000000e+00> : vector<8xf32>
    %239 = vector.multi_reduction <add>, %238, %cst_96 [1] : vector<8x16xf32> to vector<8xf32>
    %240 = vector.shape_cast %239 : vector<8xf32> to vector<8x1xf32>
    %241 = tpu.reciprocal %240 {approx = true} : vector<8x1xf32> -> vector<8x1xf32>
    %242 = vector.broadcast %241 : vector<8x1xf32> to vector<8x16xf32>
    %243 = arith.mulf %238, %242 : vector<8x16xf32>
    %244 = arith.truncf %243 : vector<8x16xf32> to vector<8x16xbf16>
    %245 = vector.extract_strided_slice %214 {offsets = [0, 16], sizes = [16, 16], strides = [1, 1]} : vector<16x128xbf16> to vector<16x16xbf16>
    %cst_97 = arith.constant dense<0.000000e+00> : vector<8x16xf32>
    %246 = tpu.matmul %244, %245, %cst_97 {dimension_numbers = #tpu.dot_dimension_numbers<[1], [0], [0], [1], [0, 0, 1, 1], [], []>} : vector<8x16xbf16>, vector<16x16xbf16>, vector<8x16xf32> -> vector<8x16xf32>
    %247 = vector.extract_strided_slice %212 {offsets = [0, 32], sizes = [8, 16], strides = [1, 1]} : vector<8x128xbf16> to vector<8x16xbf16>
    %248 = vector.extract_strided_slice %213 {offsets = [0, 32], sizes = [16, 16], strides = [1, 1]} : vector<16x128xbf16> to vector<16x16xbf16>
    %cst_98 = arith.constant dense<0.000000e+00> : vector<8x16xf32>
    %249 = tpu.matmul %247, %248, %cst_98 {dimension_numbers = #tpu.dot_dimension_numbers<[1], [1], [0], [0], [0, 0, 1, 0], [], []>} : vector<8x16xbf16>, vector<16x16xbf16>, vector<8x16xf32> -> vector<8x16xf32>
    %cst_99 = arith.constant dense<0xFF800000> : vector<8xf32>
    %250 = vector.multi_reduction <maximumf>, %249, %cst_99 [1] : vector<8x16xf32> to vector<8xf32>
    %251 = vector.shape_cast %250 : vector<8xf32> to vector<8x1xf32>
    %252 = vector.broadcast %251 : vector<8x1xf32> to vector<8x16xf32>
    %253 = arith.subf %249, %252 : vector<8x16xf32>
    %254 = math.exp %253 : vector<8x16xf32>
    %cst_100 = arith.constant dense<0.000000e+00> : vector<8xf32>
    %255 = vector.multi_reduction <add>, %254, %cst_100 [1] : vector<8x16xf32> to vector<8xf32>
    %256 = vector.shape_cast %255 : vector<8xf32> to vector<8x1xf32>
    %257 = tpu.reciprocal %256 {approx = true} : vector<8x1xf32> -> vector<8x1xf32>
    %258 = vector.broadcast %257 : vector<8x1xf32> to vector<8x16xf32>
    %259 = arith.mulf %254, %258 : vector<8x16xf32>
    %260 = arith.truncf %259 : vector<8x16xf32> to vector<8x16xbf16>
    %261 = vector.extract_strided_slice %214 {offsets = [0, 32], sizes = [16, 16], strides = [1, 1]} : vector<16x128xbf16> to vector<16x16xbf16>
    %cst_101 = arith.constant dense<0.000000e+00> : vector<8x16xf32>
    %262 = tpu.matmul %260, %261, %cst_101 {dimension_numbers = #tpu.dot_dimension_numbers<[1], [0], [0], [1], [0, 0, 1, 1], [], []>} : vector<8x16xbf16>, vector<16x16xbf16>, vector<8x16xf32> -> vector<8x16xf32>
    %263 = vector.extract_strided_slice %212 {offsets = [0, 48], sizes = [8, 16], strides = [1, 1]} : vector<8x128xbf16> to vector<8x16xbf16>
    %264 = vector.extract_strided_slice %213 {offsets = [0, 48], sizes = [16, 16], strides = [1, 1]} : vector<16x128xbf16> to vector<16x16xbf16>
    %cst_102 = arith.constant dense<0.000000e+00> : vector<8x16xf32>
    %265 = tpu.matmul %263, %264, %cst_102 {dimension_numbers = #tpu.dot_dimension_numbers<[1], [1], [0], [0], [0, 0, 1, 0], [], []>} : vector<8x16xbf16>, vector<16x16xbf16>, vector<8x16xf32> -> vector<8x16xf32>
    %cst_103 = arith.constant dense<0xFF800000> : vector<8xf32>
    %266 = vector.multi_reduction <maximumf>, %265, %cst_103 [1] : vector<8x16xf32> to vector<8xf32>
    %267 = vector.shape_cast %266 : vector<8xf32> to vector<8x1xf32>
    %268 = vector.broadcast %267 : vector<8x1xf32> to vector<8x16xf32>
    %269 = arith.subf %265, %268 : vector<8x16xf32>
    %270 = math.exp %269 : vector<8x16xf32>
    %cst_104 = arith.constant dense<0.000000e+00> : vector<8xf32>
    %271 = vector.multi_reduction <add>, %270, %cst_104 [1] : vector<8x16xf32> to vector<8xf32>
    %272 = vector.shape_cast %271 : vector<8xf32> to vector<8x1xf32>
    %273 = tpu.reciprocal %272 {approx = true} : vector<8x1xf32> -> vector<8x1xf32>
    %274 = vector.broadcast %273 : vector<8x1xf32> to vector<8x16xf32>
    %275 = arith.mulf %270, %274 : vector<8x16xf32>
    %276 = arith.truncf %275 : vector<8x16xf32> to vector<8x16xbf16>
    %277 = vector.extract_strided_slice %214 {offsets = [0, 48], sizes = [16, 16], strides = [1, 1]} : vector<16x128xbf16> to vector<16x16xbf16>
    %cst_105 = arith.constant dense<0.000000e+00> : vector<8x16xf32>
    %278 = tpu.matmul %276, %277, %cst_105 {dimension_numbers = #tpu.dot_dimension_numbers<[1], [0], [0], [1], [0, 0, 1, 1], [], []>} : vector<8x16xbf16>, vector<16x16xbf16>, vector<8x16xf32> -> vector<8x16xf32>
    %279 = vector.extract_strided_slice %212 {offsets = [0, 64], sizes = [8, 16], strides = [1, 1]} : vector<8x128xbf16> to vector<8x16xbf16>
    %280 = vector.extract_strided_slice %213 {offsets = [0, 64], sizes = [16, 16], strides = [1, 1]} : vector<16x128xbf16> to vector<16x16xbf16>
    %cst_106 = arith.constant dense<0.000000e+00> : vector<8x16xf32>
    %281 = tpu.matmul %279, %280, %cst_106 {dimension_numbers = #tpu.dot_dimension_numbers<[1], [1], [0], [0], [0, 0, 1, 0], [], []>} : vector<8x16xbf16>, vector<16x16xbf16>, vector<8x16xf32> -> vector<8x16xf32>
    %cst_107 = arith.constant dense<0xFF800000> : vector<8xf32>
    %282 = vector.multi_reduction <maximumf>, %281, %cst_107 [1] : vector<8x16xf32> to vector<8xf32>
    %283 = vector.shape_cast %282 : vector<8xf32> to vector<8x1xf32>
    %284 = vector.broadcast %283 : vector<8x1xf32> to vector<8x16xf32>
    %285 = arith.subf %281, %284 : vector<8x16xf32>
    %286 = math.exp %285 : vector<8x16xf32>
    %cst_108 = arith.constant dense<0.000000e+00> : vector<8xf32>
    %287 = vector.multi_reduction <add>, %286, %cst_108 [1] : vector<8x16xf32> to vector<8xf32>
    %288 = vector.shape_cast %287 : vector<8xf32> to vector<8x1xf32>
    %289 = tpu.reciprocal %288 {approx = true} : vector<8x1xf32> -> vector<8x1xf32>
    %290 = vector.broadcast %289 : vector<8x1xf32> to vector<8x16xf32>
    %291 = arith.mulf %286, %290 : vector<8x16xf32>
    %292 = arith.truncf %291 : vector<8x16xf32> to vector<8x16xbf16>
    %293 = vector.extract_strided_slice %214 {offsets = [0, 64], sizes = [16, 16], strides = [1, 1]} : vector<16x128xbf16> to vector<16x16xbf16>
    %cst_109 = arith.constant dense<0.000000e+00> : vector<8x16xf32>
    %294 = tpu.matmul %292, %293, %cst_109 {dimension_numbers = #tpu.dot_dimension_numbers<[1], [0], [0], [1], [0, 0, 1, 1], [], []>} : vector<8x16xbf16>, vector<16x16xbf16>, vector<8x16xf32> -> vector<8x16xf32>
    %295 = vector.extract_strided_slice %212 {offsets = [0, 80], sizes = [8, 16], strides = [1, 1]} : vector<8x128xbf16> to vector<8x16xbf16>
    %296 = vector.extract_strided_slice %213 {offsets = [0, 80], sizes = [16, 16], strides = [1, 1]} : vector<16x128xbf16> to vector<16x16xbf16>
    %cst_110 = arith.constant dense<0.000000e+00> : vector<8x16xf32>
    %297 = tpu.matmul %295, %296, %cst_110 {dimension_numbers = #tpu.dot_dimension_numbers<[1], [1], [0], [0], [0, 0, 1, 0], [], []>} : vector<8x16xbf16>, vector<16x16xbf16>, vector<8x16xf32> -> vector<8x16xf32>
    %cst_111 = arith.constant dense<0xFF800000> : vector<8xf32>
    %298 = vector.multi_reduction <maximumf>, %297, %cst_111 [1] : vector<8x16xf32> to vector<8xf32>
    %299 = vector.shape_cast %298 : vector<8xf32> to vector<8x1xf32>
    %300 = vector.broadcast %299 : vector<8x1xf32> to vector<8x16xf32>
    %301 = arith.subf %297, %300 : vector<8x16xf32>
    %302 = math.exp %301 : vector<8x16xf32>
    %cst_112 = arith.constant dense<0.000000e+00> : vector<8xf32>
    %303 = vector.multi_reduction <add>, %302, %cst_112 [1] : vector<8x16xf32> to vector<8xf32>
    %304 = vector.shape_cast %303 : vector<8xf32> to vector<8x1xf32>
    %305 = tpu.reciprocal %304 {approx = true} : vector<8x1xf32> -> vector<8x1xf32>
    %306 = vector.broadcast %305 : vector<8x1xf32> to vector<8x16xf32>
    %307 = arith.mulf %302, %306 : vector<8x16xf32>
    %308 = arith.truncf %307 : vector<8x16xf32> to vector<8x16xbf16>
    %309 = vector.extract_strided_slice %214 {offsets = [0, 80], sizes = [16, 16], strides = [1, 1]} : vector<16x128xbf16> to vector<16x16xbf16>
    %cst_113 = arith.constant dense<0.000000e+00> : vector<8x16xf32>
    %310 = tpu.matmul %308, %309, %cst_113 {dimension_numbers = #tpu.dot_dimension_numbers<[1], [0], [0], [1], [0, 0, 1, 1], [], []>} : vector<8x16xbf16>, vector<16x16xbf16>, vector<8x16xf32> -> vector<8x16xf32>
    %311 = vector.extract_strided_slice %212 {offsets = [0, 96], sizes = [8, 16], strides = [1, 1]} : vector<8x128xbf16> to vector<8x16xbf16>
    %312 = vector.extract_strided_slice %213 {offsets = [0, 96], sizes = [16, 16], strides = [1, 1]} : vector<16x128xbf16> to vector<16x16xbf16>
    %cst_114 = arith.constant dense<0.000000e+00> : vector<8x16xf32>
    %313 = tpu.matmul %311, %312, %cst_114 {dimension_numbers = #tpu.dot_dimension_numbers<[1], [1], [0], [0], [0, 0, 1, 0], [], []>} : vector<8x16xbf16>, vector<16x16xbf16>, vector<8x16xf32> -> vector<8x16xf32>
    %cst_115 = arith.constant dense<0xFF800000> : vector<8xf32>
    %314 = vector.multi_reduction <maximumf>, %313, %cst_115 [1] : vector<8x16xf32> to vector<8xf32>
    %315 = vector.shape_cast %314 : vector<8xf32> to vector<8x1xf32>
    %316 = vector.broadcast %315 : vector<8x1xf32> to vector<8x16xf32>
    %317 = arith.subf %313, %316 : vector<8x16xf32>
    %318 = math.exp %317 : vector<8x16xf32>
    %cst_116 = arith.constant dense<0.000000e+00> : vector<8xf32>
    %319 = vector.multi_reduction <add>, %318, %cst_116 [1] : vector<8x16xf32> to vector<8xf32>
    %320 = vector.shape_cast %319 : vector<8xf32> to vector<8x1xf32>
    %321 = tpu.reciprocal %320 {approx = true} : vector<8x1xf32> -> vector<8x1xf32>
    %322 = vector.broadcast %321 : vector<8x1xf32> to vector<8x16xf32>
    %323 = arith.mulf %318, %322 : vector<8x16xf32>
    %324 = arith.truncf %323 : vector<8x16xf32> to vector<8x16xbf16>
    %325 = vector.extract_strided_slice %214 {offsets = [0, 96], sizes = [16, 16], strides = [1, 1]} : vector<16x128xbf16> to vector<16x16xbf16>
    %cst_117 = arith.constant dense<0.000000e+00> : vector<8x16xf32>
    %326 = tpu.matmul %324, %325, %cst_117 {dimension_numbers = #tpu.dot_dimension_numbers<[1], [0], [0], [1], [0, 0, 1, 1], [], []>} : vector<8x16xbf16>, vector<16x16xbf16>, vector<8x16xf32> -> vector<8x16xf32>
    %327 = vector.extract_strided_slice %212 {offsets = [0, 112], sizes = [8, 16], strides = [1, 1]} : vector<8x128xbf16> to vector<8x16xbf16>
    %328 = vector.extract_strided_slice %213 {offsets = [0, 112], sizes = [16, 16], strides = [1, 1]} : vector<16x128xbf16> to vector<16x16xbf16>
    %cst_118 = arith.constant dense<0.000000e+00> : vector<8x16xf32>
    %329 = tpu.matmul %327, %328, %cst_118 {dimension_numbers = #tpu.dot_dimension_numbers<[1], [1], [0], [0], [0, 0, 1, 0], [], []>} : vector<8x16xbf16>, vector<16x16xbf16>, vector<8x16xf32> -> vector<8x16xf32>
    %cst_119 = arith.constant dense<0xFF800000> : vector<8xf32>
    %330 = vector.multi_reduction <maximumf>, %329, %cst_119 [1] : vector<8x16xf32> to vector<8xf32>
    %331 = vector.shape_cast %330 : vector<8xf32> to vector<8x1xf32>
    %332 = vector.broadcast %331 : vector<8x1xf32> to vector<8x16xf32>
    %333 = arith.subf %329, %332 : vector<8x16xf32>
    %334 = math.exp %333 : vector<8x16xf32>
    %cst_120 = arith.constant dense<0.000000e+00> : vector<8xf32>
    %335 = vector.multi_reduction <add>, %334, %cst_120 [1] : vector<8x16xf32> to vector<8xf32>
    %336 = vector.shape_cast %335 : vector<8xf32> to vector<8x1xf32>
    %337 = tpu.reciprocal %336 {approx = true} : vector<8x1xf32> -> vector<8x1xf32>
    %338 = vector.broadcast %337 : vector<8x1xf32> to vector<8x16xf32>
    %339 = arith.mulf %334, %338 : vector<8x16xf32>
    %340 = arith.truncf %339 : vector<8x16xf32> to vector<8x16xbf16>
    %341 = vector.extract_strided_slice %214 {offsets = [0, 112], sizes = [16, 16], strides = [1, 1]} : vector<16x128xbf16> to vector<16x16xbf16>
    %cst_121 = arith.constant dense<0.000000e+00> : vector<8x16xf32>
    %342 = tpu.matmul %340, %341, %cst_121 {dimension_numbers = #tpu.dot_dimension_numbers<[1], [0], [0], [1], [0, 0, 1, 1], [], []>} : vector<8x16xbf16>, vector<16x16xbf16>, vector<8x16xf32> -> vector<8x16xf32>
    %343 = tpu.concatenate %230, %246, %262, %278, %294, %310, %326, %342 in 1 : vector<8x16xf32>, vector<8x16xf32>, vector<8x16xf32>, vector<8x16xf32>, vector<8x16xf32>, vector<8x16xf32>, vector<8x16xf32>, vector<8x16xf32> -> vector<8x128xf32>
    %344 = arith.truncf %343 : vector<8x128xf32> to vector<8x128xbf16>
    %cst_122 = arith.constant dense<0.000000e+00> : vector<8x128xf32>
    %345 = tpu.matmul %344, %198, %cst_122 {dimension_numbers = #tpu.dot_dimension_numbers<[1], [0], [0], [1], [0, 0, 1, 1], [], []>} : vector<8x128xbf16>, vector<128x128xbf16>, vector<8x128xf32> -> vector<8x128xf32>
    %346 = vector.broadcast %199 : vector<1x128xf32> to vector<8x128xf32>
    %347 = arith.addf %345, %346 : vector<8x128xf32>
    %348 = arith.addf %189, %347 : vector<8x128xf32>
    %c0_123 = arith.constant 0 : index
    %c0_124 = arith.constant 0 : index
    %349 = vector.load %arg27[%c0_123, %c0_124] : memref<1x128xf32, #tpu.memory_space<vmem>>, vector<1x128xf32>
    %c0_125 = arith.constant 0 : index
    %c0_126 = arith.constant 0 : index
    %350 = vector.load %arg28[%c0_125, %c0_126] : memref<1x128xf32, #tpu.memory_space<vmem>>, vector<1x128xf32>
    %cst_127 = arith.constant dense<0.000000e+00> : vector<8xf32>
    %351 = vector.multi_reduction <add>, %348, %cst_127 [1] : vector<8x128xf32> to vector<8xf32>
    %352 = vector.shape_cast %351 : vector<8xf32> to vector<8x1xf32>
    %cst_128 = arith.constant 1.280000e+02 : f32
    %353 = vector.broadcast %cst_128 : f32 to vector<8x1xf32>
    %354 = arith.divf %352, %353 : vector<8x1xf32>
    %355 = vector.broadcast %354 : vector<8x1xf32> to vector<8x128xf32>
    %356 = arith.subf %348, %355 : vector<8x128xf32>
    %357 = arith.mulf %356, %356 : vector<8x128xf32>
    %cst_129 = arith.constant dense<0.000000e+00> : vector<8xf32>
    %358 = vector.multi_reduction <add>, %357, %cst_129 [1] : vector<8x128xf32> to vector<8xf32>
    %359 = vector.shape_cast %358 : vector<8xf32> to vector<8x1xf32>
    %cst_130 = arith.constant 1.280000e+02 : f32
    %360 = vector.broadcast %cst_130 : f32 to vector<8x1xf32>
    %361 = arith.divf %359, %360 : vector<8x1xf32>
    %362 = vector.broadcast %354 : vector<8x1xf32> to vector<8x128xf32>
    %363 = arith.subf %348, %362 : vector<8x128xf32>
    %cst_131 = arith.constant 9.99999974E-6 : f32
    %364 = vector.broadcast %cst_131 : f32 to vector<8x1xf32>
    %365 = arith.addf %361, %364 : vector<8x1xf32>
    %366 = math.rsqrt %365 : vector<8x1xf32>
    %367 = vector.broadcast %366 : vector<8x1xf32> to vector<8x128xf32>
    %368 = arith.mulf %363, %367 : vector<8x128xf32>
    %369 = vector.broadcast %349 : vector<1x128xf32> to vector<8x128xf32>
    %370 = arith.mulf %368, %369 : vector<8x128xf32>
    %371 = vector.broadcast %350 : vector<1x128xf32> to vector<8x128xf32>
    %372 = arith.addf %370, %371 : vector<8x128xf32>
    %373 = arith.truncf %372 : vector<8x128xf32> to vector<8x128xbf16>
    %c0_132 = arith.constant 0 : index
    %c0_133 = arith.constant 0 : index
    %374 = vector.load %arg21[%c0_132, %c0_133] : memref<128x256xbf16, #tpu.memory_space<vmem>>, vector<128x256xbf16>
    %cst_134 = arith.constant dense<0.000000e+00> : vector<8x256xf32>
    %375 = tpu.matmul %373, %374, %cst_134 {dimension_numbers = #tpu.dot_dimension_numbers<[1], [0], [0], [1], [0, 0, 1, 1], [], []>} : vector<8x128xbf16>, vector<128x256xbf16>, vector<8x256xf32> -> vector<8x256xf32>
    %c0_135 = arith.constant 0 : index
    %c0_136 = arith.constant 0 : index
    %376 = vector.load %arg22[%c0_135, %c0_136] : memref<1x256xf32, #tpu.memory_space<vmem>>, vector<1x256xf32>
    %377 = vector.broadcast %376 : vector<1x256xf32> to vector<8x256xf32>
    %378 = arith.addf %375, %377 : vector<8x256xf32>
    %cst_137 = arith.constant 0.000000e+00 : f32
    %379 = vector.broadcast %cst_137 : f32 to vector<8x256xf32>
    %380 = arith.maximumf %378, %379 : vector<8x256xf32>
    %381 = arith.truncf %380 : vector<8x256xf32> to vector<8x256xbf16>
    %c0_138 = arith.constant 0 : index
    %c0_139 = arith.constant 0 : index
    %382 = vector.load %arg23[%c0_138, %c0_139] : memref<256x128xbf16, #tpu.memory_space<vmem>>, vector<256x128xbf16>
    %cst_140 = arith.constant dense<0.000000e+00> : vector<8x128xf32>
    %383 = tpu.matmul %381, %382, %cst_140 {dimension_numbers = #tpu.dot_dimension_numbers<[1], [0], [0], [1], [0, 0, 1, 1], [], []>} : vector<8x256xbf16>, vector<256x128xbf16>, vector<8x128xf32> -> vector<8x128xf32>
    %c0_141 = arith.constant 0 : index
    %c0_142 = arith.constant 0 : index
    %384 = vector.load %arg24[%c0_141, %c0_142] : memref<1x128xf32, #tpu.memory_space<vmem>>, vector<1x128xf32>
    %385 = vector.broadcast %384 : vector<1x128xf32> to vector<8x128xf32>
    %386 = arith.addf %383, %385 : vector<8x128xf32>
    %387 = arith.addf %372, %386 : vector<8x128xf32>
    %c0_143 = arith.constant 0 : index
    %c0_144 = arith.constant 0 : index
    %388 = vector.load %arg29[%c0_143, %c0_144] : memref<1x128xf32, #tpu.memory_space<vmem>>, vector<1x128xf32>
    %c0_145 = arith.constant 0 : index
    %c0_146 = arith.constant 0 : index
    %389 = vector.load %arg30[%c0_145, %c0_146] : memref<1x128xf32, #tpu.memory_space<vmem>>, vector<1x128xf32>
    %cst_147 = arith.constant dense<0.000000e+00> : vector<8xf32>
    %390 = vector.multi_reduction <add>, %387, %cst_147 [1] : vector<8x128xf32> to vector<8xf32>
    %391 = vector.shape_cast %390 : vector<8xf32> to vector<8x1xf32>
    %cst_148 = arith.constant 1.280000e+02 : f32
    %392 = vector.broadcast %cst_148 : f32 to vector<8x1xf32>
    %393 = arith.divf %391, %392 : vector<8x1xf32>
    %394 = vector.broadcast %393 : vector<8x1xf32> to vector<8x128xf32>
    %395 = arith.subf %387, %394 : vector<8x128xf32>
    %396 = arith.mulf %395, %395 : vector<8x128xf32>
    %cst_149 = arith.constant dense<0.000000e+00> : vector<8xf32>
    %397 = vector.multi_reduction <add>, %396, %cst_149 [1] : vector<8x128xf32> to vector<8xf32>
    %398 = vector.shape_cast %397 : vector<8xf32> to vector<8x1xf32>
    %cst_150 = arith.constant 1.280000e+02 : f32
    %399 = vector.broadcast %cst_150 : f32 to vector<8x1xf32>
    %400 = arith.divf %398, %399 : vector<8x1xf32>
    %401 = vector.broadcast %393 : vector<8x1xf32> to vector<8x128xf32>
    %402 = arith.subf %387, %401 : vector<8x128xf32>
    %cst_151 = arith.constant 9.99999974E-6 : f32
    %403 = vector.broadcast %cst_151 : f32 to vector<8x1xf32>
    %404 = arith.addf %400, %403 : vector<8x1xf32>
    %405 = math.rsqrt %404 : vector<8x1xf32>
    %406 = vector.broadcast %405 : vector<8x1xf32> to vector<8x128xf32>
    %407 = arith.mulf %402, %406 : vector<8x128xf32>
    %408 = vector.broadcast %388 : vector<1x128xf32> to vector<8x128xf32>
    %409 = arith.mulf %407, %408 : vector<8x128xf32>
    %410 = vector.broadcast %389 : vector<1x128xf32> to vector<8x128xf32>
    %411 = arith.addf %409, %410 : vector<8x128xf32>
    %c0_152 = arith.constant 0 : index
    %c0_153 = arith.constant 0 : index
    %c0_154 = arith.constant 0 : index
    %412 = vector.load %arg31[%c0_152, %c0_153, %c0_154] : memref<1x8x128xf32, #tpu.memory_space<vmem>>, vector<1x8x128xf32>
    %413 = vector.shape_cast %412 : vector<1x8x128xf32> to vector<8x128xf32>
    %414 = vector.shape_cast %411 : vector<8x128xf32> to vector<1x8x128xf32>
    tpu.vector_store %arg31[%c0_152, %c0_153, %c0_154], %414 {strides = array<i32>} : memref<1x8x128xf32, #tpu.memory_space<vmem>>, vector<1x8x128xf32>,
    return
  }
  func.func @transform_0(%arg0: i32) -> (i32, i32, i32) {
    %c0_i32 = arith.constant 0 : i32
    %c0_i32_0 = arith.constant 0 : i32
    %c0_i32_1 = arith.constant 0 : i32
    return %arg0, %c0_i32, %c0_i32_0 : i32, i32, i32
  }
  func.func @transform_1(%arg0: i32) -> (i32, i32, i32) {
    %c0_i32 = arith.constant 0 : i32
    %c0_i32_0 = arith.constant 0 : i32
    %c0_i32_1 = arith.constant 0 : i32
    return %arg0, %c0_i32, %c0_i32_0 : i32, i32, i32
  }
  func.func @transform_2(%arg0: i32) -> (i32, i32, i32) {
    %c0_i32 = arith.constant 0 : i32
    %c0_i32_0 = arith.constant 0 : i32
    %c0_i32_1 = arith.constant 0 : i32
    return %arg0, %c0_i32, %c0_i32_0 : i32, i32, i32
  }
  func.func @transform_3(%arg0: i32) -> (i32, i32, i32) {
    %c0_i32 = arith.constant 0 : i32
    %c0_i32_0 = arith.constant 0 : i32
    %c0_i32_1 = arith.constant 0 : i32
    return %arg0, %c0_i32, %c0_i32_0 : i32, i32, i32
  }
  func.func @transform_4(%arg0: i32) -> (i32, i32) {
    %c0_i32 = arith.constant 0 : i32
    %c0_i32_0 = arith.constant 0 : i32
    %c0_i32_1 = arith.constant 0 : i32
    return %c0_i32, %c0_i32_0 : i32, i32
  }
  func.func @transform_5(%arg0: i32) -> (i32, i32) {
    %c0_i32 = arith.constant 0 : i32
    %c0_i32_0 = arith.constant 0 : i32
    %c0_i32_1 = arith.constant 0 : i32
    return %c0_i32, %c0_i32_0 : i32, i32
  }
  func.func @transform_6(%arg0: i32) -> (i32, i32) {
    %c0_i32 = arith.constant 0 : i32
    %c0_i32_0 = arith.constant 0 : i32
    %c0_i32_1 = arith.constant 0 : i32
    return %c0_i32, %c0_i32_0 : i32, i32
  }
  func.func @transform_7(%arg0: i32) -> (i32, i32) {
    %c0_i32 = arith.constant 0 : i32
    %c0_i32_0 = arith.constant 0 : i32
    %c0_i32_1 = arith.constant 0 : i32
    return %c0_i32, %c0_i32_0 : i32, i32
  }
  func.func @transform_8(%arg0: i32) -> (i32, i32) {
    %c0_i32 = arith.constant 0 : i32
    %c0_i32_0 = arith.constant 0 : i32
    %c0_i32_1 = arith.constant 0 : i32
    return %c0_i32, %c0_i32_0 : i32, i32
  }
  func.func @transform_9(%arg0: i32) -> (i32, i32) {
    %c0_i32 = arith.constant 0 : i32
    %c0_i32_0 = arith.constant 0 : i32
    %c0_i32_1 = arith.constant 0 : i32
    return %c0_i32, %c0_i32_0 : i32, i32
  }
  func.func @transform_10(%arg0: i32) -> (i32, i32) {
    %c0_i32 = arith.constant 0 : i32
    %c0_i32_0 = arith.constant 0 : i32
    %c0_i32_1 = arith.constant 0 : i32
    return %c0_i32, %c0_i32_0 : i32, i32
  }
  func.func @transform_11(%arg0: i32) -> (i32, i32) {
    %c0_i32 = arith.constant 0 : i32
    %c0_i32_0 = arith.constant 0 : i32
    %c0_i32_1 = arith.constant 0 : i32
    return %c0_i32, %c0_i32_0 : i32, i32
  }
  func.func @transform_12(%arg0: i32) -> (i32, i32) {
    %c0_i32 = arith.constant 0 : i32
    %c0_i32_0 = arith.constant 0 : i32
    %c0_i32_1 = arith.constant 0 : i32
    return %c0_i32, %c0_i32_0 : i32, i32
  }
  func.func @transform_13(%arg0: i32) -> (i32, i32) {
    %c0_i32 = arith.constant 0 : i32
    %c0_i32_0 = arith.constant 0 : i32
    %c0_i32_1 = arith.constant 0 : i32
    return %c0_i32, %c0_i32_0 : i32, i32
  }
  func.func @transform_14(%arg0: i32) -> (i32, i32) {
    %c0_i32 = arith.constant 0 : i32
    %c0_i32_0 = arith.constant 0 : i32
    %c0_i32_1 = arith.constant 0 : i32
    return %c0_i32, %c0_i32_0 : i32, i32
  }
  func.func @transform_15(%arg0: i32) -> (i32, i32) {
    %c0_i32 = arith.constant 0 : i32
    %c0_i32_0 = arith.constant 0 : i32
    %c0_i32_1 = arith.constant 0 : i32
    return %c0_i32, %c0_i32_0 : i32, i32
  }
  func.func @transform_16(%arg0: i32) -> (i32, i32) {
    %c0_i32 = arith.constant 0 : i32
    %c0_i32_0 = arith.constant 0 : i32
    %c0_i32_1 = arith.constant 0 : i32
    return %c0_i32, %c0_i32_0 : i32, i32
  }
  func.func @transform_17(%arg0: i32) -> (i32, i32) {
    %c0_i32 = arith.constant 0 : i32
    %c0_i32_0 = arith.constant 0 : i32
    %c0_i32_1 = arith.constant 0 : i32
    return %c0_i32, %c0_i32_0 : i32, i32
  }
  func.func @transform_18(%arg0: i32) -> (i32, i32) {
    %c0_i32 = arith.constant 0 : i32
    %c0_i32_0 = arith.constant 0 : i32
    %c0_i32_1 = arith.constant 0 : i32
    return %c0_i32, %c0_i32_0 : i32, i32
  }
  func.func @transform_19(%arg0: i32) -> (i32, i32) {
    %c0_i32 = arith.constant 0 : i32
    %c0_i32_0 = arith.constant 0 : i32
    %c0_i32_1 = arith.constant 0 : i32
    return %c0_i32, %c0_i32_0 : i32, i32
  }
  func.func @transform_20(%arg0: i32) -> (i32, i32) {
    %c0_i32 = arith.constant 0 : i32
    %c0_i32_0 = arith.constant 0 : i32
    %c0_i32_1 = arith.constant 0 : i32
    return %c0_i32, %c0_i32_0 : i32, i32
  }
  func.func @transform_21(%arg0: i32) -> (i32, i32) {
    %c0_i32 = arith.constant 0 : i32
    %c0_i32_0 = arith.constant 0 : i32
    %c0_i32_1 = arith.constant 0 : i32
    return %c0_i32, %c0_i32_0 : i32, i32
  }
  func.func @transform_22(%arg0: i32) -> (i32, i32) {
    %c0_i32 = arith.constant 0 : i32
    %c0_i32_0 = arith.constant 0 : i32
    %c0_i32_1 = arith.constant 0 : i32
    return %c0_i32, %c0_i32_0 : i32, i32
  }
  func.func @transform_23(%arg0: i32) -> (i32, i32) {
    %c0_i32 = arith.constant 0 : i32
    %c0_i32_0 = arith.constant 0 : i32
    %c0_i32_1 = arith.constant 0 : i32
    return %c0_i32, %c0_i32_0 : i32, i32
  }
  func.func @transform_24(%arg0: i32) -> (i32, i32) {
    %c0_i32 = arith.constant 0 : i32
    %c0_i32_0 = arith.constant 0 : i32
    %c0_i32_1 = arith.constant 0 : i32
    return %c0_i32, %c0_i32_0 : i32, i32
  }
  func.func @transform_25(%arg0: i32) -> (i32, i32) {
    %c0_i32 = arith.constant 0 : i32
    %c0_i32_0 = arith.constant 0 : i32
    %c0_i32_1 = arith.constant 0 : i32
    return %c0_i32, %c0_i32_0 : i32, i32
  }
  func.func @transform_26(%arg0: i32) -> (i32, i32) {
    %c0_i32 = arith.constant 0 : i32
    %c0_i32_0 = arith.constant 0 : i32
    %c0_i32_1 = arith.constant 0 : i32
    return %c0_i32, %c0_i32_0 : i32, i32
  }
  func.func @transform_27(%arg0: i32) -> (i32, i32) {
    %c0_i32 = arith.constant 0 : i32
    %c0_i32_0 = arith.constant 0 : i32
    %c0_i32_1 = arith.constant 0 : i32
    return %c0_i32, %c0_i32_0 : i32, i32
  }
  func.func @transform_28(%arg0: i32) -> (i32, i32) {
    %c0_i32 = arith.constant 0 : i32
    %c0_i32_0 = arith.constant 0 : i32
    %c0_i32_1 = arith.constant 0 : i32
    return %c0_i32, %c0_i32_0 : i32, i32
  }
  func.func @transform_29(%arg0: i32) -> (i32, i32) {
    %c0_i32 = arith.constant 0 : i32
    %c0_i32_0 = arith.constant 0 : i32
    %c0_i32_1 = arith.constant 0 : i32
    return %c0_i32, %c0_i32_0 : i32, i32
  }
  func.func @transform_30(%arg0: i32) -> (i32, i32, i32) {
    %c0_i32 = arith.constant 0 : i32
    %c0_i32_0 = arith.constant 0 : i32
    %c0_i32_1 = arith.constant 0 : i32
    return %arg0, %c0_i32, %c0_i32_0 : i32, i32, i32
  }
}

</mosaic_0001>

<llo_original>
// kernel: tpu_custom_call.1
$region0: #{tpu_custom_call.1}
  #allocation0 [shape = 'u32[]', space=smem, size = 0x4, offset = 0x4, fixed_abs, tag = 'smem constant byte address 0x4 - core index']
  #allocation1 [shape = 'u32[144,128]{1,0:T(1,128)}', space=vmem, size = 0x12000, scoped, tag = 'internal scratch']
  %s0 = inlined_call_operand.smem [shape: u32[31], index: -1, kind: input, shape index: {}]
  %s1 = sld [smem:[%s0]]
  %s2 = scalar_lea.smem %s0, 1
  %s3 = sld [smem:[%s2]]
  %s4 = scalar_lea.smem %s0, 2
  %s5 = sld [smem:[%s4]]
  %s6 = scalar_lea.smem %s0, 3
  %s7 = sld [smem:[%s6]]
  %s8 = scalar_lea.smem %s0, 4
  %s9 = sld [smem:[%s8]]
  %s10 = scalar_lea.smem %s0, 5
  %s11 = sld [smem:[%s10]]
  %s12 = scalar_lea.smem %s0, 6
  %s13 = sld [smem:[%s12]]
  %s14 = scalar_lea.smem %s0, 7
  %s15 = sld [smem:[%s14]]
  %s16 = scalar_lea.smem %s0, 8
  %s17 = sld [smem:[%s16]]
  %s18 = scalar_lea.smem %s0, 9
  %s19 = sld [smem:[%s18]]
  %s20 = scalar_lea.smem %s0, 10
  %s21 = sld [smem:[%s20]]
  %s22 = scalar_lea.smem %s0, 11
  %s23 = sld [smem:[%s22]]
  %s24 = scalar_lea.smem %s0, 12
  %s25 = sld [smem:[%s24]]
  %s26 = scalar_lea.smem %s0, 13
  %s27 = sld [smem:[%s26]]
  %s28 = scalar_lea.smem %s0, 14
  %s29 = sld [smem:[%s28]]
  %s30 = scalar_lea.smem %s0, 15
  %s31 = sld [smem:[%s30]]
  %s32 = scalar_lea.smem %s0, 16
  %s33 = sld [smem:[%s32]]
  %s34 = scalar_lea.smem %s0, 17
  %s35 = sld [smem:[%s34]]
  %s36 = scalar_lea.smem %s0, 18
  %s37 = sld [smem:[%s36]]
  %s38 = scalar_lea.smem %s0, 19
  %s39 = sld [smem:[%s38]]
  %s40 = scalar_lea.smem %s0, 20
  %s41 = sld [smem:[%s40]]
  %s42 = scalar_lea.smem %s0, 21
  %s43 = sld [smem:[%s42]]
  %s44 = scalar_lea.smem %s0, 22
  %s45 = sld [smem:[%s44]]
  %s46 = scalar_lea.smem %s0, 23
  %s47 = sld [smem:[%s46]]
  %s48 = scalar_lea.smem %s0, 24
  %s49 = sld [smem:[%s48]]
  %s50 = scalar_lea.smem %s0, 25
  %s51 = sld [smem:[%s50]]
  %s52 = scalar_lea.smem %s0, 26
  %s53 = sld [smem:[%s52]]
  %s54 = scalar_lea.smem %s0, 27
  %s55 = sld [smem:[%s54]]
  %s56 = scalar_lea.smem %s0, 28
  %s57 = sld [smem:[%s56]]
  %s58 = scalar_lea.smem %s0, 29
  %s59 = sld [smem:[%s58]]
  %s60 = scalar_lea.smem %s0, 30
  %s61 = sld [smem:[%s60]]
  %s62 = sld [smem:[#allocation0]]
  $region225: #{tpu_custom_call.1} parent=0
    _
  %s64 = ssub.s32 1, %s62
  %s65 = scalar_select 0, %s64, %s62
  $region1: #{tpu_custom_call.1} parent=0
    #allocation2 [shape = 'u8[8192]{0}', space=vmem, size = 0x2000, scoped, tag = 'input window, operand 0']
    #allocation3 [shape = 's32[2]{0}', space=sflag, size = 0x8, scoped, tag = 'scoped memory for tpu_custom_call.1']
    #allocation4 [shape = 's32[2]{0}', space=sflag, size = 0x8, scoped, tag = 'scoped memory for tpu_custom_call.1']
    #allocation5 [shape = 'u8[16384]{0}', space=vmem, size = 0x4000, scoped, tag = 'input window, operand 1']
    #allocation6 [shape = 's32[2]{0}', space=sflag, size = 0x8, scoped, tag = 'scoped memory for tpu_custom_call.1']
    #allocation7 [shape = 'u8[8192]{0}', space=vmem, size = 0x2000, scoped, tag = 'input window, operand 2']
    #allocation8 [shape = 'u8[16384]{0}', space=vmem, size = 0x4000, scoped, tag = 'input window, operand 3']
    #allocation9 [shape = 's32[2]{0}', space=sflag, size = 0x8, scoped, tag = 'scoped memory for tpu_custom_call.1']
    #allocation10 [shape = 'u8[32768]{0}', space=vmem, size = 0x8000, scoped, tag = 'input window, operand 4, single buffered']
    #allocation11 [shape = 'u8[32768]{0}', space=vmem, size = 0x8000, scoped, tag = 'input window, operand 6, single buffered']
    #allocation12 [shape = 's32[1]{0}', space=sflag, size = 0x4, scoped, tag = 'scoped memory for tpu_custom_call.1']
    #allocation13 [shape = 'u8[32768]{0}', space=vmem, size = 0x8000, scoped, tag = 'input window, operand 8, single buffered']
    #allocation14 [shape = 'u8[512]{0}', space=vmem, size = 0x400, scoped, tag = 'input window, operand 9, single buffered']
    #allocation15 [shape = 's32[1]{0}', space=sflag, size = 0x4, scoped, tag = 'scoped memory for tpu_custom_call.1']
    #allocation16 [shape = 'u8[32768]{0}', space=vmem, size = 0x8000, scoped, tag = 'input window, operand 10, single buffered']
    #allocation17 [shape = 'u8[512]{0}', space=vmem, size = 0x400, scoped, tag = 'input window, operand 11, single buffered']
    #allocation18 [shape = 's32[1]{0}', space=sflag, size = 0x4, scoped, tag = 'scoped memory for tpu_custom_call.1']
    #allocation19 [shape = 'u8[32768]{0}', space=vmem, size = 0x8000, scoped, tag = 'input window, operand 12, single buffered']
    #allocation20 [shape = 'u8[512]{0}', space=vmem, size = 0x400, scoped, tag = 'input window, operand 13, single buffered']
    #allocation21 [shape = 's32[1]{0}', space=sflag, size = 0x4, scoped, tag = 'scoped memory for tpu_custom_call.1']
    #allocation22 [shape = 'u8[32768]{0}', space=vmem, size = 0x8000, scoped, tag = 'input window, operand 14, single buffered']
    #allocation23 [shape = 'u8[512]{0}', space=vmem, size = 0x400, scoped, tag = 'input window, operand 15, single buffered']
    #allocation24 [shape = 's32[1]{0}', space=sflag, size = 0x4, scoped, tag = 'scoped memory for tpu_custom_call.1']
    #allocation25 [shape = 'u8[32768]{0}', space=vmem, size = 0x8000, scoped, tag = 'input window, operand 16, single buffered']
    #allocation26 [shape = 'u8[512]{0}', space=vmem, size = 0x400, scoped, tag = 'input window, operand 17, single buffered']
    #allocation27 [shape = 's32[1]{0}', space=sflag, size = 0x4, scoped, tag = 'scoped memory for tpu_custom_call.1']
    #allocation28 [shape = 'u8[65536]{0}', space=vmem, size = 0x10000, scoped, tag = 'input window, operand 20, single buffered']
    #allocation29 [shape = 'u8[65536]{0}', space=vmem, size = 0x10000, scoped, tag = 'input window, operand 22, single buffered']
    #allocation30 [shape = 's32[1]{0}', space=sflag, size = 0x4, scoped, tag = 'scoped memory for tpu_custom_call.1']
    #allocation31 [shape = 'u8[8192]{0}', space=vmem, size = 0x2000, scoped, tag = 'output window, operand 0']
    %66 = vsyncpa [#allocation3], 0
    %s67 = scalar_lea.sflag [#allocation3], 1
    %68 = vsyncpa %s67, 0
    %69 = vsyncpa [#allocation6], 0
    %s70 = scalar_lea.sflag [#allocation6], 1
    %71 = vsyncpa %s70, 0
    %72 = vsyncpa [#allocation9], 0
    %s73 = scalar_lea.sflag [#allocation9], 1
    %74 = vsyncpa %s73, 0
    %75 = vsyncpa [#allocation12], 0
    %76 = vsyncpa [#allocation15], 0
    %77 = vsyncpa [#allocation18], 0
    %78 = vsyncpa [#allocation21], 0
    %79 = vsyncpa [#allocation24], 0
    %80 = vsyncpa [#allocation27], 0
    %81 = vsyncpa [#allocation30], 0
    %82 = vsyncpa [#allocation4], 0
    %s83 = scalar_lea.sflag [#allocation4], 1
    %84 = vsyncpa %s83, 0
    loop: start=0, step=1, limit=4
    $region2: #{tpu_custom_call.1} parent=1 // loop_pre_header
      _
    $region3: #{tpu_custom_call.1} parent=1 // loop_header
      %s86 = sphi 0, %s90
      %p87 = scmp.ge.s32.totalorder %s86, 4
      %s96 = sphi 0, %s98
      %s99 = sphi 0, %s96
      %s100 = sphi 0, %s99
      %s116 = sphi 0, %s100
      %s122 = sphi 0, %s124
      %s125 = sphi 0, %s122
      %s126 = sphi 0, %s125
      %s142 = sphi 0, %s126
      %s148 = sphi 0, %s150
      %s151 = sphi 0, %s148
      %s152 = sphi 0, %s151
      %s168 = sphi 0, %s152
      %s174 = sphi 0, %s176
      %s177 = sphi 0, %s174
      %s178 = sphi 0, %s177
      %s194 = sphi 0, %s178
      %s198 = sphi 0, %s198
      %s200 = sphi 0, %s198
      %s201 = sphi 0, %s200
      %s215 = sphi 0, %s201
      %s219 = sphi 0, %s219
      %s221 = sphi 0, %s219
      %s222 = sphi 0, %s221
      %s236 = sphi 0, %s222
      %s240 = sphi 0, %s240
      %s242 = sphi 0, %s240
      %s243 = sphi 0, %s242
      %s257 = sphi 0, %s243
      %s261 = sphi 0, %s261
      %s263 = sphi 0, %s261
      %s264 = sphi 0, %s263
      %s278 = sphi 0, %s264
      %s282 = sphi 0, %s282
      %s284 = sphi 0, %s282
      %s285 = sphi 0, %s284
      %s299 = sphi 0, %s285
      %s303 = sphi 0, %s303
      %s305 = sphi 0, %s303
      %s306 = sphi 0, %s305
      %s320 = sphi 0, %s306
      %s324 = sphi 0, %s324
      %s326 = sphi 0, %s324
      %s327 = sphi 0, %s326
      %s341 = sphi 0, %s327
      %s345 = sphi 0, %s345
      %s347 = sphi 0, %s345
      %s348 = sphi 0, %s347
      %s362 = sphi 0, %s348
      %s366 = sphi 0, %s366
      %s368 = sphi 0, %s366
      %s369 = sphi 0, %s368
      %s383 = sphi 0, %s369
      %s387 = sphi 0, %s387
      %s389 = sphi 0, %s387
      %s390 = sphi 0, %s389
      %s404 = sphi 0, %s390
      %s408 = sphi 0, %s408
      %s410 = sphi 0, %s408
      %s411 = sphi 0, %s410
      %s425 = sphi 0, %s411
      %s429 = sphi 0, %s429
      %s431 = sphi 0, %s429
      %s432 = sphi 0, %s431
      %s446 = sphi 0, %s432
      %s450 = sphi 0, %s450
      %s452 = sphi 0, %s450
      %s453 = sphi 0, %s452
      %s467 = sphi 0, %s453
      %s471 = sphi 0, %s471
      %s473 = sphi 0, %s471
      %s474 = sphi 0, %s473
      %s488 = sphi 0, %s474
      %s492 = sphi 0, %s492
      %s494 = sphi 0, %s492
      %s495 = sphi 0, %s494
      %s509 = sphi 0, %s495
      %s513 = sphi 0, %s513
      %s515 = sphi 0, %s513
      %s516 = sphi 0, %s515
      %s530 = sphi 0, %s516
      %s534 = sphi 0, %s534
      %s536 = sphi 0, %s534
      %s537 = sphi 0, %s536
      %s551 = sphi 0, %s537
      %s555 = sphi 0, %s555
      %s557 = sphi 0, %s555
      %s558 = sphi 0, %s557
      %s572 = sphi 0, %s558
      %s576 = sphi 0, %s576
      %s578 = sphi 0, %s576
      %s579 = sphi 0, %s578
      %s593 = sphi 0, %s579
      %s597 = sphi 0, %s597
      %s599 = sphi 0, %s597
      %s600 = sphi 0, %s599
      %s614 = sphi 0, %s600
      %s618 = sphi 0, %s618
      %s620 = sphi 0, %s618
      %s621 = sphi 0, %s620
      %s635 = sphi 0, %s621
      %s639 = sphi 0, %s639
      %s641 = sphi 0, %s639
      %s642 = sphi 0, %s641
      %s656 = sphi 0, %s642
      %s660 = sphi 0, %s660
      %s662 = sphi 0, %s660
      %s663 = sphi 0, %s662
      %s677 = sphi 0, %s663
      %s681 = sphi 0, %s681
      %s683 = sphi 0, %s681
      %s684 = sphi 0, %s683
      %s698 = sphi 0, %s684
      %s702 = sphi 0, %s702
      %s704 = sphi 0, %s702
      %s705 = sphi 0, %s704
      %s719 = sphi 0, %s705
      %s723 = sphi 0, %s723
      %s725 = sphi 0, %s723
      %s726 = sphi 0, %s725
      %s740 = sphi 0, %s726
      %s746 = sphi 0, %s748
      %s749 = sphi 0, %s746
      %s750 = sphi 0, %s749
      %s766 = sphi 0, %s750
    $region4: #{tpu_custom_call.1} parent=1 // loop_header_branch
      %89 = sbr.rel (%p87) target = $region8
    $region5: #{tpu_custom_call.1} parent=1 // loop_body
      %s91 = ssub.s32 %s86, 1
      %s92 = ssub.s32 %s86, 2
      %s93 = sadd.s32 %s86, 1
      %s94 = ssub.s32 %s86, %s93
      %p95 = scmp.eq.s32.totalorder %s94, 0
      %s97 = sadd.s32 %s96, 1
      %s98 = scalar_select %p95, %s96, %s97
      %p101 = pneg %p95
      %p102 = scmp.eq.s32.totalorder %s86, 1
      %p103 = por %p101, %p102
      %p104 = scmp.ne.s32.totalorder %s96, %s99
      %p105 = scmp.eq.s32.totalorder %s86, 0
      %p106 = por %p104, %p105
      %p107 = scmp.ne.s32.totalorder %s96, %s99
      %p108 = scmp.eq.s32.totalorder %s91, 1
      %p109 = por %p107, %p108
      %p110 = scmp.ne.s32.totalorder %s99, %s100
      %p111 = scmp.eq.s32.totalorder %s91, 0
      %p112 = por %p110, %p111
      %p113 = scmp.ne.s32.totalorder %s99, %s100
      %p114 = scmp.eq.s32.totalorder %s92, 1
      %p115 = por %p113, %p114
      %p117 = scmp.ne.s32.totalorder %s100, %s116
      %p118 = scmp.eq.s32.totalorder %s92, 0
      %p119 = por %p117, %p118
      %s120 = ssub.s32 %s86, %s93
      %p121 = scmp.eq.s32.totalorder %s120, 0
      %s123 = sadd.s32 %s122, 1
      %s124 = scalar_select %p121, %s122, %s123
      %p127 = pneg %p121
      %p128 = scmp.eq.s32.totalorder %s86, 1
      %p129 = por %p127, %p128
      %p130 = scmp.ne.s32.totalorder %s122, %s125
      %p131 = scmp.eq.s32.totalorder %s86, 0
      %p132 = por %p130, %p131
      %p133 = scmp.ne.s32.totalorder %s122, %s125
      %p134 = scmp.eq.s32.totalorder %s91, 1
      %p135 = por %p133, %p134
      %p136 = scmp.ne.s32.totalorder %s125, %s126
      %p137 = scmp.eq.s32.totalorder %s91, 0
      %p138 = por %p136, %p137
      %p139 = scmp.ne.s32.totalorder %s125, %s126
      %p140 = scmp.eq.s32.totalorder %s92, 1
      %p141 = por %p139, %p140
      %p143 = scmp.ne.s32.totalorder %s126, %s142
      %p144 = scmp.eq.s32.totalorder %s92, 0
      %p145 = por %p143, %p144
      %s146 = ssub.s32 %s86, %s93
      %p147 = scmp.eq.s32.totalorder %s146, 0
      %s149 = sadd.s32 %s148, 1
      %s150 = scalar_select %p147, %s148, %s149
      %p153 = pneg %p147
      %p154 = scmp.eq.s32.totalorder %s86, 1
      %p155 = por %p153, %p154
      %p156 = scmp.ne.s32.totalorder %s148, %s151
      %p157 = scmp.eq.s32.totalorder %s86, 0
      %p158 = por %p156, %p157
      %p159 = scmp.ne.s32.totalorder %s148, %s151
      %p160 = scmp.eq.s32.totalorder %s91, 1
      %p161 = por %p159, %p160
      %p162 = scmp.ne.s32.totalorder %s151, %s152
      %p163 = scmp.eq.s32.totalorder %s91, 0
      %p164 = por %p162, %p163
      %p165 = scmp.ne.s32.totalorder %s151, %s152
      %p166 = scmp.eq.s32.totalorder %s92, 1
      %p167 = por %p165, %p166
      %p169 = scmp.ne.s32.totalorder %s152, %s168
      %p170 = scmp.eq.s32.totalorder %s92, 0
      %p171 = por %p169, %p170
      %s172 = ssub.s32 %s86, %s93
      %p173 = scmp.eq.s32.totalorder %s172, 0
      %s175 = sadd.s32 %s174, 1
      %s176 = scalar_select %p173, %s174, %s175
      %p179 = pneg %p173
      %p180 = scmp.eq.s32.totalorder %s86, 1
      %p181 = por %p179, %p180
      %p182 = scmp.ne.s32.totalorder %s174, %s177
      %p183 = scmp.eq.s32.totalorder %s86, 0
      %p184 = por %p182, %p183
      %p185 = scmp.ne.s32.totalorder %s174, %s177
      %p186 = scmp.eq.s32.totalorder %s91, 1
      %p187 = por %p185, %p186
      %p188 = scmp.ne.s32.totalorder %s177, %s178
      %p189 = scmp.eq.s32.totalorder %s91, 0
      %p190 = por %p188, %p189
      %p191 = scmp.ne.s32.totalorder %s177, %s178
      %p192 = scmp.eq.s32.totalorder %s92, 1
      %p193 = por %p191, %p192
      %p195 = scmp.ne.s32.totalorder %s178, %s194
      %p196 = scmp.eq.s32.totalorder %s92, 0
      %p197 = por %p195, %p196
      %s199 = sadd.s32 %s198, 1
      %p202 = scmp.eq.s32.totalorder %s86, 1
      %p203 = scmp.ne.s32.totalorder %s198, %s200
      %p204 = scmp.eq.s32.totalorder %s86, 0
      %p205 = por %p203, %p204
      %p206 = scmp.ne.s32.totalorder %s198, %s200
      %p207 = scmp.eq.s32.totalorder %s91, 1
      %p208 = por %p206, %p207
      %p209 = scmp.ne.s32.totalorder %s200, %s201
      %p210 = scmp.eq.s32.totalorder %s91, 0
      %p211 = por %p209, %p210
      %p212 = scmp.ne.s32.totalorder %s200, %s201
      %p213 = scmp.eq.s32.totalorder %s92, 1
      %p214 = por %p212, %p213
      %p216 = scmp.ne.s32.totalorder %s201, %s215
      %p217 = scmp.eq.s32.totalorder %s92, 0
      %p218 = por %p216, %p217
      %s220 = sadd.s32 %s219, 1
      %p223 = scmp.eq.s32.totalorder %s86, 1
      %p224 = scmp.ne.s32.totalorder %s219, %s221
      %p225 = scmp.eq.s32.totalorder %s86, 0
      %p226 = por %p224, %p225
      %p227 = scmp.ne.s32.totalorder %s219, %s221
      %p228 = scmp.eq.s32.totalorder %s91, 1
      %p229 = por %p227, %p228
      %p230 = scmp.ne.s32.totalorder %s221, %s222
      %p231 = scmp.eq.s32.totalorder %s91, 0
      %p232 = por %p230, %p231
      %p233 = scmp.ne.s32.totalorder %s221, %s222
      %p234 = scmp.eq.s32.totalorder %s92, 1
      %p235 = por %p233, %p234
      %p237 = scmp.ne.s32.totalorder %s222, %s236
      %p238 = scmp.eq.s32.totalorder %s92, 0
      %p239 = por %p237, %p238
      %s241 = sadd.s32 %s240, 1
      %p244 = scmp.eq.s32.totalorder %s86, 1
      %p245 = scmp.ne.s32.totalorder %s240, %s242
      %p246 = scmp.eq.s32.totalorder %s86, 0
      %p247 = por %p245, %p246
      %p248 = scmp.ne.s32.totalorder %s240, %s242
      %p249 = scmp.eq.s32.totalorder %s91, 1
      %p250 = por %p248, %p249
      %p251 = scmp.ne.s32.totalorder %s242, %s243
      %p252 = scmp.eq.s32.totalorder %s91, 0
      %p253 = por %p251, %p252
      %p254 = scmp.ne.s32.totalorder %s242, %s243
      %p255 = scmp.eq.s32.totalorder %s92, 1
      %p256 = por %p254, %p255
      %p258 = scmp.ne.s32.totalorder %s243, %s257
      %p259 = scmp.eq.s32.totalorder %s92, 0
      %p260 = por %p258, %p259
      %s262 = sadd.s32 %s261, 1
      %p265 = scmp.eq.s32.totalorder %s86, 1
      %p266 = scmp.ne.s32.totalorder %s261, %s263
      %p267 = scmp.eq.s32.totalorder %s86, 0
      %p268 = por %p266, %p267
      %p269 = scmp.ne.s32.totalorder %s261, %s263
      %p270 = scmp.eq.s32.totalorder %s91, 1
      %p271 = por %p269, %p270
      %p272 = scmp.ne.s32.totalorder %s263, %s264
      %p273 = scmp.eq.s32.totalorder %s91, 0
      %p274 = por %p272, %p273
      %p275 = scmp.ne.s32.totalorder %s263, %s264
      %p276 = scmp.eq.s32.totalorder %s92, 1
      %p277 = por %p275, %p276
      %p279 = scmp.ne.s32.totalorder %s264, %s278
      %p280 = scmp.eq.s32.totalorder %s92, 0
      %p281 = por %p279, %p280
      %s283 = sadd.s32 %s282, 1
      %p286 = scmp.eq.s32.totalorder %s86, 1
      %p287 = scmp.ne.s32.totalorder %s282, %s284
      %p288 = scmp.eq.s32.totalorder %s86, 0
      %p289 = por %p287, %p288
      %p290 = scmp.ne.s32.totalorder %s282, %s284
      %p291 = scmp.eq.s32.totalorder %s91, 1
      %p292 = por %p290, %p291
      %p293 = scmp.ne.s32.totalorder %s284, %s285
      %p294 = scmp.eq.s32.totalorder %s91, 0
      %p295 = por %p293, %p294
      %p296 = scmp.ne.s32.totalorder %s284, %s285
      %p297 = scmp.eq.s32.totalorder %s92, 1
      %p298 = por %p296, %p297
      %p300 = scmp.ne.s32.totalorder %s285, %s299
      %p301 = scmp.eq.s32.totalorder %s92, 0
      %p302 = por %p300, %p301
      %s304 = sadd.s32 %s303, 1
      %p307 = scmp.eq.s32.totalorder %s86, 1
      %p308 = scmp.ne.s32.totalorder %s303, %s305
      %p309 = scmp.eq.s32.totalorder %s86, 0
      %p310 = por %p308, %p309
      %p311 = scmp.ne.s32.totalorder %s303, %s305
      %p312 = scmp.eq.s32.totalorder %s91, 1
      %p313 = por %p311, %p312
      %p314 = scmp.ne.s32.totalorder %s305, %s306
      %p315 = scmp.eq.s32.totalorder %s91, 0
      %p316 = por %p314, %p315
      %p317 = scmp.ne.s32.totalorder %s305, %s306
      %p318 = scmp.eq.s32.totalorder %s92, 1
      %p319 = por %p317, %p318
      %p321 = scmp.ne.s32.totalorder %s306, %s320
      %p322 = scmp.eq.s32.totalorder %s92, 0
      %p323 = por %p321, %p322
      %s325 = sadd.s32 %s324, 1
      %p328 = scmp.eq.s32.totalorder %s86, 1
      %p329 = scmp.ne.s32.totalorder %s324, %s326
      %p330 = scmp.eq.s32.totalorder %s86, 0
      %p331 = por %p329, %p330
      %p332 = scmp.ne.s32.totalorder %s324, %s326
      %p333 = scmp.eq.s32.totalorder %s91, 1
      %p334 = por %p332, %p333
      %p335 = scmp.ne.s32.totalorder %s326, %s327
      %p336 = scmp.eq.s32.totalorder %s91, 0
      %p337 = por %p335, %p336
      %p338 = scmp.ne.s32.totalorder %s326, %s327
      %p339 = scmp.eq.s32.totalorder %s92, 1
      %p340 = por %p338, %p339
      %p342 = scmp.ne.s32.totalorder %s327, %s341
      %p343 = scmp.eq.s32.totalorder %s92, 0
      %p344 = por %p342, %p343
      %s346 = sadd.s32 %s345, 1
      %p349 = scmp.eq.s32.totalorder %s86, 1
      %p350 = scmp.ne.s32.totalorder %s345, %s347
      %p351 = scmp.eq.s32.totalorder %s86, 0
      %p352 = por %p350, %p351
      %p353 = scmp.ne.s32.totalorder %s345, %s347
      %p354 = scmp.eq.s32.totalorder %s91, 1
      %p355 = por %p353, %p354
      %p356 = scmp.ne.s32.totalorder %s347, %s348
      %p357 = scmp.eq.s32.totalorder %s91, 0
      %p358 = por %p356, %p357
      %p359 = scmp.ne.s32.totalorder %s347, %s348
      %p360 = scmp.eq.s32.totalorder %s92, 1
      %p361 = por %p359, %p360
      %p363 = scmp.ne.s32.totalorder %s348, %s362
      %p364 = scmp.eq.s32.totalorder %s92, 0
      %p365 = por %p363, %p364
      %s367 = sadd.s32 %s366, 1
      %p370 = scmp.eq.s32.totalorder %s86, 1
      %p371 = scmp.ne.s32.totalorder %s366, %s368
      %p372 = scmp.eq.s32.totalorder %s86, 0
      %p373 = por %p371, %p372
      %p374 = scmp.ne.s32.totalorder %s366, %s368
      %p375 = scmp.eq.s32.totalorder %s91, 1
      %p376 = por %p374, %p375
      %p377 = scmp.ne.s32.totalorder %s368, %s369
      %p378 = scmp.eq.s32.totalorder %s91, 0
      %p379 = por %p377, %p378
      %p380 = scmp.ne.s32.totalorder %s368, %s369
      %p381 = scmp.eq.s32.totalorder %s92, 1
      %p382 = por %p380, %p381
      %p384 = scmp.ne.s32.totalorder %s369, %s383
      %p385 = scmp.eq.s32.totalorder %s92, 0
      %p386 = por %p384, %p385
      %s388 = sadd.s32 %s387, 1
      %p391 = scmp.eq.s32.totalorder %s86, 1
      %p392 = scmp.ne.s32.totalorder %s387, %s389
      %p393 = scmp.eq.s32.totalorder %s86, 0
      %p394 = por %p392, %p393
      %p395 = scmp.ne.s32.totalorder %s387, %s389
      %p396 = scmp.eq.s32.totalorder %s91, 1
      %p397 = por %p395, %p396
      %p398 = scmp.ne.s32.totalorder %s389, %s390
      %p399 = scmp.eq.s32.totalorder %s91, 0
      %p400 = por %p398, %p399
      %p401 = scmp.ne.s32.totalorder %s389, %s390
      %p402 = scmp.eq.s32.totalorder %s92, 1
      %p403 = por %p401, %p402
      %p405 = scmp.ne.s32.totalorder %s390, %s404
      %p406 = scmp.eq.s32.totalorder %s92, 0
      %p407 = por %p405, %p406
      %s409 = sadd.s32 %s408, 1
      %p412 = scmp.eq.s32.totalorder %s86, 1
      %p413 = scmp.ne.s32.totalorder %s408, %s410
      %p414 = scmp.eq.s32.totalorder %s86, 0
      %p415 = por %p413, %p414
      %p416 = scmp.ne.s32.totalorder %s408, %s410
      %p417 = scmp.eq.s32.totalorder %s91, 1
      %p418 = por %p416, %p417
      %p419 = scmp.ne.s32.totalorder %s410, %s411
      %p420 = scmp.eq.s32.totalorder %s91, 0
      %p421 = por %p419, %p420
      %p422 = scmp.ne.s32.totalorder %s410, %s411
      %p423 = scmp.eq.s32.totalorder %s92, 1
      %p424 = por %p422, %p423
      %p426 = scmp.ne.s32.totalorder %s411, %s425
      %p427 = scmp.eq.s32.totalorder %s92, 0
      %p428 = por %p426, %p427
      %s430 = sadd.s32 %s429, 1
      %p433 = scmp.eq.s32.totalorder %s86, 1
      %p434 = scmp.ne.s32.totalorder %s429, %s431
      %p435 = scmp.eq.s32.totalorder %s86, 0
      %p436 = por %p434, %p435
      %p437 = scmp.ne.s32.totalorder %s429, %s431
      %p438 = scmp.eq.s32.totalorder %s91, 1
      %p439 = por %p437, %p438
      %p440 = scmp.ne.s32.totalorder %s431, %s432
      %p441 = scmp.eq.s32.totalorder %s91, 0
      %p442 = por %p440, %p441
      %p443 = scmp.ne.s32.totalorder %s431, %s432
      %p444 = scmp.eq.s32.totalorder %s92, 1
      %p445 = por %p443, %p444
      %p447 = scmp.ne.s32.totalorder %s432, %s446
      %p448 = scmp.eq.s32.totalorder %s92, 0
      %p449 = por %p447, %p448
      %s451 = sadd.s32 %s450, 1
      %p454 = scmp.eq.s32.totalorder %s86, 1
      %p455 = scmp.ne.s32.totalorder %s450, %s452
      %p456 = scmp.eq.s32.totalorder %s86, 0
      %p457 = por %p455, %p456
      %p458 = scmp.ne.s32.totalorder %s450, %s452
      %p459 = scmp.eq.s32.totalorder %s91, 1
      %p460 = por %p458, %p459
      %p461 = scmp.ne.s32.totalorder %s452, %s453
      %p462 = scmp.eq.s32.totalorder %s91, 0
      %p463 = por %p461, %p462
      %p464 = scmp.ne.s32.totalorder %s452, %s453
      %p465 = scmp.eq.s32.totalorder %s92, 1
      %p466 = por %p464, %p465
      %p468 = scmp.ne.s32.totalorder %s453, %s467
      %p469 = scmp.eq.s32.totalorder %s92, 0
      %p470 = por %p468, %p469
      %s472 = sadd.s32 %s471, 1
      %p475 = scmp.eq.s32.totalorder %s86, 1
      %p476 = scmp.ne.s32.totalorder %s471, %s473
      %p477 = scmp.eq.s32.totalorder %s86, 0
      %p478 = por %p476, %p477
      %p479 = scmp.ne.s32.totalorder %s471, %s473
      %p480 = scmp.eq.s32.totalorder %s91, 1
      %p481 = por %p479, %p480
      %p482 = scmp.ne.s32.totalorder %s473, %s474
      %p483 = scmp.eq.s32.totalorder %s91, 0
      %p484 = por %p482, %p483
      %p485 = scmp.ne.s32.totalorder %s473, %s474
      %p486 = scmp.eq.s32.totalorder %s92, 1
      %p487 = por %p485, %p486
      %p489 = scmp.ne.s32.totalorder %s474, %s488
      %p490 = scmp.eq.s32.totalorder %s92, 0
      %p491 = por %p489, %p490
      %s493 = sadd.s32 %s492, 1
      %p496 = scmp.eq.s32.totalorder %s86, 1
      %p497 = scmp.ne.s32.totalorder %s492, %s494
      %p498 = scmp.eq.s32.totalorder %s86, 0
      %p499 = por %p497, %p498
      %p500 = scmp.ne.s32.totalorder %s492, %s494
      %p501 = scmp.eq.s32.totalorder %s91, 1
      %p502 = por %p500, %p501
      %p503 = scmp.ne.s32.totalorder %s494, %s495
      %p504 = scmp.eq.s32.totalorder %s91, 0
      %p505 = por %p503, %p504
      %p506 = scmp.ne.s32.totalorder %s494, %s495
      %p507 = scmp.eq.s32.totalorder %s92, 1
      %p508 = por %p506, %p507
      %p510 = scmp.ne.s32.totalorder %s495, %s509
      %p511 = scmp.eq.s32.totalorder %s92, 0
      %p512 = por %p510, %p511
      %s514 = sadd.s32 %s513, 1
      %p517 = scmp.eq.s32.totalorder %s86, 1
      %p518 = scmp.ne.s32.totalorder %s513, %s515
      %p519 = scmp.eq.s32.totalorder %s86, 0
      %p520 = por %p518, %p519
      %p521 = scmp.ne.s32.totalorder %s513, %s515
      %p522 = scmp.eq.s32.totalorder %s91, 1
      %p523 = por %p521, %p522
      %p524 = scmp.ne.s32.totalorder %s515, %s516
      %p525 = scmp.eq.s32.totalorder %s91, 0
      %p526 = por %p524, %p525
      %p527 = scmp.ne.s32.totalorder %s515, %s516
      %p528 = scmp.eq.s32.totalorder %s92, 1
      %p529 = por %p527, %p528
      %p531 = scmp.ne.s32.totalorder %s516, %s530
      %p532 = scmp.eq.s32.totalorder %s92, 0
      %p533 = por %p531, %p532
      %s535 = sadd.s32 %s534, 1
      %p538 = scmp.eq.s32.totalorder %s86, 1
      %p539 = scmp.ne.s32.totalorder %s534, %s536
      %p540 = scmp.eq.s32.totalorder %s86, 0
      %p541 = por %p539, %p540
      %p542 = scmp.ne.s32.totalorder %s534, %s536
      %p543 = scmp.eq.s32.totalorder %s91, 1
      %p544 = por %p542, %p543
      %p545 = scmp.ne.s32.totalorder %s536, %s537
      %p546 = scmp.eq.s32.totalorder %s91, 0
      %p547 = por %p545, %p546
      %p548 = scmp.ne.s32.totalorder %s536, %s537
      %p549 = scmp.eq.s32.totalorder %s92, 1
      %p550 = por %p548, %p549
      %p552 = scmp.ne.s32.totalorder %s537, %s551
      %p553 = scmp.eq.s32.totalorder %s92, 0
      %p554 = por %p552, %p553
      %s556 = sadd.s32 %s555, 1
      %p559 = scmp.eq.s32.totalorder %s86, 1
      %p560 = scmp.ne.s32.totalorder %s555, %s557
      %p561 = scmp.eq.s32.totalorder %s86, 0
      %p562 = por %p560, %p561
      %p563 = scmp.ne.s32.totalorder %s555, %s557
      %p564 = scmp.eq.s32.totalorder %s91, 1
      %p565 = por %p563, %p564
      %p566 = scmp.ne.s32.totalorder %s557, %s558
      %p567 = scmp.eq.s32.totalorder %s91, 0
      %p568 = por %p566, %p567
      %p569 = scmp.ne.s32.totalorder %s557, %s558
      %p570 = scmp.eq.s32.totalorder %s92, 1
      %p571 = por %p569, %p570
      %p573 = scmp.ne.s32.totalorder %s558, %s572
      %p574 = scmp.eq.s32.totalorder %s92, 0
      %p575 = por %p573, %p574
      %s577 = sadd.s32 %s576, 1
      %p580 = scmp.eq.s32.totalorder %s86, 1
      %p581 = scmp.ne.s32.totalorder %s576, %s578
      %p582 = scmp.eq.s32.totalorder %s86, 0
      %p583 = por %p581, %p582
      %p584 = scmp.ne.s32.totalorder %s576, %s578
      %p585 = scmp.eq.s32.totalorder %s91, 1
      %p586 = por %p584, %p585
      %p587 = scmp.ne.s32.totalorder %s578, %s579
      %p588 = scmp.eq.s32.totalorder %s91, 0
      %p589 = por %p587, %p588
      %p590 = scmp.ne.s32.totalorder %s578, %s579
      %p591 = scmp.eq.s32.totalorder %s92, 1
      %p592 = por %p590, %p591
      %p594 = scmp.ne.s32.totalorder %s579, %s593
      %p595 = scmp.eq.s32.totalorder %s92, 0
      %p596 = por %p594, %p595
      %s598 = sadd.s32 %s597, 1
      %p601 = scmp.eq.s32.totalorder %s86, 1
      %p602 = scmp.ne.s32.totalorder %s597, %s599
      %p603 = scmp.eq.s32.totalorder %s86, 0
      %p604 = por %p602, %p603
      %p605 = scmp.ne.s32.totalorder %s597, %s599
      %p606 = scmp.eq.s32.totalorder %s91, 1
      %p607 = por %p605, %p606
      %p608 = scmp.ne.s32.totalorder %s599, %s600
      %p609 = scmp.eq.s32.totalorder %s91, 0
      %p610 = por %p608, %p609
      %p611 = scmp.ne.s32.totalorder %s599, %s600
      %p612 = scmp.eq.s32.totalorder %s92, 1
      %p613 = por %p611, %p612
      %p615 = scmp.ne.s32.totalorder %s600, %s614
      %p616 = scmp.eq.s32.totalorder %s92, 0
      %p617 = por %p615, %p616
      %s619 = sadd.s32 %s618, 1
      %p622 = scmp.eq.s32.totalorder %s86, 1
      %p623 = scmp.ne.s32.totalorder %s618, %s620
      %p624 = scmp.eq.s32.totalorder %s86, 0
      %p625 = por %p623, %p624
      %p626 = scmp.ne.s32.totalorder %s618, %s620
      %p627 = scmp.eq.s32.totalorder %s91, 1
      %p628 = por %p626, %p627
      %p629 = scmp.ne.s32.totalorder %s620, %s621
      %p630 = scmp.eq.s32.totalorder %s91, 0
      %p631 = por %p629, %p630
      %p632 = scmp.ne.s32.totalorder %s620, %s621
      %p633 = scmp.eq.s32.totalorder %s92, 1
      %p634 = por %p632, %p633
      %p636 = scmp.ne.s32.totalorder %s621, %s635
      %p637 = scmp.eq.s32.totalorder %s92, 0
      %p638 = por %p636, %p637
      %s640 = sadd.s32 %s639, 1
      %p643 = scmp.eq.s32.totalorder %s86, 1
      %p644 = scmp.ne.s32.totalorder %s639, %s641
      %p645 = scmp.eq.s32.totalorder %s86, 0
      %p646 = por %p644, %p645
      %p647 = scmp.ne.s32.totalorder %s639, %s641
      %p648 = scmp.eq.s32.totalorder %s91, 1
      %p649 = por %p647, %p648
      %p650 = scmp.ne.s32.totalorder %s641, %s642
      %p651 = scmp.eq.s32.totalorder %s91, 0
      %p652 = por %p650, %p651
      %p653 = scmp.ne.s32.totalorder %s641, %s642
      %p654 = scmp.eq.s32.totalorder %s92, 1
      %p655 = por %p653, %p654
      %p657 = scmp.ne.s32.totalorder %s642, %s656
      %p658 = scmp.eq.s32.totalorder %s92, 0
      %p659 = por %p657, %p658
      %s661 = sadd.s32 %s660, 1
      %p664 = scmp.eq.s32.totalorder %s86, 1
      %p665 = scmp.ne.s32.totalorder %s660, %s662
      %p666 = scmp.eq.s32.totalorder %s86, 0
      %p667 = por %p665, %p666
      %p668 = scmp.ne.s32.totalorder %s660, %s662
      %p669 = scmp.eq.s32.totalorder %s91, 1
      %p670 = por %p668, %p669
      %p671 = scmp.ne.s32.totalorder %s662, %s663
      %p672 = scmp.eq.s32.totalorder %s91, 0
      %p673 = por %p671, %p672
      %p674 = scmp.ne.s32.totalorder %s662, %s663
      %p675 = scmp.eq.s32.totalorder %s92, 1
      %p676 = por %p674, %p675
      %p678 = scmp.ne.s32.totalorder %s663, %s677
      %p679 = scmp.eq.s32.totalorder %s92, 0
      %p680 = por %p678, %p679
      %s682 = sadd.s32 %s681, 1
      %p685 = scmp.eq.s32.totalorder %s86, 1
      %p686 = scmp.ne.s32.totalorder %s681, %s683
      %p687 = scmp.eq.s32.totalorder %s86, 0
      %p688 = por %p686, %p687
      %p689 = scmp.ne.s32.totalorder %s681, %s683
      %p690 = scmp.eq.s32.totalorder %s91, 1
      %p691 = por %p689, %p690
      %p692 = scmp.ne.s32.totalorder %s683, %s684
      %p693 = scmp.eq.s32.totalorder %s91, 0
      %p694 = por %p692, %p693
      %p695 = scmp.ne.s32.totalorder %s683, %s684
      %p696 = scmp.eq.s32.totalorder %s92, 1
      %p697 = por %p695, %p696
      %p699 = scmp.ne.s32.totalorder %s684, %s698
      %p700 = scmp.eq.s32.totalorder %s92, 0
      %p701 = por %p699, %p700
      %s703 = sadd.s32 %s702, 1
      %p706 = scmp.eq.s32.totalorder %s86, 1
      %p707 = scmp.ne.s32.totalorder %s702, %s704
      %p708 = scmp.eq.s32.totalorder %s86, 0
      %p709 = por %p707, %p708
      %p710 = scmp.ne.s32.totalorder %s702, %s704
      %p711 = scmp.eq.s32.totalorder %s91, 1
      %p712 = por %p710, %p711
      %p713 = scmp.ne.s32.totalorder %s704, %s705
      %p714 = scmp.eq.s32.totalorder %s91, 0
      %p715 = por %p713, %p714
      %p716 = scmp.ne.s32.totalorder %s704, %s705
      %p717 = scmp.eq.s32.totalorder %s92, 1
      %p718 = por %p716, %p717
      %p720 = scmp.ne.s32.totalorder %s705, %s719
      %p721 = scmp.eq.s32.totalorder %s92, 0
      %p722 = por %p720, %p721
      %s724 = sadd.s32 %s723, 1
      %p727 = scmp.eq.s32.totalorder %s86, 1
      %p728 = scmp.ne.s32.totalorder %s723, %s725
      %p729 = scmp.eq.s32.totalorder %s86, 0
      %p730 = por %p728, %p729
      %p731 = scmp.ne.s32.totalorder %s723, %s725
      %p732 = scmp.eq.s32.totalorder %s91, 1
      %p733 = por %p731, %p732
      %p734 = scmp.ne.s32.totalorder %s725, %s726
      %p735 = scmp.eq.s32.totalorder %s91, 0
      %p736 = por %p734, %p735
      %p737 = scmp.ne.s32.totalorder %s725, %s726
      %p738 = scmp.eq.s32.totalorder %s92, 1
      %p739 = por %p737, %p738
      %p741 = scmp.ne.s32.totalorder %s726, %s740
      %p742 = scmp.eq.s32.totalorder %s92, 0
      %p743 = por %p741, %p742
      %s744 = ssub.s32 %s86, %s93
      %p745 = scmp.eq.s32.totalorder %s744, 0
      %s747 = sadd.s32 %s746, 1
      %s748 = scalar_select %p745, %s746, %s747
      %p751 = pneg %p745
      %p752 = scmp.eq.s32.totalorder %s86, 1
      %p753 = por %p751, %p752
      %p754 = scmp.ne.s32.totalorder %s746, %s749
      %p755 = scmp.eq.s32.totalorder %s86, 0
      %p756 = por %p754, %p755
      %p757 = scmp.ne.s32.totalorder %s746, %s749
      %p758 = scmp.eq.s32.totalorder %s91, 1
      %p759 = por %p757, %p758
      %p760 = scmp.ne.s32.totalorder %s749, %s750
      %p761 = scmp.eq.s32.totalorder %s91, 0
      %p762 = por %p760, %p761
      %p763 = scmp.ne.s32.totalorder %s749, %s750
      %p764 = scmp.eq.s32.totalorder %s92, 1
      %p765 = por %p763, %p764
      %p767 = scmp.ne.s32.totalorder %s750, %s766
      %p768 = scmp.eq.s32.totalorder %s92, 0
      %p769 = por %p767, %p768
      %p770 = scmp.le.s32.totalorder 1, %s86
      %p771 = scmp.lt.s32.totalorder %s86, 3
      %p772 = pnand %p770, %p771
      %p773 = pneg %p772
      // Predicated region
      $region9: #{tpu_custom_call.1} parent=5 // pred_check
        _
      $region10: #{tpu_custom_call.1} parent=5 // pred_check_branch
        %775 = sbr.rel (%p772) target = $region12
      $region11: #{tpu_custom_call.1} parent=5 // pred_region
        %s776 = ssub.s32 %s86, 1
        // Predicated region
        $region13: #{tpu_custom_call.1} parent=11 // pred_check
          %p777 = pneg %p211
        $region14: #{tpu_custom_call.1} parent=11 // pred_check_branch
          %779 = sbr.rel (%p777) target = $region16
        $region15: #{tpu_custom_call.1} parent=11 // pred_region
          %s781 = ssub.s32 1024, 1024
          %782 = vsyncadd [#allocation9], %s781
          %s783 = sshll.u32 [#allocation10], 4
          %s784 = int_to_ptr.vmem [resolvable:$true] %s783
          %789 = dma.hbm_to_vmem [thread:$0]  %s9, 1024, %s784, [#allocation9], 64, 64, 4
        $region16: #{tpu_custom_call.1} parent=11 // pred_fallthru
          _
        // Predicated region
        $region17: #{tpu_custom_call.1} parent=11 // pred_check
          %p790 = pneg %p232
        $region18: #{tpu_custom_call.1} parent=11 // pred_check_branch
          %792 = sbr.rel (%p790) target = $region20
        $region19: #{tpu_custom_call.1} parent=11 // pred_region
          _
        $region20: #{tpu_custom_call.1} parent=11 // pred_fallthru
          _
        // Predicated region
        $region21: #{tpu_custom_call.1} parent=11 // pred_check
          %p793 = pneg %p253
        $region22: #{tpu_custom_call.1} parent=11 // pred_check_branch
          %795 = sbr.rel (%p793) target = $region24
        $region23: #{tpu_custom_call.1} parent=11 // pred_region
          %s797 = ssub.s32 1024, 1024
          %798 = vsyncadd [#allocation12], %s797
          %s799 = sshll.u32 [#allocation11], 4
          %s800 = int_to_ptr.vmem [resolvable:$true] %s799
          %805 = dma.hbm_to_vmem [thread:$0]  %s13, 1024, %s800, [#allocation12], 64, 64, 4
        $region24: #{tpu_custom_call.1} parent=11 // pred_fallthru
          _
        // Predicated region
        $region25: #{tpu_custom_call.1} parent=11 // pred_check
          %p806 = pneg %p274
        $region26: #{tpu_custom_call.1} parent=11 // pred_check_branch
          %808 = sbr.rel (%p806) target = $region28
        $region27: #{tpu_custom_call.1} parent=11 // pred_region
          _
        $region28: #{tpu_custom_call.1} parent=11 // pred_fallthru
          _
        // Predicated region
        $region29: #{tpu_custom_call.1} parent=11 // pred_check
          %p809 = pneg %p295
        $region30: #{tpu_custom_call.1} parent=11 // pred_check_branch
          %811 = sbr.rel (%p809) target = $region32
        $region31: #{tpu_custom_call.1} parent=11 // pred_region
          %s813 = ssub.s32 1024, 1024
          %814 = vsyncadd [#allocation12], %s813
          %s815 = sshll.u32 [#allocation13], 4
          %s816 = int_to_ptr.vmem [resolvable:$true] %s815
          %821 = dma.hbm_to_vmem [thread:$0]  %s17, 1024, %s816, [#allocation12], 64, 64, 4
        $region32: #{tpu_custom_call.1} parent=11 // pred_fallthru
          _
        // Predicated region
        $region33: #{tpu_custom_call.1} parent=11 // pred_check
          %p822 = pneg %p316
        $region34: #{tpu_custom_call.1} parent=11 // pred_check_branch
          %824 = sbr.rel (%p822) target = $region36
        $region35: #{tpu_custom_call.1} parent=11 // pred_region
          %s826 = ssub.s32 16, 16
          %827 = vsyncadd [#allocation15], %s826
          %s829 = sshll.u32 [#allocation14], 4
          %s830 = int_to_ptr.vmem [resolvable:$true] %s829
          %832 = dma.hbm_to_vmem [thread:$0]  %s19, 16, %s830, [#allocation15]
        $region36: #{tpu_custom_call.1} parent=11 // pred_fallthru
          _
        // Predicated region
        $region37: #{tpu_custom_call.1} parent=11 // pred_check
          %p833 = pneg %p337
        $region38: #{tpu_custom_call.1} parent=11 // pred_check_branch
          %835 = sbr.rel (%p833) target = $region40
        $region39: #{tpu_custom_call.1} parent=11 // pred_region
          %s837 = ssub.s32 1024, 1024
          %838 = vsyncadd [#allocation15], %s837
          %s839 = sshll.u32 [#allocation16], 4
          %s840 = int_to_ptr.vmem [resolvable:$true] %s839
          %845 = dma.hbm_to_vmem [thread:$0]  %s21, 1024, %s840, [#allocation15], 64, 64, 4
        $region40: #{tpu_custom_call.1} parent=11 // pred_fallthru
          _
        // Predicated region
        $region41: #{tpu_custom_call.1} parent=11 // pred_check
          %p846 = pneg %p358
        $region42: #{tpu_custom_call.1} parent=11 // pred_check_branch
          %848 = sbr.rel (%p846) target = $region44
        $region43: #{tpu_custom_call.1} parent=11 // pred_region
          %s850 = ssub.s32 16, 16
          %851 = vsyncadd [#allocation18], %s850
          %s853 = sshll.u32 [#allocation17], 4
          %s854 = int_to_ptr.vmem [resolvable:$true] %s853
          %856 = dma.hbm_to_vmem [thread:$0]  %s23, 16, %s854, [#allocation18]
        $region44: #{tpu_custom_call.1} parent=11 // pred_fallthru
          _
        // Predicated region
        $region45: #{tpu_custom_call.1} parent=11 // pred_check
          %p857 = pneg %p379
        $region46: #{tpu_custom_call.1} parent=11 // pred_check_branch
          %859 = sbr.rel (%p857) target = $region48
        $region47: #{tpu_custom_call.1} parent=11 // pred_region
          %s861 = ssub.s32 1024, 1024
          %862 = vsyncadd [#allocation18], %s861
          %s863 = sshll.u32 [#allocation19], 4
          %s864 = int_to_ptr.vmem [resolvable:$true] %s863
          %869 = dma.hbm_to_vmem [thread:$0]  %s25, 1024, %s864, [#allocation18], 64, 64, 4
        $region48: #{tpu_custom_call.1} parent=11 // pred_fallthru
          _
        // Predicated region
        $region49: #{tpu_custom_call.1} parent=11 // pred_check
          %p870 = pneg %p400
        $region50: #{tpu_custom_call.1} parent=11 // pred_check_branch
          %872 = sbr.rel (%p870) target = $region52
        $region51: #{tpu_custom_call.1} parent=11 // pred_region
          %s874 = ssub.s32 16, 16
          %875 = vsyncadd [#allocation21], %s874
          %s877 = sshll.u32 [#allocation20], 4
          %s878 = int_to_ptr.vmem [resolvable:$true] %s877
          %880 = dma.hbm_to_vmem [thread:$0]  %s27, 16, %s878, [#allocation21]
        $region52: #{tpu_custom_call.1} parent=11 // pred_fallthru
          _
        // Predicated region
        $region53: #{tpu_custom_call.1} parent=11 // pred_check
          %p881 = pneg %p421
        $region54: #{tpu_custom_call.1} parent=11 // pred_check_branch
          %883 = sbr.rel (%p881) target = $region56
        $region55: #{tpu_custom_call.1} parent=11 // pred_region
          %s885 = ssub.s32 1024, 1024
          %886 = vsyncadd [#allocation21], %s885
          %s887 = sshll.u32 [#allocation22], 4
          %s888 = int_to_ptr.vmem [resolvable:$true] %s887
          %893 = dma.hbm_to_vmem [thread:$0]  %s29, 1024, %s888, [#allocation21], 64, 64, 4
        $region56: #{tpu_custom_call.1} parent=11 // pred_fallthru
          _
        // Predicated region
        $region57: #{tpu_custom_call.1} parent=11 // pred_check
          %p894 = pneg %p442
        $region58: #{tpu_custom_call.1} parent=11 // pred_check_branch
          %896 = sbr.rel (%p894) target = $region60
        $region59: #{tpu_custom_call.1} parent=11 // pred_region
          %s898 = ssub.s32 16, 16
          %899 = vsyncadd [#allocation24], %s898
          %s901 = sshll.u32 [#allocation23], 4
          %s902 = int_to_ptr.vmem [resolvable:$true] %s901
          %904 = dma.hbm_to_vmem [thread:$0]  %s31, 16, %s902, [#allocation24]
        $region60: #{tpu_custom_call.1} parent=11 // pred_fallthru
          _
        // Predicated region
        $region61: #{tpu_custom_call.1} parent=11 // pred_check
          %p905 = pneg %p463
        $region62: #{tpu_custom_call.1} parent=11 // pred_check_branch
          %907 = sbr.rel (%p905) target = $region64
        $region63: #{tpu_custom_call.1} parent=11 // pred_region
          %s909 = ssub.s32 1024, 1024
          %910 = vsyncadd [#allocation24], %s909
          %s911 = sshll.u32 [#allocation25], 4
          %s912 = int_to_ptr.vmem [resolvable:$true] %s911
          %917 = dma.hbm_to_vmem [thread:$0]  %s33, 1024, %s912, [#allocation24], 64, 64, 4
        $region64: #{tpu_custom_call.1} parent=11 // pred_fallthru
          _
        // Predicated region
        $region65: #{tpu_custom_call.1} parent=11 // pred_check
          %p918 = pneg %p484
        $region66: #{tpu_custom_call.1} parent=11 // pred_check_branch
          %920 = sbr.rel (%p918) target = $region68
        $region67: #{tpu_custom_call.1} parent=11 // pred_region
          %s922 = ssub.s32 16, 16
          %923 = vsyncadd [#allocation27], %s922
          %s925 = sshll.u32 [#allocation26], 4
          %s926 = int_to_ptr.vmem [resolvable:$true] %s925
          %928 = dma.hbm_to_vmem [thread:$0]  %s35, 16, %s926, [#allocation27]
        $region68: #{tpu_custom_call.1} parent=11 // pred_fallthru
          _
        // Predicated region
        $region69: #{tpu_custom_call.1} parent=11 // pred_check
          %p929 = pneg %p505
        $region70: #{tpu_custom_call.1} parent=11 // pred_check_branch
          %931 = sbr.rel (%p929) target = $region72
        $region71: #{tpu_custom_call.1} parent=11 // pred_region
          _
        $region72: #{tpu_custom_call.1} parent=11 // pred_fallthru
          _
        // Predicated region
        $region73: #{tpu_custom_call.1} parent=11 // pred_check
          %p932 = pneg %p526
        $region74: #{tpu_custom_call.1} parent=11 // pred_check_branch
          %934 = sbr.rel (%p932) target = $region76
        $region75: #{tpu_custom_call.1} parent=11 // pred_region
          _
        $region76: #{tpu_custom_call.1} parent=11 // pred_fallthru
          _
        // Predicated region
        $region77: #{tpu_custom_call.1} parent=11 // pred_check
          %p935 = pneg %p547
        $region78: #{tpu_custom_call.1} parent=11 // pred_check_branch
          %937 = sbr.rel (%p935) target = $region80
        $region79: #{tpu_custom_call.1} parent=11 // pred_region
          %s939 = ssub.s32 2048, 2048
          %940 = vsyncadd [#allocation27], %s939
          %s941 = sshll.u32 [#allocation28], 4
          %s942 = int_to_ptr.vmem [resolvable:$true] %s941
          %947 = dma.hbm_to_vmem [thread:$0]  %s41, 2048, %s942, [#allocation27], 128, 128, 8
        $region80: #{tpu_custom_call.1} parent=11 // pred_fallthru
          _
        // Predicated region
        $region81: #{tpu_custom_call.1} parent=11 // pred_check
          %p948 = pneg %p568
        $region82: #{tpu_custom_call.1} parent=11 // pred_check_branch
          %950 = sbr.rel (%p948) target = $region84
        $region83: #{tpu_custom_call.1} parent=11 // pred_region
          _
        $region84: #{tpu_custom_call.1} parent=11 // pred_fallthru
          _
        // Predicated region
        $region85: #{tpu_custom_call.1} parent=11 // pred_check
          %p951 = pneg %p589
        $region86: #{tpu_custom_call.1} parent=11 // pred_check_branch
          %953 = sbr.rel (%p951) target = $region88
        $region87: #{tpu_custom_call.1} parent=11 // pred_region
          %s955 = ssub.s32 2048, 2048
          %956 = vsyncadd [#allocation30], %s955
          %s957 = sshll.u32 [#allocation29], 4
          %s958 = int_to_ptr.vmem [resolvable:$true] %s957
          %963 = dma.hbm_to_vmem [thread:$0]  %s45, 2048, %s958, [#allocation30], 64, 64, 4
        $region88: #{tpu_custom_call.1} parent=11 // pred_fallthru
          _
        // Predicated region
        $region89: #{tpu_custom_call.1} parent=11 // pred_check
          %p964 = pneg %p610
        $region90: #{tpu_custom_call.1} parent=11 // pred_check_branch
          %966 = sbr.rel (%p964) target = $region92
        $region91: #{tpu_custom_call.1} parent=11 // pred_region
          _
        $region92: #{tpu_custom_call.1} parent=11 // pred_fallthru
          _
        // Predicated region
        $region93: #{tpu_custom_call.1} parent=11 // pred_check
          %p967 = pneg %p631
        $region94: #{tpu_custom_call.1} parent=11 // pred_check_branch
          %969 = sbr.rel (%p967) target = $region96
        $region95: #{tpu_custom_call.1} parent=11 // pred_region
          _
        $region96: #{tpu_custom_call.1} parent=11 // pred_fallthru
          _
        // Predicated region
        $region97: #{tpu_custom_call.1} parent=11 // pred_check
          %p970 = pneg %p652
        $region98: #{tpu_custom_call.1} parent=11 // pred_check_branch
          %972 = sbr.rel (%p970) target = $region100
        $region99: #{tpu_custom_call.1} parent=11 // pred_region
          _
        $region100: #{tpu_custom_call.1} parent=11 // pred_fallthru
          _
        // Predicated region
        $region101: #{tpu_custom_call.1} parent=11 // pred_check
          %p973 = pneg %p673
        $region102: #{tpu_custom_call.1} parent=11 // pred_check_branch
          %975 = sbr.rel (%p973) target = $region104
        $region103: #{tpu_custom_call.1} parent=11 // pred_region
          _
        $region104: #{tpu_custom_call.1} parent=11 // pred_fallthru
          _
        // Predicated region
        $region105: #{tpu_custom_call.1} parent=11 // pred_check
          %p976 = pneg %p694
        $region106: #{tpu_custom_call.1} parent=11 // pred_check_branch
          %978 = sbr.rel (%p976) target = $region108
        $region107: #{tpu_custom_call.1} parent=11 // pred_region
          _
        $region108: #{tpu_custom_call.1} parent=11 // pred_fallthru
          _
        // Predicated region
        $region109: #{tpu_custom_call.1} parent=11 // pred_check
          %p979 = pneg %p715
        $region110: #{tpu_custom_call.1} parent=11 // pred_check_branch
          %981 = sbr.rel (%p979) target = $region112
        $region111: #{tpu_custom_call.1} parent=11 // pred_region
          _
        $region112: #{tpu_custom_call.1} parent=11 // pred_fallthru
          _
        // Predicated region
        $region113: #{tpu_custom_call.1} parent=11 // pred_check
          %p982 = pneg %p736
        $region114: #{tpu_custom_call.1} parent=11 // pred_check_branch
          %984 = sbr.rel (%p982) target = $region116
        $region115: #{tpu_custom_call.1} parent=11 // pred_region
          _
        $region116: #{tpu_custom_call.1} parent=11 // pred_fallthru
          _
      $region12: #{tpu_custom_call.1} parent=5 // pred_fallthru
        _
      %p985 = scmp.lt.s32.totalorder %s86, 2
      // Predicated region
      $region117: #{tpu_custom_call.1} parent=5 // pred_check
        %p986 = pneg %p985
      $region118: #{tpu_custom_call.1} parent=5 // pred_check_branch
        %988 = sbr.rel (%p986) target = $region120
      $region119: #{tpu_custom_call.1} parent=5 // pred_region
        // Predicated region
        $region121: #{tpu_custom_call.1} parent=119 // pred_check
          %p989 = pneg %p106
        $region122: #{tpu_custom_call.1} parent=119 // pred_check_branch
          %991 = sbr.rel (%p989) target = $region124
        $region123: #{tpu_custom_call.1} parent=119 // pred_region
          %s992 = sand.u32 %s96, 1
          %s993 = scalar_lea.sflag [#allocation3], %s992
          %s994 = sand.u32 %s96, 1
          %s995 = smul.addr %s994, 8
          %s996 = scalar_lea.vmem [#allocation2], %s995
          %s998 = ssub.s32 128, 128
          %999 = vsyncadd %s993, %s998
          %s1000 = smul.addr %s86, 128
          %s1001 = scalar_lea.hbm %s1, %s1000
          %s1003 = sshll.u32 %s996, 4
          %s1004 = int_to_ptr.vmem [resolvable:$true] %s1003
          %1006 = dma.hbm_to_vmem [thread:$0]  %s1001, 128, %s1004, %s993
        $region124: #{tpu_custom_call.1} parent=119 // pred_fallthru
          _
        // Predicated region
        $region125: #{tpu_custom_call.1} parent=119 // pred_check
          %p1007 = pneg %p132
        $region126: #{tpu_custom_call.1} parent=119 // pred_check_branch
          %1009 = sbr.rel (%p1007) target = $region128
        $region127: #{tpu_custom_call.1} parent=119 // pred_region
          %s1010 = sand.u32 %s86, 1
          %s1011 = scalar_lea.sflag [#allocation6], %s1010
          %s1012 = sand.u32 %s122, 1
          %s1013 = smul.addr %s1012, 16
          %s1014 = scalar_lea.vmem [#allocation5], %s1013
          %s1016 = ssub.s32 256, 256
          %1017 = vsyncadd %s1011, %s1016
          %s1018 = smul.addr %s86, 2
          %s1019 = smul.addr %s1018, 128
          %s1020 = scalar_lea.hbm %s3, %s1019
          %s1021 = sshll.u32 %s1014, 4
          %s1022 = int_to_ptr.vmem [resolvable:$true] %s1021
          %1027 = dma.hbm_to_vmem [thread:$0]  %s1020, 256, %s1022, %s1011, 128, 128, 8
        $region128: #{tpu_custom_call.1} parent=119 // pred_fallthru
          _
        // Predicated region
        $region129: #{tpu_custom_call.1} parent=119 // pred_check
          %p1028 = pneg %p158
        $region130: #{tpu_custom_call.1} parent=119 // pred_check_branch
          %1030 = sbr.rel (%p1028) target = $region132
        $region131: #{tpu_custom_call.1} parent=119 // pred_region
          %s1031 = sand.u32 %s86, 1
          %s1032 = scalar_lea.sflag [#allocation6], %s1031
          %s1033 = sand.u32 %s148, 1
          %s1034 = smul.addr %s1033, 8
          %s1035 = scalar_lea.vmem [#allocation7], %s1034
          %s1037 = ssub.s32 128, 128
          %1038 = vsyncadd %s1032, %s1037
          %s1039 = smul.addr %s86, 128
          %s1040 = scalar_lea.hbm %s5, %s1039
          %s1042 = sshll.u32 %s1035, 4
          %s1043 = int_to_ptr.vmem [resolvable:$true] %s1042
          %1045 = dma.hbm_to_vmem [thread:$0]  %s1040, 128, %s1043, %s1032
        $region132: #{tpu_custom_call.1} parent=119 // pred_fallthru
          _
        // Predicated region
        $region133: #{tpu_custom_call.1} parent=119 // pred_check
          %p1046 = pneg %p184
        $region134: #{tpu_custom_call.1} parent=119 // pred_check_branch
          %1048 = sbr.rel (%p1046) target = $region136
        $region135: #{tpu_custom_call.1} parent=119 // pred_region
          %s1049 = sand.u32 %s86, 1
          %s1050 = scalar_lea.sflag [#allocation9], %s1049
          %s1051 = sand.u32 %s174, 1
          %s1052 = smul.addr %s1051, 16
          %s1053 = scalar_lea.vmem [#allocation8], %s1052
          %s1055 = ssub.s32 256, 256
          %1056 = vsyncadd %s1050, %s1055
          %s1057 = smul.addr %s86, 2
          %s1058 = smul.addr %s1057, 128
          %s1059 = scalar_lea.hbm %s7, %s1058
          %s1060 = sshll.u32 %s1053, 4
          %s1061 = int_to_ptr.vmem [resolvable:$true] %s1060
          %1066 = dma.hbm_to_vmem [thread:$0]  %s1059, 256, %s1061, %s1050, 128, 128, 8
        $region136: #{tpu_custom_call.1} parent=119 // pred_fallthru
          _
      $region120: #{tpu_custom_call.1} parent=5 // pred_fallthru
        _
      %p1067 = scmp.le.s32.totalorder 1, %s86
      %p1068 = scmp.lt.s32.totalorder %s86, 3
      %p1069 = pnand %p1067, %p1068
      %p1070 = pneg %p1069
      // Predicated region
      $region137: #{tpu_custom_call.1} parent=5 // pred_check
        _
      $region138: #{tpu_custom_call.1} parent=5 // pred_check_branch
        %1072 = sbr.rel (%p1069) target = $region140
      $region139: #{tpu_custom_call.1} parent=5 // pred_region
        %s1073 = ssub.s32 %s86, 1
        %s1074 = sand.u32 %s99, 1
        %s1075 = scalar_lea.sflag [#allocation3], %s1074
        %s1076 = sand.u32 %s99, 1
        %s1077 = smul.addr %s1076, 8
        %s1078 = scalar_lea.vmem [#allocation2], %s1077
        // Predicated region
        $region141: #{tpu_custom_call.1} parent=139 // pred_check
          %p1079 = pneg %p112
        $region142: #{tpu_custom_call.1} parent=139 // pred_check_branch
          %1081 = sbr.rel (%p1079) target = $region144
        $region143: #{tpu_custom_call.1} parent=139 // pred_region
          %1082 = dma.done %s1075, 128
        $region144: #{tpu_custom_call.1} parent=139 // pred_fallthru
          _
        %s1083 = sand.u32 %s91, 1
        %s1084 = scalar_lea.sflag [#allocation6], %s1083
        %s1085 = sand.u32 %s125, 1
        %s1086 = smul.addr %s1085, 16
        %s1087 = scalar_lea.vmem [#allocation5], %s1086
        // Predicated region
        $region145: #{tpu_custom_call.1} parent=139 // pred_check
          %p1088 = pneg %p138
        $region146: #{tpu_custom_call.1} parent=139 // pred_check_branch
          %1090 = sbr.rel (%p1088) target = $region148
        $region147: #{tpu_custom_call.1} parent=139 // pred_region
          %1091 = dma.done %s1084, 256
        $region148: #{tpu_custom_call.1} parent=139 // pred_fallthru
          _
        %s1092 = sand.u32 %s91, 1
        %s1093 = scalar_lea.sflag [#allocation6], %s1092
        %s1094 = sand.u32 %s151, 1
        %s1095 = smul.addr %s1094, 8
        %s1096 = scalar_lea.vmem [#allocation7], %s1095
        // Predicated region
        $region149: #{tpu_custom_call.1} parent=139 // pred_check
          %p1097 = pneg %p164
        $region150: #{tpu_custom_call.1} parent=139 // pred_check_branch
          %1099 = sbr.rel (%p1097) target = $region152
        $region151: #{tpu_custom_call.1} parent=139 // pred_region
          %1100 = dma.done %s1093, 128
        $region152: #{tpu_custom_call.1} parent=139 // pred_fallthru
          _
        %s1101 = sand.u32 %s91, 1
        %s1102 = scalar_lea.sflag [#allocation9], %s1101
        %s1103 = sand.u32 %s177, 1
        %s1104 = smul.addr %s1103, 16
        %s1105 = scalar_lea.vmem [#allocation8], %s1104
        // Predicated region
        $region153: #{tpu_custom_call.1} parent=139 // pred_check
          %p1106 = pneg %p190
        $region154: #{tpu_custom_call.1} parent=139 // pred_check_branch
          %1108 = sbr.rel (%p1106) target = $region156
        $region155: #{tpu_custom_call.1} parent=139 // pred_region
          %1109 = dma.done %s1102, 256
        $region156: #{tpu_custom_call.1} parent=139 // pred_fallthru
          _
        // Predicated region
        $region157: #{tpu_custom_call.1} parent=139 // pred_check
          %p1110 = pneg %p211
        $region158: #{tpu_custom_call.1} parent=139 // pred_check_branch
          %1112 = sbr.rel (%p1110) target = $region160
        $region159: #{tpu_custom_call.1} parent=139 // pred_region
          %1113 = dma.done [#allocation9], 1024
        $region160: #{tpu_custom_call.1} parent=139 // pred_fallthru
          _
        // Predicated region
        $region161: #{tpu_custom_call.1} parent=139 // pred_check
          %p1114 = pneg %p253
        $region162: #{tpu_custom_call.1} parent=139 // pred_check_branch
          %1116 = sbr.rel (%p1114) target = $region164
        $region163: #{tpu_custom_call.1} parent=139 // pred_region
          %1117 = dma.done [#allocation12], 1024
        $region164: #{tpu_custom_call.1} parent=139 // pred_fallthru
          _
        // Predicated region
        $region165: #{tpu_custom_call.1} parent=139 // pred_check
          %p1118 = pneg %p295
        $region166: #{tpu_custom_call.1} parent=139 // pred_check_branch
          %1120 = sbr.rel (%p1118) target = $region168
        $region167: #{tpu_custom_call.1} parent=139 // pred_region
          %1121 = dma.done [#allocation12], 1024
        $region168: #{tpu_custom_call.1} parent=139 // pred_fallthru
          _
        // Predicated region
        $region169: #{tpu_custom_call.1} parent=139 // pred_check
          %p1122 = pneg %p316
        $region170: #{tpu_custom_call.1} parent=139 // pred_check_branch
          %1124 = sbr.rel (%p1122) target = $region172
        $region171: #{tpu_custom_call.1} parent=139 // pred_region
          %1125 = dma.done [#allocation15], 16
        $region172: #{tpu_custom_call.1} parent=139 // pred_fallthru
          _
        // Predicated region
        $region173: #{tpu_custom_call.1} parent=139 // pred_check
          %p1126 = pneg %p337
        $region174: #{tpu_custom_call.1} parent=139 // pred_check_branch
          %1128 = sbr.rel (%p1126) target = $region176
        $region175: #{tpu_custom_call.1} parent=139 // pred_region
          %1129 = dma.done [#allocation15], 1024
        $region176: #{tpu_custom_call.1} parent=139 // pred_fallthru
          _
        // Predicated region
        $region177: #{tpu_custom_call.1} parent=139 // pred_check
          %p1130 = pneg %p358
        $region178: #{tpu_custom_call.1} parent=139 // pred_check_branch
          %1132 = sbr.rel (%p1130) target = $region180
        $region179: #{tpu_custom_call.1} parent=139 // pred_region
          %1133 = dma.done [#allocation18], 16
        $region180: #{tpu_custom_call.1} parent=139 // pred_fallthru
          _
        // Predicated region
        $region181: #{tpu_custom_call.1} parent=139 // pred_check
          %p1134 = pneg %p379
        $region182: #{tpu_custom_call.1} parent=139 // pred_check_branch
          %1136 = sbr.rel (%p1134) target = $region184
        $region183: #{tpu_custom_call.1} parent=139 // pred_region
          %1137 = dma.done [#allocation18], 1024
        $region184: #{tpu_custom_call.1} parent=139 // pred_fallthru
          _
        // Predicated region
        $region185: #{tpu_custom_call.1} parent=139 // pred_check
          %p1138 = pneg %p400
        $region186: #{tpu_custom_call.1} parent=139 // pred_check_branch
          %1140 = sbr.rel (%p1138) target = $region188
        $region187: #{tpu_custom_call.1} parent=139 // pred_region
          %1141 = dma.done [#allocation21], 16
        $region188: #{tpu_custom_call.1} parent=139 // pred_fallthru
          _
        // Predicated region
        $region189: #{tpu_custom_call.1} parent=139 // pred_check
          %p1142 = pneg %p421
        $region190: #{tpu_custom_call.1} parent=139 // pred_check_branch
          %1144 = sbr.rel (%p1142) target = $region192
        $region191: #{tpu_custom_call.1} parent=139 // pred_region
          %1145 = dma.done [#allocation21], 1024
        $region192: #{tpu_custom_call.1} parent=139 // pred_fallthru
          _
        // Predicated region
        $region193: #{tpu_custom_call.1} parent=139 // pred_check
          %p1146 = pneg %p442
        $region194: #{tpu_custom_call.1} parent=139 // pred_check_branch
          %1148 = sbr.rel (%p1146) target = $region196
        $region195: #{tpu_custom_call.1} parent=139 // pred_region
          %1149 = dma.done [#allocation24], 16
        $region196: #{tpu_custom_call.1} parent=139 // pred_fallthru
          _
        // Predicated region
        $region197: #{tpu_custom_call.1} parent=139 // pred_check
          %p1150 = pneg %p463
        $region198: #{tpu_custom_call.1} parent=139 // pred_check_branch
          %1152 = sbr.rel (%p1150) target = $region200
        $region199: #{tpu_custom_call.1} parent=139 // pred_region
          %1153 = dma.done [#allocation24], 1024
        $region200: #{tpu_custom_call.1} parent=139 // pred_fallthru
          _
        // Predicated region
        $region201: #{tpu_custom_call.1} parent=139 // pred_check
          %p1154 = pneg %p484
        $region202: #{tpu_custom_call.1} parent=139 // pred_check_branch
          %1156 = sbr.rel (%p1154) target = $region204
        $region203: #{tpu_custom_call.1} parent=139 // pred_region
          %1157 = dma.done [#allocation27], 16
        $region204: #{tpu_custom_call.1} parent=139 // pred_fallthru
          _
        // Predicated region
        $region205: #{tpu_custom_call.1} parent=139 // pred_check
          %p1158 = pneg %p547
        $region206: #{tpu_custom_call.1} parent=139 // pred_check_branch
          %1160 = sbr.rel (%p1158) target = $region208
        $region207: #{tpu_custom_call.1} parent=139 // pred_region
          %1161 = dma.done [#allocation27], 2048
        $region208: #{tpu_custom_call.1} parent=139 // pred_fallthru
          _
        // Predicated region
        $region209: #{tpu_custom_call.1} parent=139 // pred_check
          %p1162 = pneg %p589
        $region210: #{tpu_custom_call.1} parent=139 // pred_check_branch
          %1164 = sbr.rel (%p1162) target = $region212
        $region211: #{tpu_custom_call.1} parent=139 // pred_region
          %1165 = dma.done [#allocation30], 2048
        $region212: #{tpu_custom_call.1} parent=139 // pred_fallthru
          _
        %s1166 = sand.u32 %s99, 1
        %s1167 = scalar_lea.sflag [#allocation3], %s1166
        %s1168 = sand.u32 %s99, 1
        %s1169 = smul.addr %s1168, 8
        %s1170 = scalar_lea.vmem [#allocation2], %s1169
        %p1171 = pneg %p112
        %p1172 = pneg %p109
        %s1173 = sand.u32 %s91, 1
        %s1174 = scalar_lea.sflag [#allocation6], %s1173
        %s1175 = sand.u32 %s125, 1
        %s1176 = smul.addr %s1175, 16
        %s1177 = scalar_lea.vmem [#allocation5], %s1176
        %p1178 = pneg %p138
        %p1179 = pneg %p135
        %s1180 = sand.u32 %s91, 1
        %s1181 = scalar_lea.sflag [#allocation6], %s1180
        %s1182 = sand.u32 %s151, 1
        %s1183 = smul.addr %s1182, 8
        %s1184 = scalar_lea.vmem [#allocation7], %s1183
        %p1185 = pneg %p164
        %p1186 = pneg %p161
        %s1187 = sand.u32 %s91, 1
        %s1188 = scalar_lea.sflag [#allocation9], %s1187
        %s1189 = sand.u32 %s177, 1
        %s1190 = smul.addr %s1189, 16
        %s1191 = scalar_lea.vmem [#allocation8], %s1190
        %p1192 = pneg %p190
        %p1193 = pneg %p187
        %p1194 = pneg %p211
        %p1195 = pneg %p208
        %p1196 = pneg %p232
        %p1197 = pneg %p229
        %p1198 = pneg %p253
        %p1199 = pneg %p250
        %p1200 = pneg %p274
        %p1201 = pneg %p271
        %p1202 = pneg %p295
        %p1203 = pneg %p292
        %p1204 = pneg %p316
        %p1205 = pneg %p313
        %p1206 = pneg %p337
        %p1207 = pneg %p334
        %p1208 = pneg %p358
        %p1209 = pneg %p355
        %p1210 = pneg %p379
        %p1211 = pneg %p376
        %p1212 = pneg %p400
        %p1213 = pneg %p397
        %p1214 = pneg %p421
        %p1215 = pneg %p418
        %p1216 = pneg %p442
        %p1217 = pneg %p439
        %p1218 = pneg %p463
        %p1219 = pneg %p460
        %p1220 = pneg %p484
        %p1221 = pneg %p481
        %p1222 = pneg %p505
        %p1223 = pneg %p502
        %p1224 = pneg %p526
        %p1225 = pneg %p523
        %p1226 = pneg %p547
        %p1227 = pneg %p544
        %p1228 = pneg %p568
        %p1229 = pneg %p565
        %p1230 = pneg %p589
        %p1231 = pneg %p586
        %p1232 = pneg %p610
        %p1233 = pneg %p607
        %p1234 = pneg %p631
        %p1235 = pneg %p628
        %p1236 = pneg %p652
        %p1237 = pneg %p649
        %p1238 = pneg %p673
        %p1239 = pneg %p670
        %p1240 = pneg %p694
        %p1241 = pneg %p691
        %p1242 = pneg %p715
        %p1243 = pneg %p712
        %p1244 = pneg %p736
        %p1245 = pneg %p733
        %p1246 = pneg %p762
        %p1247 = pneg %p759
        %s1248 = sand.u32 %s749, 1
        %s1249 = scalar_lea.sflag [#allocation4], %s1248
        %s1250 = sand.u32 %s749, 1
        %s1251 = smul.addr %s1250, 8
        %s1252 = scalar_lea.vmem [#allocation31], %s1251
        %v1254 = vld [vmem:[%s1078] sm:$0xff]
        %v1255 = vld [vmem:[%s1087] sm:$0xff]
        %v1256 = vld [vmem:[%s1087 + $0x8] sm:$0xff]
        %v1257 = vld [vmem:[%s1096] sm:$0xff]
        %v1258 = vld [vmem:[%s1105] sm:$0xff]
        %v1259 = vld [vmem:[%s1105 + $0x8] sm:$0xff]
        %v1260 = vadd.f32 %v1254, %v1257
        %v1261 = vld [vmem:[#allocation10] sm:$0xf]
        %v1262 = vld [vmem:[#allocation10 + $0x4] sm:$0xf]
        %v1263 = vld [vmem:[#allocation10 + $0x8] sm:$0xf]
        %v1264 = vld [vmem:[#allocation10 + $0xc] sm:$0xf]
        %v1265 = vld [vmem:[#allocation10 + $0x10] sm:$0xf]
        %v1266 = vld [vmem:[#allocation10 + $0x14] sm:$0xf]
        %v1267 = vld [vmem:[#allocation10 + $0x18] sm:$0xf]
        %v1268 = vld [vmem:[#allocation10 + $0x1c] sm:$0xf]
        %v1269 = vld [vmem:[#allocation10 + $0x20] sm:$0xf]
        %v1270 = vld [vmem:[#allocation10 + $0x24] sm:$0xf]
        %v1271 = vld [vmem:[#allocation10 + $0x28] sm:$0xf]
        %v1272 = vld [vmem:[#allocation10 + $0x2c] sm:$0xf]
        %v1273 = vld [vmem:[#allocation10 + $0x30] sm:$0xf]
        %v1274 = vld [vmem:[#allocation10 + $0x34] sm:$0xf]
        %v1275 = vld [vmem:[#allocation10 + $0x38] sm:$0xf]
        %v1276 = vld [vmem:[#allocation10 + $0x3c] sm:$0xf]
        %v1277 = vld [vmem:[%s11] sm:$0x1]
        %v1278 = vld [vmem:[#allocation11] sm:$0xf]
        %v1279 = vld [vmem:[#allocation11 + $0x4] sm:$0xf]
        %v1280 = vld [vmem:[#allocation11 + $0x8] sm:$0xf]
        %v1281 = vld [vmem:[#allocation11 + $0xc] sm:$0xf]
        %v1282 = vld [vmem:[#allocation11 + $0x10] sm:$0xf]
        %v1283 = vld [vmem:[#allocation11 + $0x14] sm:$0xf]
        %v1284 = vld [vmem:[#allocation11 + $0x18] sm:$0xf]
        %v1285 = vld [vmem:[#allocation11 + $0x1c] sm:$0xf]
        %v1286 = vld [vmem:[#allocation11 + $0x20] sm:$0xf]
        %v1287 = vld [vmem:[#allocation11 + $0x24] sm:$0xf]
        %v1288 = vld [vmem:[#allocation11 + $0x28] sm:$0xf]
        %v1289 = vld [vmem:[#allocation11 + $0x2c] sm:$0xf]
        %v1290 = vld [vmem:[#allocation11 + $0x30] sm:$0xf]
        %v1291 = vld [vmem:[#allocation11 + $0x34] sm:$0xf]
        %v1292 = vld [vmem:[#allocation11 + $0x38] sm:$0xf]
        %v1293 = vld [vmem:[#allocation11 + $0x3c] sm:$0xf]
        %v1294 = vld [vmem:[%s15] sm:$0x1]
        %v1295 = vld [vmem:[#allocation13] sm:$0xf]
        %v1296 = vld [vmem:[#allocation13 + $0x4] sm:$0xf]
        %v1297 = vld [vmem:[#allocation13 + $0x8] sm:$0xf]
        %v1298 = vld [vmem:[#allocation13 + $0xc] sm:$0xf]
        %v1299 = vld [vmem:[#allocation13 + $0x10] sm:$0xf]
        %v1300 = vld [vmem:[#allocation13 + $0x14] sm:$0xf]
        %v1301 = vld [vmem:[#allocation13 + $0x18] sm:$0xf]
        %v1302 = vld [vmem:[#allocation13 + $0x1c] sm:$0xf]
        %v1303 = vld [vmem:[#allocation13 + $0x20] sm:$0xf]
        %v1304 = vld [vmem:[#allocation13 + $0x24] sm:$0xf]
        %v1305 = vld [vmem:[#allocation13 + $0x28] sm:$0xf]
        %v1306 = vld [vmem:[#allocation13 + $0x2c] sm:$0xf]
        %v1307 = vld [vmem:[#allocation13 + $0x30] sm:$0xf]
        %v1308 = vld [vmem:[#allocation13 + $0x34] sm:$0xf]
        %v1309 = vld [vmem:[#allocation13 + $0x38] sm:$0xf]
        %v1310 = vld [vmem:[#allocation13 + $0x3c] sm:$0xf]
        %v1311 = vld [vmem:[#allocation14] sm:$0x1]
        %v1312 = vld [vmem:[#allocation16] sm:$0xf]
        %v1313 = vld [vmem:[#allocation16 + $0x4] sm:$0xf]
        %v1314 = vld [vmem:[#allocation16 + $0x8] sm:$0xf]
        %v1315 = vld [vmem:[#allocation16 + $0xc] sm:$0xf]
        %v1316 = vld [vmem:[#allocation16 + $0x10] sm:$0xf]
        %v1317 = vld [vmem:[#allocation16 + $0x14] sm:$0xf]
        %v1318 = vld [vmem:[#allocation16 + $0x18] sm:$0xf]
        %v1319 = vld [vmem:[#allocation16 + $0x1c] sm:$0xf]
        %v1320 = vld [vmem:[#allocation16 + $0x20] sm:$0xf]
        %v1321 = vld [vmem:[#allocation16 + $0x24] sm:$0xf]
        %v1322 = vld [vmem:[#allocation16 + $0x28] sm:$0xf]
        %v1323 = vld [vmem:[#allocation16 + $0x2c] sm:$0xf]
        %v1324 = vld [vmem:[#allocation16 + $0x30] sm:$0xf]
        %v1325 = vld [vmem:[#allocation16 + $0x34] sm:$0xf]
        %v1326 = vld [vmem:[#allocation16 + $0x38] sm:$0xf]
        %v1327 = vld [vmem:[#allocation16 + $0x3c] sm:$0xf]
        %v1328 = vld [vmem:[#allocation17] sm:$0x1]
        %v1329 = vpack.c.bf16 %v1260, %v1260
        %v1331 = vlaneseq
        %v1332 = vshrl.u32 %v1331, 7
        %v1333 = vsub.s32 0, %v1332
        %v1334 = vrot.slane %v1277, %v1333
        %v1352 = vunpack.c.l.b16 %v1261
        %v1353 = vunpack.c.l.b16 %v1262
        %v1354 = vunpack.c.l.b16 %v1263
        %v1355 = vunpack.c.l.b16 %v1264
        %v1356 = vunpack.c.l.b16 %v1265
        %v1357 = vunpack.c.l.b16 %v1266
        %v1358 = vunpack.c.l.b16 %v1267
        %v1359 = vunpack.c.l.b16 %v1268
        %v1360 = vunpack.c.l.b16 %v1269
        %v1361 = vunpack.c.l.b16 %v1270
        %v1362 = vunpack.c.l.b16 %v1271
        %v1363 = vunpack.c.l.b16 %v1272
        %v1364 = vunpack.c.l.b16 %v1273
        %v1365 = vunpack.c.l.b16 %v1274
        %v1366 = vunpack.c.l.b16 %v1275
        %v1367 = vunpack.c.l.b16 %v1276
        %v1368 = vpack.c.b16 %v1353, %v1352
        %v1369 = vpack.c.b16 %v1355, %v1354
        %v1370 = vpack.c.b16 %v1357, %v1356
        %v1371 = vpack.c.b16 %v1359, %v1358
        %v1372 = vpack.c.b16 %v1361, %v1360
        %v1373 = vpack.c.b16 %v1363, %v1362
        %v1374 = vpack.c.b16 %v1365, %v1364
        %v1375 = vpack.c.b16 %v1367, %v1366
        %1384 = vmatprep.subr.bf16.mxu0 0
        %1385 = vmatpush1.bf16.msra.mxu0 %v1368
        %1386 = vmatprep.subr.bf16.mxu0 0
        %1387 = vmatpush1.bf16.msra.mxu0 %v1369
        %1388 = vmatprep.subr.bf16.mxu0 0
        %1389 = vmatpush1.bf16.msra.mxu0 %v1370
        %1390 = vmatprep.subr.bf16.mxu0 0
        %1391 = vmatpush1.bf16.msra.mxu0 %v1371
        %1392 = vmatprep.subr.bf16.mxu0 0
        %1393 = vmatpush1.bf16.msra.mxu0 %v1372
        %1394 = vmatprep.subr.bf16.mxu0 0
        %1395 = vmatpush1.bf16.msra.mxu0 %v1373
        %1396 = vmatprep.subr.bf16.mxu0 0
        %1397 = vmatpush1.bf16.msra.mxu0 %v1374
        %1398 = vmatprep.subr.bf16.mxu0 0
        %1399 = vmatpush1.bf16.msra.mxu0 %v1375
        %1400 = vmatprep.subr.bf16.mxu0 0
        %1401 = vmatpush1.bf16.msra.mxu0 0
        %1402 = vmatprep.subr.bf16.mxu0 0
        %1403 = vmatpush1.bf16.msra.mxu0 0
        %1404 = vmatprep.subr.bf16.mxu0 0
        %1405 = vmatpush1.bf16.msra.mxu0 0
        %1406 = vmatprep.subr.bf16.mxu0 0
        %1407 = vmatpush1.bf16.msra.mxu0 0
        %1408 = vmatprep.subr.bf16.mxu0 0
        %1409 = vmatpush1.bf16.msra.mxu0 0
        %1410 = vmatprep.subr.bf16.mxu0 0
        %1411 = vmatpush1.bf16.msra.mxu0 0
        %1412 = vmatprep.subr.bf16.mxu0 0
        %1413 = vmatpush1.bf16.msra.mxu0 0
        %1414 = vmatprep.subr.bf16.mxu0 0
        %1415 = vmatpush1.bf16.msra.mxu0 0
        %1416 = vmatprep.mubr.bf16.mxu0 0
        %1417 = vmatmul.mubr.bf16.gmra.mrb[0].mxu0 %v1329
        %v1418 = vpop.f32.mrb[0].mxu0
        %v1419 = vadd.f32 %v1334, %v1418
        %v1420 = vpop.f32.mrb[0].mxu0
        %v1421 = vpop.f32.mrb[0].mxu0
        %v1422 = vpop.f32.mrb[0].mxu0
        %1423 = vdwg.mxu0
        %v1425 = vlaneseq
        %v1426 = vshrl.u32 %v1425, 7
        %v1427 = vsub.s32 0, %v1426
        %v1428 = vrot.slane %v1294, %v1427
        %v1446 = vunpack.c.l.b16 %v1278
        %v1447 = vunpack.c.l.b16 %v1279
        %v1448 = vunpack.c.l.b16 %v1280
        %v1449 = vunpack.c.l.b16 %v1281
        %v1450 = vunpack.c.l.b16 %v1282
        %v1451 = vunpack.c.l.b16 %v1283
        %v1452 = vunpack.c.l.b16 %v1284
        %v1453 = vunpack.c.l.b16 %v1285
        %v1454 = vunpack.c.l.b16 %v1286
        %v1455 = vunpack.c.l.b16 %v1287
        %v1456 = vunpack.c.l.b16 %v1288
        %v1457 = vunpack.c.l.b16 %v1289
        %v1458 = vunpack.c.l.b16 %v1290
        %v1459 = vunpack.c.l.b16 %v1291
        %v1460 = vunpack.c.l.b16 %v1292
        %v1461 = vunpack.c.l.b16 %v1293
        %v1462 = vpack.c.b16 %v1447, %v1446
        %v1463 = vpack.c.b16 %v1449, %v1448
        %v1464 = vpack.c.b16 %v1451, %v1450
        %v1465 = vpack.c.b16 %v1453, %v1452
        %v1466 = vpack.c.b16 %v1455, %v1454
        %v1467 = vpack.c.b16 %v1457, %v1456
        %v1468 = vpack.c.b16 %v1459, %v1458
        %v1469 = vpack.c.b16 %v1461, %v1460
        %1478 = vmatprep.subr.bf16.mxu0 0
        %1479 = vmatpush1.bf16.msra.mxu0 %v1462
        %1480 = vmatprep.subr.bf16.mxu0 0
        %1481 = vmatpush1.bf16.msra.mxu0 %v1463
        %1482 = vmatprep.subr.bf16.mxu0 0
        %1483 = vmatpush1.bf16.msra.mxu0 %v1464
        %1484 = vmatprep.subr.bf16.mxu0 0
        %1485 = vmatpush1.bf16.msra.mxu0 %v1465
        %1486 = vmatprep.subr.bf16.mxu0 0
        %1487 = vmatpush1.bf16.msra.mxu0 %v1466
        %1488 = vmatprep.subr.bf16.mxu0 0
        %1489 = vmatpush1.bf16.msra.mxu0 %v1467
        %1490 = vmatprep.subr.bf16.mxu0 0
        %1491 = vmatpush1.bf16.msra.mxu0 %v1468
        %1492 = vmatprep.subr.bf16.mxu0 0
        %1493 = vmatpush1.bf16.msra.mxu0 %v1469
        %1494 = vmatprep.subr.bf16.mxu0 0
        %1495 = vmatpush1.bf16.msra.mxu0 0
        %1496 = vmatprep.subr.bf16.mxu0 0
        %1497 = vmatpush1.bf16.msra.mxu0 0
        %1498 = vmatprep.subr.bf16.mxu0 0
        %1499 = vmatpush1.bf16.msra.mxu0 0
        %1500 = vmatprep.subr.bf16.mxu0 0
        %1501 = vmatpush1.bf16.msra.mxu0 0
        %1502 = vmatprep.subr.bf16.mxu0 0
        %1503 = vmatpush1.bf16.msra.mxu0 0
        %1504 = vmatprep.subr.bf16.mxu0 0
        %1505 = vmatpush1.bf16.msra.mxu0 0
        %1506 = vmatprep.subr.bf16.mxu0 0
        %1507 = vmatpush1.bf16.msra.mxu0 0
        %1508 = vmatprep.subr.bf16.mxu0 0
        %1509 = vmatpush1.bf16.msra.mxu0 0
        %1510 = vmatprep.mubr.bf16.mxu0 0
        %1511 = vmatmul.mubr.bf16.gmra.mrb[0].mxu0 %v1329
        %v1512 = vpop.f32.mrb[0].mxu0
        %v1513 = vadd.f32 %v1428, %v1512
        %v1514 = vpop.f32.mrb[0].mxu0
        %v1515 = vpop.f32.mrb[0].mxu0
        %v1516 = vpop.f32.mrb[0].mxu0
        %1517 = vdwg.mxu0
        %v1518 = vpack.c.bf16 %v1254, %v1254
        %v1520 = vlaneseq
        %v1521 = vshrl.u32 %v1520, 7
        %v1522 = vsub.s32 0, %v1521
        %v1523 = vrot.slane %v1311, %v1522
        %v1541 = vunpack.c.l.b16 %v1295
        %v1542 = vunpack.c.l.b16 %v1296
        %v1543 = vunpack.c.l.b16 %v1297
        %v1544 = vunpack.c.l.b16 %v1298
        %v1545 = vunpack.c.l.b16 %v1299
        %v1546 = vunpack.c.l.b16 %v1300
        %v1547 = vunpack.c.l.b16 %v1301
        %v1548 = vunpack.c.l.b16 %v1302
        %v1549 = vunpack.c.l.b16 %v1303
        %v1550 = vunpack.c.l.b16 %v1304
        %v1551 = vunpack.c.l.b16 %v1305
        %v1552 = vunpack.c.l.b16 %v1306
        %v1553 = vunpack.c.l.b16 %v1307
        %v1554 = vunpack.c.l.b16 %v1308
        %v1555 = vunpack.c.l.b16 %v1309
        %v1556 = vunpack.c.l.b16 %v1310
        %v1557 = vpack.c.b16 %v1542, %v1541
        %v1558 = vpack.c.b16 %v1544, %v1543
        %v1559 = vpack.c.b16 %v1546, %v1545
        %v1560 = vpack.c.b16 %v1548, %v1547
        %v1561 = vpack.c.b16 %v1550, %v1549
        %v1562 = vpack.c.b16 %v1552, %v1551
        %v1563 = vpack.c.b16 %v1554, %v1553
        %v1564 = vpack.c.b16 %v1556, %v1555
        %1573 = vmatprep.subr.bf16.mxu0 0
        %1574 = vmatpush1.bf16.msra.mxu0 %v1557
        %1575 = vmatprep.subr.bf16.mxu0 0
        %1576 = vmatpush1.bf16.msra.mxu0 %v1558
        %1577 = vmatprep.subr.bf16.mxu0 0
        %1578 = vmatpush1.bf16.msra.mxu0 %v1559
        %1579 = vmatprep.subr.bf16.mxu0 0
        %1580 = vmatpush1.bf16.msra.mxu0 %v1560
        %1581 = vmatprep.subr.bf16.mxu0 0
        %1582 = vmatpush1.bf16.msra.mxu0 %v1561
        %1583 = vmatprep.subr.bf16.mxu0 0
        %1584 = vmatpush1.bf16.msra.mxu0 %v1562
        %1585 = vmatprep.subr.bf16.mxu0 0
        %1586 = vmatpush1.bf16.msra.mxu0 %v1563
        %1587 = vmatprep.subr.bf16.mxu0 0
        %1588 = vmatpush1.bf16.msra.mxu0 %v1564
        %1589 = vmatprep.subr.bf16.mxu0 0
        %1590 = vmatpush1.bf16.msra.mxu0 0
        %1591 = vmatprep.subr.bf16.mxu0 0
        %1592 = vmatpush1.bf16.msra.mxu0 0
        %1593 = vmatprep.subr.bf16.mxu0 0
        %1594 = vmatpush1.bf16.msra.mxu0 0
        %1595 = vmatprep.subr.bf16.mxu0 0
        %1596 = vmatpush1.bf16.msra.mxu0 0
        %1597 = vmatprep.subr.bf16.mxu0 0
        %1598 = vmatpush1.bf16.msra.mxu0 0
        %1599 = vmatprep.subr.bf16.mxu0 0
        %1600 = vmatpush1.bf16.msra.mxu0 0
        %1601 = vmatprep.subr.bf16.mxu0 0
        %1602 = vmatpush1.bf16.msra.mxu0 0
        %1603 = vmatprep.subr.bf16.mxu0 0
        %1604 = vmatpush1.bf16.msra.mxu0 0
        %1605 = vmatprep.mubr.bf16.mxu0 0
        %1606 = vmatmul.mubr.bf16.gmra.mrb[0].mxu0 %v1518
        %v1607 = vpop.f32.mrb[0].mxu0
        %v1608 = vadd.f32 %v1523, %v1607
        %v1609 = vpop.f32.mrb[0].mxu0
        %v1610 = vpop.f32.mrb[0].mxu0
        %v1611 = vpop.f32.mrb[0].mxu0
        %1612 = vdwg.mxu0
        %v1613 = vpack.c.bf16 %v1419, %v1419
        %v1614 = vpack.c.bf16 %v1513, %v1513
        %v1615 = vpack.c.bf16 %v1608, %v1608
        %vm1616 = vcmask 130048
        %v1618 = vsel %vm1616, %v1613, 0
        %v1621 = vsel %vm1616, %v1614, 0
        %1623 = vmatprep.subr.bf16.mxu0 0
        %1624 = vmatpush1.bf16.xpose.msra.mxu0 %v1621
        %1625 = vmatprep.subr.bf16.mxu0 0
        %1626 = vmatpush1.bf16.xpose.msra.mxu0 0
        %1627 = vmatprep.subr.bf16.mxu0 0
        %1628 = vmatpush1.bf16.xpose.msra.mxu0 0
        %1629 = vmatprep.subr.bf16.mxu0 0
        %1630 = vmatpush1.bf16.xpose.msra.mxu0 0
        %1631 = vmatprep.subr.bf16.mxu0 0
        %1632 = vmatpush1.bf16.xpose.msra.mxu0 0
        %1633 = vmatprep.subr.bf16.mxu0 0
        %1634 = vmatpush1.bf16.xpose.msra.mxu0 0
        %1635 = vmatprep.subr.bf16.mxu0 0
        %1636 = vmatpush1.bf16.xpose.msra.mxu0 0
        %1637 = vmatprep.subr.bf16.mxu0 0
        %1638 = vmatpush1.bf16.xpose.msra.mxu0 0
        %1639 = vmatprep.subr.bf16.mxu0 0
        %1640 = vmatpush1.bf16.xpose.msra.mxu0 0
        %1641 = vmatprep.subr.bf16.mxu0 0
        %1642 = vmatpush1.bf16.xpose.msra.mxu0 0
        %1643 = vmatprep.subr.bf16.mxu0 0
        %1644 = vmatpush1.bf16.xpose.msra.mxu0 0
        %1645 = vmatprep.subr.bf16.mxu0 0
        %1646 = vmatpush1.bf16.xpose.msra.mxu0 0
        %1647 = vmatprep.subr.bf16.mxu0 0
        %1648 = vmatpush1.bf16.xpose.msra.mxu0 0
        %1649 = vmatprep.subr.bf16.mxu0 0
        %1650 = vmatpush1.bf16.xpose.msra.mxu0 0
        %1651 = vmatprep.subr.bf16.mxu0 0
        %1652 = vmatpush1.bf16.xpose.msra.mxu0 0
        %1653 = vmatprep.subr.bf16.mxu0 0
        %1654 = vmatpush1.bf16.xpose.msra.mxu0 0
        %1655 = vmatprep.mubr.bf16.mxu0 0
        %1656 = vmatmul.mubr.bf16.gmra.mrb[0].mxu0 %v1618
        %v1657 = vpop.f32.mrb[0].mxu0
        %v1658 = vadd.f32 0.0, %v1657
        %v1659 = vpop.f32.mrb[0].mxu0
        %v1660 = vpop.f32.mrb[0].mxu0
        %v1661 = vpop.f32.mrb[0].mxu0
        %1662 = vdwg.mxu0
        %vm1663 = vcmask 64512
        %v1664 = vsel %vm1663, %v1658, -inf
        %1665 = vmax.xlane.f32.xlu0 %v1664
        %v1666 = vpop.xlane.xlu0 %1665
        %v1667 = vsub.f32 %v1658, %v1666
        %v1668 = vmul.f32 %v1667, 1.442695
        %v1669 = vpow.pop %v1668
        %v1670 = vsel %vm1663, %v1669, 0.0
        %1671 = vadd.xlane.f32.xlu0 %v1670
        %v1672 = vpop.xlane.xlu0 %1671
        %v1673 = vrcp.pop %v1672
        %v1674 = vmul.f32 %v1669, %v1673
        %v1675 = vpack.c.bf16 %v1674, %v1674
        %v1677 = vsel %vm1663, %v1675, 0
        %vm1679 = vcmask 1043456
        %v1681 = vsel %vm1679, %v1615, 0
        %1683 = vmatprep.subr.bf16.mxu0 0
        %1684 = vmatpush1.bf16.msra.mxu0 %v1681
        %1685 = vmatprep.subr.bf16.mxu0 0
        %1686 = vmatpush1.bf16.msra.mxu0 0
        %1687 = vmatprep.subr.bf16.mxu0 0
        %1688 = vmatpush1.bf16.msra.mxu0 0
        %1689 = vmatprep.subr.bf16.mxu0 0
        %1690 = vmatpush1.bf16.msra.mxu0 0
        %1691 = vmatprep.subr.bf16.mxu0 0
        %1692 = vmatpush1.bf16.msra.mxu0 0
        %1693 = vmatprep.subr.bf16.mxu0 0
        %1694 = vmatpush1.bf16.msra.mxu0 0
        %1695 = vmatprep.subr.bf16.mxu0 0
        %1696 = vmatpush1.bf16.msra.mxu0 0
        %1697 = vmatprep.subr.bf16.mxu0 0
        %1698 = vmatpush1.bf16.msra.mxu0 0
        %1699 = vmatprep.subr.bf16.mxu0 0
        %1700 = vmatpush1.bf16.msra.mxu0 0
        %1701 = vmatprep.subr.bf16.mxu0 0
        %1702 = vmatpush1.bf16.msra.mxu0 0
        %1703 = vmatprep.subr.bf16.mxu0 0
        %1704 = vmatpush1.bf16.msra.mxu0 0
        %1705 = vmatprep.subr.bf16.mxu0 0
        %1706 = vmatpush1.bf16.msra.mxu0 0
        %1707 = vmatprep.subr.bf16.mxu0 0
        %1708 = vmatpush1.bf16.msra.mxu0 0
        %1709 = vmatprep.subr.bf16.mxu0 0
        %1710 = vmatpush1.bf16.msra.mxu0 0
        %1711 = vmatprep.subr.bf16.mxu0 0
        %1712 = vmatpush1.bf16.msra.mxu0 0
        %1713 = vmatprep.subr.bf16.mxu0 0
        %1714 = vmatpush1.bf16.msra.mxu0 0
        %1715 = vmatprep.mubr.bf16.mxu0 0
        %1716 = vmatmul.mubr.bf16.gmra.mrb[0].mxu0 %v1677
        %v1717 = vpop.f32.mrb[0].mxu0
        %v1718 = vadd.f32 0.0, %v1717
        %v1719 = vpop.f32.mrb[0].mxu0
        %v1720 = vpop.f32.mrb[0].mxu0
        %v1721 = vpop.f32.mrb[0].mxu0
        %1722 = vdwg.mxu0
        %1724 = vrot.lane.b32.xlu0 %v1613, 112
        %v1725 = vpop.permute.xlu0 %1724
        %1727 = vrot.lane.b32.xlu0 %v1614, 112
        %v1728 = vpop.permute.xlu0 %1727
        %v1730 = vsel %vm1616, %v1725, 0
        %v1733 = vsel %vm1616, %v1728, 0
        %1735 = vmatprep.subr.bf16.mxu0 0
        %1736 = vmatpush1.bf16.xpose.msra.mxu0 %v1733
        %1737 = vmatprep.subr.bf16.mxu0 0
        %1738 = vmatpush1.bf16.xpose.msra.mxu0 0
        %1739 = vmatprep.subr.bf16.mxu0 0
        %1740 = vmatpush1.bf16.xpose.msra.mxu0 0
        %1741 = vmatprep.subr.bf16.mxu0 0
        %1742 = vmatpush1.bf16.xpose.msra.mxu0 0
        %1743 = vmatprep.subr.bf16.mxu0 0
        %1744 = vmatpush1.bf16.xpose.msra.mxu0 0
        %1745 = vmatprep.subr.bf16.mxu0 0
        %1746 = vmatpush1.bf16.xpose.msra.mxu0 0
        %1747 = vmatprep.subr.bf16.mxu0 0
        %1748 = vmatpush1.bf16.xpose.msra.mxu0 0
        %1749 = vmatprep.subr.bf16.mxu0 0
        %1750 = vmatpush1.bf16.xpose.msra.mxu0 0
        %1751 = vmatprep.subr.bf16.mxu0 0
        %1752 = vmatpush1.bf16.xpose.msra.mxu0 0
        %1753 = vmatprep.subr.bf16.mxu0 0
        %1754 = vmatpush1.bf16.xpose.msra.mxu0 0
        %1755 = vmatprep.subr.bf16.mxu0 0
        %1756 = vmatpush1.bf16.xpose.msra.mxu0 0
        %1757 = vmatprep.subr.bf16.mxu0 0
        %1758 = vmatpush1.bf16.xpose.msra.mxu0 0
        %1759 = vmatprep.subr.bf16.mxu0 0
        %1760 = vmatpush1.bf16.xpose.msra.mxu0 0
        %1761 = vmatprep.subr.bf16.mxu0 0
        %1762 = vmatpush1.bf16.xpose.msra.mxu0 0
        %1763 = vmatprep.subr.bf16.mxu0 0
        %1764 = vmatpush1.bf16.xpose.msra.mxu0 0
        %1765 = vmatprep.subr.bf16.mxu0 0
        %1766 = vmatpush1.bf16.xpose.msra.mxu0 0
        %1767 = vmatprep.mubr.bf16.mxu0 0
        %1768 = vmatmul.mubr.bf16.gmra.mrb[0].mxu0 %v1730
        %v1769 = vpop.f32.mrb[0].mxu0
        %v1770 = vadd.f32 0.0, %v1769
        %v1771 = vpop.f32.mrb[0].mxu0
        %v1772 = vpop.f32.mrb[0].mxu0
        %v1773 = vpop.f32.mrb[0].mxu0
        %1774 = vdwg.mxu0
        %v1775 = vsel %vm1663, %v1770, -inf
        %1776 = vmax.xlane.f32.xlu0 %v1775
        %v1777 = vpop.xlane.xlu0 %1776
        %v1778 = vsub.f32 %v1770, %v1777
        %v1779 = vmul.f32 %v1778, 1.442695
        %v1780 = vpow.pop %v1779
        %v1781 = vsel %vm1663, %v1780, 0.0
        %1782 = vadd.xlane.f32.xlu0 %v1781
        %v1783 = vpop.xlane.xlu0 %1782
        %v1784 = vrcp.pop %v1783
        %v1785 = vmul.f32 %v1780, %v1784
        %v1786 = vpack.c.bf16 %v1785, %v1785
        %1788 = vrot.lane.b32.xlu0 %v1615, 112
        %v1789 = vpop.permute.xlu0 %1788
        %v1791 = vsel %vm1663, %v1786, 0
        %v1794 = vsel %vm1679, %v1789, 0
        %1796 = vmatprep.subr.bf16.mxu0 0
        %1797 = vmatpush1.bf16.msra.mxu0 %v1794
        %1798 = vmatprep.subr.bf16.mxu0 0
        %1799 = vmatpush1.bf16.msra.mxu0 0
        %1800 = vmatprep.subr.bf16.mxu0 0
        %1801 = vmatpush1.bf16.msra.mxu0 0
        %1802 = vmatprep.subr.bf16.mxu0 0
        %1803 = vmatpush1.bf16.msra.mxu0 0
        %1804 = vmatprep.subr.bf16.mxu0 0
        %1805 = vmatpush1.bf16.msra.mxu0 0
        %1806 = vmatprep.subr.bf16.mxu0 0
        %1807 = vmatpush1.bf16.msra.mxu0 0
        %1808 = vmatprep.subr.bf16.mxu0 0
        %1809 = vmatpush1.bf16.msra.mxu0 0
        %1810 = vmatprep.subr.bf16.mxu0 0
        %1811 = vmatpush1.bf16.msra.mxu0 0
        %1812 = vmatprep.subr.bf16.mxu0 0
        %1813 = vmatpush1.bf16.msra.mxu0 0
        %1814 = vmatprep.subr.bf16.mxu0 0
        %1815 = vmatpush1.bf16.msra.mxu0 0
        %1816 = vmatprep.subr.bf16.mxu0 0
        %1817 = vmatpush1.bf16.msra.mxu0 0
        %1818 = vmatprep.subr.bf16.mxu0 0
        %1819 = vmatpush1.bf16.msra.mxu0 0
        %1820 = vmatprep.subr.bf16.mxu0 0
        %1821 = vmatpush1.bf16.msra.mxu0 0
        %1822 = vmatprep.subr.bf16.mxu0 0
        %1823 = vmatpush1.bf16.msra.mxu0 0
        %1824 = vmatprep.subr.bf16.mxu0 0
        %1825 = vmatpush1.bf16.msra.mxu0 0
        %1826 = vmatprep.subr.bf16.mxu0 0
        %1827 = vmatpush1.bf16.msra.mxu0 0
        %1828 = vmatprep.mubr.bf16.mxu0 0
        %1829 = vmatmul.mubr.bf16.gmra.mrb[0].mxu0 %v1791
        %v1830 = vpop.f32.mrb[0].mxu0
        %v1831 = vadd.f32 0.0, %v1830
        %v1832 = vpop.f32.mrb[0].mxu0
        %v1833 = vpop.f32.mrb[0].mxu0
        %v1834 = vpop.f32.mrb[0].mxu0
        %1835 = vdwg.mxu0
        %1836 = vrot.lane.b32.xlu0 %v1613, 96
        %v1837 = vpop.permute.xlu0 %1836
        %1838 = vrot.lane.b32.xlu0 %v1614, 96
        %v1839 = vpop.permute.xlu0 %1838
        %v1841 = vsel %vm1616, %v1837, 0
        %v1844 = vsel %vm1616, %v1839, 0
        %1846 = vmatprep.subr.bf16.mxu0 0
        %1847 = vmatpush1.bf16.xpose.msra.mxu0 %v1844
        %1848 = vmatprep.subr.bf16.mxu0 0
        %1849 = vmatpush1.bf16.xpose.msra.mxu0 0
        %1850 = vmatprep.subr.bf16.mxu0 0
        %1851 = vmatpush1.bf16.xpose.msra.mxu0 0
        %1852 = vmatprep.subr.bf16.mxu0 0
        %1853 = vmatpush1.bf16.xpose.msra.mxu0 0
        %1854 = vmatprep.subr.bf16.mxu0 0
        %1855 = vmatpush1.bf16.xpose.msra.mxu0 0
        %1856 = vmatprep.subr.bf16.mxu0 0
        %1857 = vmatpush1.bf16.xpose.msra.mxu0 0
        %1858 = vmatprep.subr.bf16.mxu0 0
        %1859 = vmatpush1.bf16.xpose.msra.mxu0 0
        %1860 = vmatprep.subr.bf16.mxu0 0
        %1861 = vmatpush1.bf16.xpose.msra.mxu0 0
        %1862 = vmatprep.subr.bf16.mxu0 0
        %1863 = vmatpush1.bf16.xpose.msra.mxu0 0
        %1864 = vmatprep.subr.bf16.mxu0 0
        %1865 = vmatpush1.bf16.xpose.msra.mxu0 0
        %1866 = vmatprep.subr.bf16.mxu0 0
        %1867 = vmatpush1.bf16.xpose.msra.mxu0 0
        %1868 = vmatprep.subr.bf16.mxu0 0
        %1869 = vmatpush1.bf16.xpose.msra.mxu0 0
        %1870 = vmatprep.subr.bf16.mxu0 0
        %1871 = vmatpush1.bf16.xpose.msra.mxu0 0
        %1872 = vmatprep.subr.bf16.mxu0 0
        %1873 = vmatpush1.bf16.xpose.msra.mxu0 0
        %1874 = vmatprep.subr.bf16.mxu0 0
        %1875 = vmatpush1.bf16.xpose.msra.mxu0 0
        %1876 = vmatprep.subr.bf16.mxu0 0
        %1877 = vmatpush1.bf16.xpose.msra.mxu0 0
        %1878 = vmatprep.mubr.bf16.mxu0 0
        %1879 = vmatmul.mubr.bf16.gmra.mrb[0].mxu0 %v1841
        %v1880 = vpop.f32.mrb[0].mxu0
        %v1881 = vadd.f32 0.0, %v1880
        %v1882 = vpop.f32.mrb[0].mxu0
        %v1883 = vpop.f32.mrb[0].mxu0
        %v1884 = vpop.f32.mrb[0].mxu0
        %1885 = vdwg.mxu0
        %v1886 = vsel %vm1663, %v1881, -inf
        %1887 = vmax.xlane.f32.xlu0 %v1886
        %v1888 = vpop.xlane.xlu0 %1887
        %v1889 = vsub.f32 %v1881, %v1888
        %v1890 = vmul.f32 %v1889, 1.442695
        %v1891 = vpow.pop %v1890
        %v1892 = vsel %vm1663, %v1891, 0.0
        %1893 = vadd.xlane.f32.xlu0 %v1892
        %v1894 = vpop.xlane.xlu0 %1893
        %v1895 = vrcp.pop %v1894
        %v1896 = vmul.f32 %v1891, %v1895
        %v1897 = vpack.c.bf16 %v1896, %v1896
        %1898 = vrot.lane.b32.xlu0 %v1615, 96
        %v1899 = vpop.permute.xlu0 %1898
        %v1901 = vsel %vm1663, %v1897, 0
        %v1904 = vsel %vm1679, %v1899, 0
        %1906 = vmatprep.subr.bf16.mxu0 0
        %1907 = vmatpush1.bf16.msra.mxu0 %v1904
        %1908 = vmatprep.subr.bf16.mxu0 0
        %1909 = vmatpush1.bf16.msra.mxu0 0
        %1910 = vmatprep.subr.bf16.mxu0 0
        %1911 = vmatpush1.bf16.msra.mxu0 0
        %1912 = vmatprep.subr.bf16.mxu0 0
        %1913 = vmatpush1.bf16.msra.mxu0 0
        %1914 = vmatprep.subr.bf16.mxu0 0
        %1915 = vmatpush1.bf16.msra.mxu0 0
        %1916 = vmatprep.subr.bf16.mxu0 0
        %1917 = vmatpush1.bf16.msra.mxu0 0
        %1918 = vmatprep.subr.bf16.mxu0 0
        %1919 = vmatpush1.bf16.msra.mxu0 0
        %1920 = vmatprep.subr.bf16.mxu0 0
        %1921 = vmatpush1.bf16.msra.mxu0 0
        %1922 = vmatprep.subr.bf16.mxu0 0
        %1923 = vmatpush1.bf16.msra.mxu0 0
        %1924 = vmatprep.subr.bf16.mxu0 0
        %1925 = vmatpush1.bf16.msra.mxu0 0
        %1926 = vmatprep.subr.bf16.mxu0 0
        %1927 = vmatpush1.bf16.msra.mxu0 0
        %1928 = vmatprep.subr.bf16.mxu0 0
        %1929 = vmatpush1.bf16.msra.mxu0 0
        %1930 = vmatprep.subr.bf16.mxu0 0
        %1931 = vmatpush1.bf16.msra.mxu0 0
        %1932 = vmatprep.subr.bf16.mxu0 0
        %1933 = vmatpush1.bf16.msra.mxu0 0
        %1934 = vmatprep.subr.bf16.mxu0 0
        %1935 = vmatpush1.bf16.msra.mxu0 0
        %1936 = vmatprep.subr.bf16.mxu0 0
        %1937 = vmatpush1.bf16.msra.mxu0 0
        %1938 = vmatprep.mubr.bf16.mxu0 0
        %1939 = vmatmul.mubr.bf16.gmra.mrb[0].mxu0 %v1901
        %v1940 = vpop.f32.mrb[0].mxu0
        %v1941 = vadd.f32 0.0, %v1940
        %v1942 = vpop.f32.mrb[0].mxu0
        %v1943 = vpop.f32.mrb[0].mxu0
        %v1944 = vpop.f32.mrb[0].mxu0
        %1945 = vdwg.mxu0
        %1946 = vrot.lane.b32.xlu0 %v1613, 80
        %v1947 = vpop.permute.xlu0 %1946
        %1948 = vrot.lane.b32.xlu0 %v1614, 80
        %v1949 = vpop.permute.xlu0 %1948
        %v1951 = vsel %vm1616, %v1947, 0
        %v1954 = vsel %vm1616, %v1949, 0
        %1956 = vmatprep.subr.bf16.mxu0 0
        %1957 = vmatpush1.bf16.xpose.msra.mxu0 %v1954
        %1958 = vmatprep.subr.bf16.mxu0 0
        %1959 = vmatpush1.bf16.xpose.msra.mxu0 0
        %1960 = vmatprep.subr.bf16.mxu0 0
        %1961 = vmatpush1.bf16.xpose.msra.mxu0 0
        %1962 = vmatprep.subr.bf16.mxu0 0
        %1963 = vmatpush1.bf16.xpose.msra.mxu0 0
        %1964 = vmatprep.subr.bf16.mxu0 0
        %1965 = vmatpush1.bf16.xpose.msra.mxu0 0
        %1966 = vmatprep.subr.bf16.mxu0 0
        %1967 = vmatpush1.bf16.xpose.msra.mxu0 0
        %1968 = vmatprep.subr.bf16.mxu0 0
        %1969 = vmatpush1.bf16.xpose.msra.mxu0 0
        %1970 = vmatprep.subr.bf16.mxu0 0
        %1971 = vmatpush1.bf16.xpose.msra.mxu0 0
        %1972 = vmatprep.subr.bf16.mxu0 0
        %1973 = vmatpush1.bf16.xpose.msra.mxu0 0
        %1974 = vmatprep.subr.bf16.mxu0 0
        %1975 = vmatpush1.bf16.xpose.msra.mxu0 0
        %1976 = vmatprep.subr.bf16.mxu0 0
        %1977 = vmatpush1.bf16.xpose.msra.mxu0 0
        %1978 = vmatprep.subr.bf16.mxu0 0
        %1979 = vmatpush1.bf16.xpose.msra.mxu0 0
        %1980 = vmatprep.subr.bf16.mxu0 0
        %1981 = vmatpush1.bf16.xpose.msra.mxu0 0
        %1982 = vmatprep.subr.bf16.mxu0 0
        %1983 = vmatpush1.bf16.xpose.msra.mxu0 0
        %1984 = vmatprep.subr.bf16.mxu0 0
        %1985 = vmatpush1.bf16.xpose.msra.mxu0 0
        %1986 = vmatprep.subr.bf16.mxu0 0
        %1987 = vmatpush1.bf16.xpose.msra.mxu0 0
        %1988 = vmatprep.mubr.bf16.mxu0 0
        %1989 = vmatmul.mubr.bf16.gmra.mrb[0].mxu0 %v1951
        %v1990 = vpop.f32.mrb[0].mxu0
        %v1991 = vadd.f32 0.0, %v1990
        %v1992 = vpop.f32.mrb[0].mxu0
        %v1993 = vpop.f32.mrb[0].mxu0
        %v1994 = vpop.f32.mrb[0].mxu0
        %1995 = vdwg.mxu0
        %v1996 = vsel %vm1663, %v1991, -inf
        %1997 = vmax.xlane.f32.xlu0 %v1996
        %v1998 = vpop.xlane.xlu0 %1997
        %v1999 = vsub.f32 %v1991, %v1998
        %v2000 = vmul.f32 %v1999, 1.442695
        %v2001 = vpow.pop %v2000
        %v2002 = vsel %vm1663, %v2001, 0.0
        %2003 = vadd.xlane.f32.xlu0 %v2002
        %v2004 = vpop.xlane.xlu0 %2003
        %v2005 = vrcp.pop %v2004
        %v2006 = vmul.f32 %v2001, %v2005
        %v2007 = vpack.c.bf16 %v2006, %v2006
        %2008 = vrot.lane.b32.xlu0 %v1615, 80
        %v2009 = vpop.permute.xlu0 %2008
        %v2011 = vsel %vm1663, %v2007, 0
        %v2014 = vsel %vm1679, %v2009, 0
        %2016 = vmatprep.subr.bf16.mxu0 0
        %2017 = vmatpush1.bf16.msra.mxu0 %v2014
        %2018 = vmatprep.subr.bf16.mxu0 0
        %2019 = vmatpush1.bf16.msra.mxu0 0
        %2020 = vmatprep.subr.bf16.mxu0 0
        %2021 = vmatpush1.bf16.msra.mxu0 0
        %2022 = vmatprep.subr.bf16.mxu0 0
        %2023 = vmatpush1.bf16.msra.mxu0 0
        %2024 = vmatprep.subr.bf16.mxu0 0
        %2025 = vmatpush1.bf16.msra.mxu0 0
        %2026 = vmatprep.subr.bf16.mxu0 0
        %2027 = vmatpush1.bf16.msra.mxu0 0
        %2028 = vmatprep.subr.bf16.mxu0 0
        %2029 = vmatpush1.bf16.msra.mxu0 0
        %2030 = vmatprep.subr.bf16.mxu0 0
        %2031 = vmatpush1.bf16.msra.mxu0 0
        %2032 = vmatprep.subr.bf16.mxu0 0
        %2033 = vmatpush1.bf16.msra.mxu0 0
        %2034 = vmatprep.subr.bf16.mxu0 0
        %2035 = vmatpush1.bf16.msra.mxu0 0
        %2036 = vmatprep.subr.bf16.mxu0 0
        %2037 = vmatpush1.bf16.msra.mxu0 0
        %2038 = vmatprep.subr.bf16.mxu0 0
        %2039 = vmatpush1.bf16.msra.mxu0 0
        %2040 = vmatprep.subr.bf16.mxu0 0
        %2041 = vmatpush1.bf16.msra.mxu0 0
        %2042 = vmatprep.subr.bf16.mxu0 0
        %2043 = vmatpush1.bf16.msra.mxu0 0
        %2044 = vmatprep.subr.bf16.mxu0 0
        %2045 = vmatpush1.bf16.msra.mxu0 0
        %2046 = vmatprep.subr.bf16.mxu0 0
        %2047 = vmatpush1.bf16.msra.mxu0 0
        %2048 = vmatprep.mubr.bf16.mxu0 0
        %2049 = vmatmul.mubr.bf16.gmra.mrb[0].mxu0 %v2011
        %v2050 = vpop.f32.mrb[0].mxu0
        %v2051 = vadd.f32 0.0, %v2050
        %v2052 = vpop.f32.mrb[0].mxu0
        %v2053 = vpop.f32.mrb[0].mxu0
        %v2054 = vpop.f32.mrb[0].mxu0
        %2055 = vdwg.mxu0
        %2056 = vrot.lane.b32.xlu0 %v1613, 64
        %v2057 = vpop.permute.xlu0 %2056
        %2058 = vrot.lane.b32.xlu0 %v1614, 64
        %v2059 = vpop.permute.xlu0 %2058
        %v2061 = vsel %vm1616, %v2057, 0
        %v2064 = vsel %vm1616, %v2059, 0
        %2066 = vmatprep.subr.bf16.mxu0 0
        %2067 = vmatpush1.bf16.xpose.msra.mxu0 %v2064
        %2068 = vmatprep.subr.bf16.mxu0 0
        %2069 = vmatpush1.bf16.xpose.msra.mxu0 0
        %2070 = vmatprep.subr.bf16.mxu0 0
        %2071 = vmatpush1.bf16.xpose.msra.mxu0 0
        %2072 = vmatprep.subr.bf16.mxu0 0
        %2073 = vmatpush1.bf16.xpose.msra.mxu0 0
        %2074 = vmatprep.subr.bf16.mxu0 0
        %2075 = vmatpush1.bf16.xpose.msra.mxu0 0
        %2076 = vmatprep.subr.bf16.mxu0 0
        %2077 = vmatpush1.bf16.xpose.msra.mxu0 0
        %2078 = vmatprep.subr.bf16.mxu0 0
        %2079 = vmatpush1.bf16.xpose.msra.mxu0 0
        %2080 = vmatprep.subr.bf16.mxu0 0
        %2081 = vmatpush1.bf16.xpose.msra.mxu0 0
        %2082 = vmatprep.subr.bf16.mxu0 0
        %2083 = vmatpush1.bf16.xpose.msra.mxu0 0
        %2084 = vmatprep.subr.bf16.mxu0 0
        %2085 = vmatpush1.bf16.xpose.msra.mxu0 0
        %2086 = vmatprep.subr.bf16.mxu0 0
        %2087 = vmatpush1.bf16.xpose.msra.mxu0 0
        %2088 = vmatprep.subr.bf16.mxu0 0
        %2089 = vmatpush1.bf16.xpose.msra.mxu0 0
        %2090 = vmatprep.subr.bf16.mxu0 0
        %2091 = vmatpush1.bf16.xpose.msra.mxu0 0
        %2092 = vmatprep.subr.bf16.mxu0 0
        %2093 = vmatpush1.bf16.xpose.msra.mxu0 0
        %2094 = vmatprep.subr.bf16.mxu0 0
        %2095 = vmatpush1.bf16.xpose.msra.mxu0 0
        %2096 = vmatprep.subr.bf16.mxu0 0
        %2097 = vmatpush1.bf16.xpose.msra.mxu0 0
        %2098 = vmatprep.mubr.bf16.mxu0 0
        %2099 = vmatmul.mubr.bf16.gmra.mrb[0].mxu0 %v2061
        %v2100 = vpop.f32.mrb[0].mxu0
        %v2101 = vadd.f32 0.0, %v2100
        %v2102 = vpop.f32.mrb[0].mxu0
        %v2103 = vpop.f32.mrb[0].mxu0
        %v2104 = vpop.f32.mrb[0].mxu0
        %2105 = vdwg.mxu0
        %v2106 = vsel %vm1663, %v2101, -inf
        %2107 = vmax.xlane.f32.xlu0 %v2106
        %v2108 = vpop.xlane.xlu0 %2107
        %v2109 = vsub.f32 %v2101, %v2108
        %v2110 = vmul.f32 %v2109, 1.442695
        %v2111 = vpow.pop %v2110
        %v2112 = vsel %vm1663, %v2111, 0.0
        %2113 = vadd.xlane.f32.xlu0 %v2112
        %v2114 = vpop.xlane.xlu0 %2113
        %v2115 = vrcp.pop %v2114
        %v2116 = vmul.f32 %v2111, %v2115
        %v2117 = vpack.c.bf16 %v2116, %v2116
        %2118 = vrot.lane.b32.xlu0 %v1615, 64
        %v2119 = vpop.permute.xlu0 %2118
        %v2121 = vsel %vm1663, %v2117, 0
        %v2124 = vsel %vm1679, %v2119, 0
        %2126 = vmatprep.subr.bf16.mxu0 0
        %2127 = vmatpush1.bf16.msra.mxu0 %v2124
        %2128 = vmatprep.subr.bf16.mxu0 0
        %2129 = vmatpush1.bf16.msra.mxu0 0
        %2130 = vmatprep.subr.bf16.mxu0 0
        %2131 = vmatpush1.bf16.msra.mxu0 0
        %2132 = vmatprep.subr.bf16.mxu0 0
        %2133 = vmatpush1.bf16.msra.mxu0 0
        %2134 = vmatprep.subr.bf16.mxu0 0
        %2135 = vmatpush1.bf16.msra.mxu0 0
        %2136 = vmatprep.subr.bf16.mxu0 0
        %2137 = vmatpush1.bf16.msra.mxu0 0
        %2138 = vmatprep.subr.bf16.mxu0 0
        %2139 = vmatpush1.bf16.msra.mxu0 0
        %2140 = vmatprep.subr.bf16.mxu0 0
        %2141 = vmatpush1.bf16.msra.mxu0 0
        %2142 = vmatprep.subr.bf16.mxu0 0
        %2143 = vmatpush1.bf16.msra.mxu0 0
        %2144 = vmatprep.subr.bf16.mxu0 0
        %2145 = vmatpush1.bf16.msra.mxu0 0
        %2146 = vmatprep.subr.bf16.mxu0 0
        %2147 = vmatpush1.bf16.msra.mxu0 0
        %2148 = vmatprep.subr.bf16.mxu0 0
        %2149 = vmatpush1.bf16.msra.mxu0 0
        %2150 = vmatprep.subr.bf16.mxu0 0
        %2151 = vmatpush1.bf16.msra.mxu0 0
        %2152 = vmatprep.subr.bf16.mxu0 0
        %2153 = vmatpush1.bf16.msra.mxu0 0
        %2154 = vmatprep.subr.bf16.mxu0 0
        %2155 = vmatpush1.bf16.msra.mxu0 0
        %2156 = vmatprep.subr.bf16.mxu0 0
        %2157 = vmatpush1.bf16.msra.mxu0 0
        %2158 = vmatprep.mubr.bf16.mxu0 0
        %2159 = vmatmul.mubr.bf16.gmra.mrb[0].mxu0 %v2121
        %v2160 = vpop.f32.mrb[0].mxu0
        %v2161 = vadd.f32 0.0, %v2160
        %v2162 = vpop.f32.mrb[0].mxu0
        %v2163 = vpop.f32.mrb[0].mxu0
        %v2164 = vpop.f32.mrb[0].mxu0
        %2165 = vdwg.mxu0
        %2166 = vrot.lane.b32.xlu0 %v1613, 48
        %v2167 = vpop.permute.xlu0 %2166
        %2168 = vrot.lane.b32.xlu0 %v1614, 48
        %v2169 = vpop.permute.xlu0 %2168
        %v2171 = vsel %vm1616, %v2167, 0
        %v2174 = vsel %vm1616, %v2169, 0
        %2176 = vmatprep.subr.bf16.mxu0 0
        %2177 = vmatpush1.bf16.xpose.msra.mxu0 %v2174
        %2178 = vmatprep.subr.bf16.mxu0 0
        %2179 = vmatpush1.bf16.xpose.msra.mxu0 0
        %2180 = vmatprep.subr.bf16.mxu0 0
        %2181 = vmatpush1.bf16.xpose.msra.mxu0 0
        %2182 = vmatprep.subr.bf16.mxu0 0
        %2183 = vmatpush1.bf16.xpose.msra.mxu0 0
        %2184 = vmatprep.subr.bf16.mxu0 0
        %2185 = vmatpush1.bf16.xpose.msra.mxu0 0
        %2186 = vmatprep.subr.bf16.mxu0 0
        %2187 = vmatpush1.bf16.xpose.msra.mxu0 0
        %2188 = vmatprep.subr.bf16.mxu0 0
        %2189 = vmatpush1.bf16.xpose.msra.mxu0 0
        %2190 = vmatprep.subr.bf16.mxu0 0
        %2191 = vmatpush1.bf16.xpose.msra.mxu0 0
        %2192 = vmatprep.subr.bf16.mxu0 0
        %2193 = vmatpush1.bf16.xpose.msra.mxu0 0
        %2194 = vmatprep.subr.bf16.mxu0 0
        %2195 = vmatpush1.bf16.xpose.msra.mxu0 0
        %2196 = vmatprep.subr.bf16.mxu0 0
        %2197 = vmatpush1.bf16.xpose.msra.mxu0 0
        %2198 = vmatprep.subr.bf16.mxu0 0
        %2199 = vmatpush1.bf16.xpose.msra.mxu0 0
        %2200 = vmatprep.subr.bf16.mxu0 0
        %2201 = vmatpush1.bf16.xpose.msra.mxu0 0
        %2202 = vmatprep.subr.bf16.mxu0 0
        %2203 = vmatpush1.bf16.xpose.msra.mxu0 0
        %2204 = vmatprep.subr.bf16.mxu0 0
        %2205 = vmatpush1.bf16.xpose.msra.mxu0 0
        %2206 = vmatprep.subr.bf16.mxu0 0
        %2207 = vmatpush1.bf16.xpose.msra.mxu0 0
        %2208 = vmatprep.mubr.bf16.mxu0 0
        %2209 = vmatmul.mubr.bf16.gmra.mrb[0].mxu0 %v2171
        %v2210 = vpop.f32.mrb[0].mxu0
        %v2211 = vadd.f32 0.0, %v2210
        %v2212 = vpop.f32.mrb[0].mxu0
        %v2213 = vpop.f32.mrb[0].mxu0
        %v2214 = vpop.f32.mrb[0].mxu0
        %2215 = vdwg.mxu0
        %v2216 = vsel %vm1663, %v2211, -inf
        %2217 = vmax.xlane.f32.xlu0 %v2216
        %v2218 = vpop.xlane.xlu0 %2217
        %v2219 = vsub.f32 %v2211, %v2218
        %v2220 = vmul.f32 %v2219, 1.442695
        %v2221 = vpow.pop %v2220
        %v2222 = vsel %vm1663, %v2221, 0.0
        %2223 = vadd.xlane.f32.xlu0 %v2222
        %v2224 = vpop.xlane.xlu0 %2223
        %v2225 = vrcp.pop %v2224
        %v2226 = vmul.f32 %v2221, %v2225
        %v2227 = vpack.c.bf16 %v2226, %v2226
        %2228 = vrot.lane.b32.xlu0 %v1615, 48
        %v2229 = vpop.permute.xlu0 %2228
        %v2231 = vsel %vm1663, %v2227, 0
        %v2234 = vsel %vm1679, %v2229, 0
        %2236 = vmatprep.subr.bf16.mxu0 0
        %2237 = vmatpush1.bf16.msra.mxu0 %v2234
        %2238 = vmatprep.subr.bf16.mxu0 0
        %2239 = vmatpush1.bf16.msra.mxu0 0
        %2240 = vmatprep.subr.bf16.mxu0 0
        %2241 = vmatpush1.bf16.msra.mxu0 0
        %2242 = vmatprep.subr.bf16.mxu0 0
        %2243 = vmatpush1.bf16.msra.mxu0 0
        %2244 = vmatprep.subr.bf16.mxu0 0
        %2245 = vmatpush1.bf16.msra.mxu0 0
        %2246 = vmatprep.subr.bf16.mxu0 0
        %2247 = vmatpush1.bf16.msra.mxu0 0
        %2248 = vmatprep.subr.bf16.mxu0 0
        %2249 = vmatpush1.bf16.msra.mxu0 0
        %2250 = vmatprep.subr.bf16.mxu0 0
        %2251 = vmatpush1.bf16.msra.mxu0 0
        %2252 = vmatprep.subr.bf16.mxu0 0
        %2253 = vmatpush1.bf16.msra.mxu0 0
        %2254 = vmatprep.subr.bf16.mxu0 0
        %2255 = vmatpush1.bf16.msra.mxu0 0
        %2256 = vmatprep.subr.bf16.mxu0 0
        %2257 = vmatpush1.bf16.msra.mxu0 0
        %2258 = vmatprep.subr.bf16.mxu0 0
        %2259 = vmatpush1.bf16.msra.mxu0 0
        %2260 = vmatprep.subr.bf16.mxu0 0
        %2261 = vmatpush1.bf16.msra.mxu0 0
        %2262 = vmatprep.subr.bf16.mxu0 0
        %2263 = vmatpush1.bf16.msra.mxu0 0
        %2264 = vmatprep.subr.bf16.mxu0 0
        %2265 = vmatpush1.bf16.msra.mxu0 0
        %2266 = vmatprep.subr.bf16.mxu0 0
        %2267 = vmatpush1.bf16.msra.mxu0 0
        %2268 = vmatprep.mubr.bf16.mxu0 0
        %2269 = vmatmul.mubr.bf16.gmra.mrb[0].mxu0 %v2231
        %v2270 = vpop.f32.mrb[0].mxu0
        %v2271 = vadd.f32 0.0, %v2270
        %v2272 = vpop.f32.mrb[0].mxu0
        %v2273 = vpop.f32.mrb[0].mxu0
        %v2274 = vpop.f32.mrb[0].mxu0
        %2275 = vdwg.mxu0
        %2276 = vrot.lane.b32.xlu0 %v1613, 32
        %v2277 = vpop.permute.xlu0 %2276
        %2278 = vrot.lane.b32.xlu0 %v1614, 32
        %v2279 = vpop.permute.xlu0 %2278
        %v2281 = vsel %vm1616, %v2277, 0
        %v2284 = vsel %vm1616, %v2279, 0
        %2286 = vmatprep.subr.bf16.mxu0 0
        %2287 = vmatpush1.bf16.xpose.msra.mxu0 %v2284
        %2288 = vmatprep.subr.bf16.mxu0 0
        %2289 = vmatpush1.bf16.xpose.msra.mxu0 0
        %2290 = vmatprep.subr.bf16.mxu0 0
        %2291 = vmatpush1.bf16.xpose.msra.mxu0 0
        %2292 = vmatprep.subr.bf16.mxu0 0
        %2293 = vmatpush1.bf16.xpose.msra.mxu0 0
        %2294 = vmatprep.subr.bf16.mxu0 0
        %2295 = vmatpush1.bf16.xpose.msra.mxu0 0
        %2296 = vmatprep.subr.bf16.mxu0 0
        %2297 = vmatpush1.bf16.xpose.msra.mxu0 0
        %2298 = vmatprep.subr.bf16.mxu0 0
        %2299 = vmatpush1.bf16.xpose.msra.mxu0 0
        %2300 = vmatprep.subr.bf16.mxu0 0
        %2301 = vmatpush1.bf16.xpose.msra.mxu0 0
        %2302 = vmatprep.subr.bf16.mxu0 0
        %2303 = vmatpush1.bf16.xpose.msra.mxu0 0
        %2304 = vmatprep.subr.bf16.mxu0 0
        %2305 = vmatpush1.bf16.xpose.msra.mxu0 0
        %2306 = vmatprep.subr.bf16.mxu0 0
        %2307 = vmatpush1.bf16.xpose.msra.mxu0 0
        %2308 = vmatprep.subr.bf16.mxu0 0
        %2309 = vmatpush1.bf16.xpose.msra.mxu0 0
        %2310 = vmatprep.subr.bf16.mxu0 0
        %2311 = vmatpush1.bf16.xpose.msra.mxu0 0
        %2312 = vmatprep.subr.bf16.mxu0 0
        %2313 = vmatpush1.bf16.xpose.msra.mxu0 0
        %2314 = vmatprep.subr.bf16.mxu0 0
        %2315 = vmatpush1.bf16.xpose.msra.mxu0 0
        %2316 = vmatprep.subr.bf16.mxu0 0
        %2317 = vmatpush1.bf16.xpose.msra.mxu0 0
        %2318 = vmatprep.mubr.bf16.mxu0 0
        %2319 = vmatmul.mubr.bf16.gmra.mrb[0].mxu0 %v2281
        %v2320 = vpop.f32.mrb[0].mxu0
        %v2321 = vadd.f32 0.0, %v2320
        %v2322 = vpop.f32.mrb[0].mxu0
        %v2323 = vpop.f32.mrb[0].mxu0
        %v2324 = vpop.f32.mrb[0].mxu0
        %2325 = vdwg.mxu0
        %v2326 = vsel %vm1663, %v2321, -inf
        %2327 = vmax.xlane.f32.xlu0 %v2326
        %v2328 = vpop.xlane.xlu0 %2327
        %v2329 = vsub.f32 %v2321, %v2328
        %v2330 = vmul.f32 %v2329, 1.442695
        %v2331 = vpow.pop %v2330
        %v2332 = vsel %vm1663, %v2331, 0.0
        %2333 = vadd.xlane.f32.xlu0 %v2332
        %v2334 = vpop.xlane.xlu0 %2333
        %v2335 = vrcp.pop %v2334
        %v2336 = vmul.f32 %v2331, %v2335
        %v2337 = vpack.c.bf16 %v2336, %v2336
        %2338 = vrot.lane.b32.xlu0 %v1615, 32
        %v2339 = vpop.permute.xlu0 %2338
        %v2341 = vsel %vm1663, %v2337, 0
        %v2344 = vsel %vm1679, %v2339, 0
        %2346 = vmatprep.subr.bf16.mxu0 0
        %2347 = vmatpush1.bf16.msra.mxu0 %v2344
        %2348 = vmatprep.subr.bf16.mxu0 0
        %2349 = vmatpush1.bf16.msra.mxu0 0
        %2350 = vmatprep.subr.bf16.mxu0 0
        %2351 = vmatpush1.bf16.msra.mxu0 0
        %2352 = vmatprep.subr.bf16.mxu0 0
        %2353 = vmatpush1.bf16.msra.mxu0 0
        %2354 = vmatprep.subr.bf16.mxu0 0
        %2355 = vmatpush1.bf16.msra.mxu0 0
        %2356 = vmatprep.subr.bf16.mxu0 0
        %2357 = vmatpush1.bf16.msra.mxu0 0
        %2358 = vmatprep.subr.bf16.mxu0 0
        %2359 = vmatpush1.bf16.msra.mxu0 0
        %2360 = vmatprep.subr.bf16.mxu0 0
        %2361 = vmatpush1.bf16.msra.mxu0 0
        %2362 = vmatprep.subr.bf16.mxu0 0
        %2363 = vmatpush1.bf16.msra.mxu0 0
        %2364 = vmatprep.subr.bf16.mxu0 0
        %2365 = vmatpush1.bf16.msra.mxu0 0
        %2366 = vmatprep.subr.bf16.mxu0 0
        %2367 = vmatpush1.bf16.msra.mxu0 0
        %2368 = vmatprep.subr.bf16.mxu0 0
        %2369 = vmatpush1.bf16.msra.mxu0 0
        %2370 = vmatprep.subr.bf16.mxu0 0
        %2371 = vmatpush1.bf16.msra.mxu0 0
        %2372 = vmatprep.subr.bf16.mxu0 0
        %2373 = vmatpush1.bf16.msra.mxu0 0
        %2374 = vmatprep.subr.bf16.mxu0 0
        %2375 = vmatpush1.bf16.msra.mxu0 0
        %2376 = vmatprep.subr.bf16.mxu0 0
        %2377 = vmatpush1.bf16.msra.mxu0 0
        %2378 = vmatprep.mubr.bf16.mxu0 0
        %2379 = vmatmul.mubr.bf16.gmra.mrb[0].mxu0 %v2341
        %v2380 = vpop.f32.mrb[0].mxu0
        %v2381 = vadd.f32 0.0, %v2380
        %v2382 = vpop.f32.mrb[0].mxu0
        %v2383 = vpop.f32.mrb[0].mxu0
        %v2384 = vpop.f32.mrb[0].mxu0
        %2385 = vdwg.mxu0
        %2386 = vrot.lane.b32.xlu0 %v1613, 16
        %v2387 = vpop.permute.xlu0 %2386
        %2388 = vrot.lane.b32.xlu0 %v1614, 16
        %v2389 = vpop.permute.xlu0 %2388
        %v2391 = vsel %vm1616, %v2387, 0
        %v2394 = vsel %vm1616, %v2389, 0
        %2396 = vmatprep.subr.bf16.mxu0 0
        %2397 = vmatpush1.bf16.xpose.msra.mxu0 %v2394
        %2398 = vmatprep.subr.bf16.mxu0 0
        %2399 = vmatpush1.bf16.xpose.msra.mxu0 0
        %2400 = vmatprep.subr.bf16.mxu0 0
        %2401 = vmatpush1.bf16.xpose.msra.mxu0 0
        %2402 = vmatprep.subr.bf16.mxu0 0
        %2403 = vmatpush1.bf16.xpose.msra.mxu0 0
        %2404 = vmatprep.subr.bf16.mxu0 0
        %2405 = vmatpush1.bf16.xpose.msra.mxu0 0
        %2406 = vmatprep.subr.bf16.mxu0 0
        %2407 = vmatpush1.bf16.xpose.msra.mxu0 0
        %2408 = vmatprep.subr.bf16.mxu0 0
        %2409 = vmatpush1.bf16.xpose.msra.mxu0 0
        %2410 = vmatprep.subr.bf16.mxu0 0
        %2411 = vmatpush1.bf16.xpose.msra.mxu0 0
        %2412 = vmatprep.subr.bf16.mxu0 0
        %2413 = vmatpush1.bf16.xpose.msra.mxu0 0
        %2414 = vmatprep.subr.bf16.mxu0 0
        %2415 = vmatpush1.bf16.xpose.msra.mxu0 0
        %2416 = vmatprep.subr.bf16.mxu0 0
        %2417 = vmatpush1.bf16.xpose.msra.mxu0 0
        %2418 = vmatprep.subr.bf16.mxu0 0
        %2419 = vmatpush1.bf16.xpose.msra.mxu0 0
        %2420 = vmatprep.subr.bf16.mxu0 0
        %2421 = vmatpush1.bf16.xpose.msra.mxu0 0
        %2422 = vmatprep.subr.bf16.mxu0 0
        %2423 = vmatpush1.bf16.xpose.msra.mxu0 0
        %2424 = vmatprep.subr.bf16.mxu0 0
        %2425 = vmatpush1.bf16.xpose.msra.mxu0 0
        %2426 = vmatprep.subr.bf16.mxu0 0
        %2427 = vmatpush1.bf16.xpose.msra.mxu0 0
        %2428 = vmatprep.mubr.bf16.mxu0 0
        %2429 = vmatmul.mubr.bf16.gmra.mrb[0].mxu0 %v2391
        %v2430 = vpop.f32.mrb[0].mxu0
        %v2431 = vadd.f32 0.0, %v2430
        %v2432 = vpop.f32.mrb[0].mxu0
        %v2433 = vpop.f32.mrb[0].mxu0
        %v2434 = vpop.f32.mrb[0].mxu0
        %2435 = vdwg.mxu0
        %v2436 = vsel %vm1663, %v2431, -inf
        %2437 = vmax.xlane.f32.xlu0 %v2436
        %v2438 = vpop.xlane.xlu0 %2437
        %v2439 = vsub.f32 %v2431, %v2438
        %v2440 = vmul.f32 %v2439, 1.442695
        %v2441 = vpow.pop %v2440
        %v2442 = vsel %vm1663, %v2441, 0.0
        %2443 = vadd.xlane.f32.xlu0 %v2442
        %v2444 = vpop.xlane.xlu0 %2443
        %v2445 = vrcp.pop %v2444
        %v2446 = vmul.f32 %v2441, %v2445
        %v2447 = vpack.c.bf16 %v2446, %v2446
        %2448 = vrot.lane.b32.xlu0 %v1615, 16
        %v2449 = vpop.permute.xlu0 %2448
        %v2451 = vsel %vm1663, %v2447, 0
        %v2454 = vsel %vm1679, %v2449, 0
        %2456 = vmatprep.subr.bf16.mxu0 0
        %2457 = vmatpush1.bf16.msra.mxu0 %v2454
        %2458 = vmatprep.subr.bf16.mxu0 0
        %2459 = vmatpush1.bf16.msra.mxu0 0
        %2460 = vmatprep.subr.bf16.mxu0 0
        %2461 = vmatpush1.bf16.msra.mxu0 0
        %2462 = vmatprep.subr.bf16.mxu0 0
        %2463 = vmatpush1.bf16.msra.mxu0 0
        %2464 = vmatprep.subr.bf16.mxu0 0
        %2465 = vmatpush1.bf16.msra.mxu0 0
        %2466 = vmatprep.subr.bf16.mxu0 0
        %2467 = vmatpush1.bf16.msra.mxu0 0
        %2468 = vmatprep.subr.bf16.mxu0 0
        %2469 = vmatpush1.bf16.msra.mxu0 0
        %2470 = vmatprep.subr.bf16.mxu0 0
        %2471 = vmatpush1.bf16.msra.mxu0 0
        %2472 = vmatprep.subr.bf16.mxu0 0
        %2473 = vmatpush1.bf16.msra.mxu0 0
        %2474 = vmatprep.subr.bf16.mxu0 0
        %2475 = vmatpush1.bf16.msra.mxu0 0
        %2476 = vmatprep.subr.bf16.mxu0 0
        %2477 = vmatpush1.bf16.msra.mxu0 0
        %2478 = vmatprep.subr.bf16.mxu0 0
        %2479 = vmatpush1.bf16.msra.mxu0 0
        %2480 = vmatprep.subr.bf16.mxu0 0
        %2481 = vmatpush1.bf16.msra.mxu0 0
        %2482 = vmatprep.subr.bf16.mxu0 0
        %2483 = vmatpush1.bf16.msra.mxu0 0
        %2484 = vmatprep.subr.bf16.mxu0 0
        %2485 = vmatpush1.bf16.msra.mxu0 0
        %2486 = vmatprep.subr.bf16.mxu0 0
        %2487 = vmatpush1.bf16.msra.mxu0 0
        %2488 = vmatprep.mubr.bf16.mxu0 0
        %2489 = vmatmul.mubr.bf16.gmra.mrb[0].mxu0 %v2451
        %v2490 = vpop.f32.mrb[0].mxu0
        %v2491 = vadd.f32 0.0, %v2490
        %v2492 = vpop.f32.mrb[0].mxu0
        %v2493 = vpop.f32.mrb[0].mxu0
        %v2494 = vpop.f32.mrb[0].mxu0
        %2495 = vdwg.mxu0
        %2497 = vrot.lane.b32.xlu0 %v1831, 16
        %v2498 = vpop.permute.xlu0 %2497
        %2501 = vrot.lane.b32.xlu0 %v1941, 32
        %v2502 = vpop.permute.xlu0 %2501
        %2505 = vrot.lane.b32.xlu0 %v2051, 48
        %v2506 = vpop.permute.xlu0 %2505
        %2509 = vrot.lane.b32.xlu0 %v2161, 64
        %v2510 = vpop.permute.xlu0 %2509
        %2513 = vrot.lane.b32.xlu0 %v2271, 80
        %v2514 = vpop.permute.xlu0 %2513
        %2517 = vrot.lane.b32.xlu0 %v2381, 96
        %v2518 = vpop.permute.xlu0 %2517
        %2521 = vrot.lane.b32.xlu0 %v2491, 112
        %v2522 = vpop.permute.xlu0 %2521
        %v2524 = vsel %vm1616, %v1718, %v2498
        %vm2525 = vcmask 261120
        %v2526 = vsel %vm2525, %v2524, %v2502
        %vm2527 = vcmask 392192
        %v2528 = vsel %vm2527, %v2526, %v2506
        %vm2529 = vcmask 523264
        %v2530 = vsel %vm2529, %v2528, %v2510
        %vm2531 = vcmask 654336
        %v2532 = vsel %vm2531, %v2530, %v2514
        %vm2533 = vcmask 785408
        %v2534 = vsel %vm2533, %v2532, %v2518
        %vm2535 = vcmask 916480
        %v2536 = vsel %vm2535, %v2534, %v2522
        %v2537 = vpack.c.bf16 %v2536, %v2536
        %v2539 = vlaneseq
        %v2540 = vshrl.u32 %v2539, 7
        %v2541 = vsub.s32 0, %v2540
        %v2542 = vrot.slane %v1328, %v2541
        %v2560 = vunpack.c.l.b16 %v1312
        %v2561 = vunpack.c.l.b16 %v1313
        %v2562 = vunpack.c.l.b16 %v1314
        %v2563 = vunpack.c.l.b16 %v1315
        %v2564 = vunpack.c.l.b16 %v1316
        %v2565 = vunpack.c.l.b16 %v1317
        %v2566 = vunpack.c.l.b16 %v1318
        %v2567 = vunpack.c.l.b16 %v1319
        %v2568 = vunpack.c.l.b16 %v1320
        %v2569 = vunpack.c.l.b16 %v1321
        %v2570 = vunpack.c.l.b16 %v1322
        %v2571 = vunpack.c.l.b16 %v1323
        %v2572 = vunpack.c.l.b16 %v1324
        %v2573 = vunpack.c.l.b16 %v1325
        %v2574 = vunpack.c.l.b16 %v1326
        %v2575 = vunpack.c.l.b16 %v1327
        %v2576 = vpack.c.b16 %v2561, %v2560
        %v2577 = vpack.c.b16 %v2563, %v2562
        %v2578 = vpack.c.b16 %v2565, %v2564
        %v2579 = vpack.c.b16 %v2567, %v2566
        %v2580 = vpack.c.b16 %v2569, %v2568
        %v2581 = vpack.c.b16 %v2571, %v2570
        %v2582 = vpack.c.b16 %v2573, %v2572
        %v2583 = vpack.c.b16 %v2575, %v2574
        %2592 = vmatprep.subr.bf16.mxu0 0
        %2593 = vmatpush1.bf16.msra.mxu0 %v2576
        %2594 = vmatprep.subr.bf16.mxu0 0
        %2595 = vmatpush1.bf16.msra.mxu0 %v2577
        %2596 = vmatprep.subr.bf16.mxu0 0
        %2597 = vmatpush1.bf16.msra.mxu0 %v2578
        %2598 = vmatprep.subr.bf16.mxu0 0
        %2599 = vmatpush1.bf16.msra.mxu0 %v2579
        %2600 = vmatprep.subr.bf16.mxu0 0
        %2601 = vmatpush1.bf16.msra.mxu0 %v2580
        %2602 = vmatprep.subr.bf16.mxu0 0
        %2603 = vmatpush1.bf16.msra.mxu0 %v2581
        %2604 = vmatprep.subr.bf16.mxu0 0
        %2605 = vmatpush1.bf16.msra.mxu0 %v2582
        %2606 = vmatprep.subr.bf16.mxu0 0
        %2607 = vmatpush1.bf16.msra.mxu0 %v2583
        %2608 = vmatprep.subr.bf16.mxu0 0
        %2609 = vmatpush1.bf16.msra.mxu0 0
        %2610 = vmatprep.subr.bf16.mxu0 0
        %2611 = vmatpush1.bf16.msra.mxu0 0
        %2612 = vmatprep.subr.bf16.mxu0 0
        %2613 = vmatpush1.bf16.msra.mxu0 0
        %2614 = vmatprep.subr.bf16.mxu0 0
        %2615 = vmatpush1.bf16.msra.mxu0 0
        %2616 = vmatprep.subr.bf16.mxu0 0
        %2617 = vmatpush1.bf16.msra.mxu0 0
        %2618 = vmatprep.subr.bf16.mxu0 0
        %2619 = vmatpush1.bf16.msra.mxu0 0
        %2620 = vmatprep.subr.bf16.mxu0 0
        %2621 = vmatpush1.bf16.msra.mxu0 0
        %2622 = vmatprep.subr.bf16.mxu0 0
        %2623 = vmatpush1.bf16.msra.mxu0 0
        %2624 = vmatprep.mubr.bf16.mxu0 0
        %2625 = vmatmul.mubr.bf16.gmra.mrb[0].mxu0 %v2537
        %v2626 = vpop.f32.mrb[0].mxu0
        %v2627 = vadd.f32 %v2542, %v2626
        %v2628 = vpop.f32.mrb[0].mxu0
        %v2629 = vpop.f32.mrb[0].mxu0
        %v2630 = vpop.f32.mrb[0].mxu0
        %2631 = vdwg.mxu0
        %v2632 = vadd.f32 %v1254, %v2627
        %v2633 = vld [vmem:[%s49] sm:$0x1]
        %v2634 = vld [vmem:[%s51] sm:$0x1]
        %2635 = vadd.xlane.f32.xlu0 %v2632
        %v2636 = vpop.xlane.xlu0 %2635
        %v2637 = vrcp.pop 128.0
        %v2638 = vmul.f32 %v2636, %v2637
        %v2639 = vsub.f32 %v2632, %v2638
        %v2640 = vmul.f32 %v2639, %v2639
        %2641 = vadd.xlane.f32.xlu0 %v2640
        %v2642 = vpop.xlane.xlu0 %2641
        %v2643 = vmul.f32 %v2642, %v2637
        %v2644 = vadd.f32 %v2643, 1e-05
        %v2645 = vrsqrt.pop %v2644
        %v2646 = vmul.f32 %v2639, %v2645
        %v2648 = vlaneseq
        %v2649 = vshrl.u32 %v2648, 7
        %v2650 = vsub.s32 0, %v2649
        %v2651 = vrot.slane %v2633, %v2650
        %v2653 = vmul.f32 %v2646, %v2651
        %v2655 = vlaneseq
        %v2656 = vshrl.u32 %v2655, 7
        %v2657 = vsub.s32 0, %v2656
        %v2658 = vrot.slane %v2634, %v2657
        %v2660 = vadd.f32 %v2653, %v2658
        %v2661 = vadd.f32 %v2660, %v1257
        %v2662 = vadd.f32 %v1255, %v1258
        %v2663 = vadd.f32 %v1256, %v1259
        %v2664 = vld [vmem:[#allocation19] sm:$0xf]
        %v2665 = vld [vmem:[#allocation19 + $0x4] sm:$0xf]
        %v2666 = vld [vmem:[#allocation19 + $0x8] sm:$0xf]
        %v2667 = vld [vmem:[#allocation19 + $0xc] sm:$0xf]
        %v2668 = vld [vmem:[#allocation19 + $0x10] sm:$0xf]
        %v2669 = vld [vmem:[#allocation19 + $0x14] sm:$0xf]
        %v2670 = vld [vmem:[#allocation19 + $0x18] sm:$0xf]
        %v2671 = vld [vmem:[#allocation19 + $0x1c] sm:$0xf]
        %v2672 = vld [vmem:[#allocation19 + $0x20] sm:$0xf]
        %v2673 = vld [vmem:[#allocation19 + $0x24] sm:$0xf]
        %v2674 = vld [vmem:[#allocation19 + $0x28] sm:$0xf]
        %v2675 = vld [vmem:[#allocation19 + $0x2c] sm:$0xf]
        %v2676 = vld [vmem:[#allocation19 + $0x30] sm:$0xf]
        %v2677 = vld [vmem:[#allocation19 + $0x34] sm:$0xf]
        %v2678 = vld [vmem:[#allocation19 + $0x38] sm:$0xf]
        %v2679 = vld [vmem:[#allocation19 + $0x3c] sm:$0xf]
        %v2680 = vld [vmem:[#allocation20] sm:$0x1]
        %v2681 = vld [vmem:[#allocation22] sm:$0xf]
        %v2682 = vld [vmem:[#allocation22 + $0x4] sm:$0xf]
        %v2683 = vld [vmem:[#allocation22 + $0x8] sm:$0xf]
        %v2684 = vld [vmem:[#allocation22 + $0xc] sm:$0xf]
        %v2685 = vld [vmem:[#allocation22 + $0x10] sm:$0xf]
        %v2686 = vld [vmem:[#allocation22 + $0x14] sm:$0xf]
        %v2687 = vld [vmem:[#allocation22 + $0x18] sm:$0xf]
        %v2688 = vld [vmem:[#allocation22 + $0x1c] sm:$0xf]
        %v2689 = vld [vmem:[#allocation22 + $0x20] sm:$0xf]
        %v2690 = vld [vmem:[#allocation22 + $0x24] sm:$0xf]
        %v2691 = vld [vmem:[#allocation22 + $0x28] sm:$0xf]
        %v2692 = vld [vmem:[#allocation22 + $0x2c] sm:$0xf]
        %v2693 = vld [vmem:[#allocation22 + $0x30] sm:$0xf]
        %v2694 = vld [vmem:[#allocation22 + $0x34] sm:$0xf]
        %v2695 = vld [vmem:[#allocation22 + $0x38] sm:$0xf]
        %v2696 = vld [vmem:[#allocation22 + $0x3c] sm:$0xf]
        %v2697 = vld [vmem:[#allocation23] sm:$0x1]
        %v2698 = vld [vmem:[#allocation25] sm:$0xf]
        %v2699 = vld [vmem:[#allocation25 + $0x4] sm:$0xf]
        %v2700 = vld [vmem:[#allocation25 + $0x8] sm:$0xf]
        %v2701 = vld [vmem:[#allocation25 + $0xc] sm:$0xf]
        %v2702 = vld [vmem:[#allocation25 + $0x10] sm:$0xf]
        %v2703 = vld [vmem:[#allocation25 + $0x14] sm:$0xf]
        %v2704 = vld [vmem:[#allocation25 + $0x18] sm:$0xf]
        %v2705 = vld [vmem:[#allocation25 + $0x1c] sm:$0xf]
        %v2706 = vld [vmem:[#allocation25 + $0x20] sm:$0xf]
        %v2707 = vld [vmem:[#allocation25 + $0x24] sm:$0xf]
        %v2708 = vld [vmem:[#allocation25 + $0x28] sm:$0xf]
        %v2709 = vld [vmem:[#allocation25 + $0x2c] sm:$0xf]
        %v2710 = vld [vmem:[#allocation25 + $0x30] sm:$0xf]
        %v2711 = vld [vmem:[#allocation25 + $0x34] sm:$0xf]
        %v2712 = vld [vmem:[#allocation25 + $0x38] sm:$0xf]
        %v2713 = vld [vmem:[#allocation25 + $0x3c] sm:$0xf]
        %v2714 = vld [vmem:[#allocation26] sm:$0x1]
        %v2715 = vld [vmem:[%s37] sm:$0xf]
        %v2716 = vld [vmem:[%s37 + $0x4] sm:$0xf]
        %v2717 = vld [vmem:[%s37 + $0x8] sm:$0xf]
        %v2718 = vld [vmem:[%s37 + $0xc] sm:$0xf]
        %v2719 = vld [vmem:[%s37 + $0x10] sm:$0xf]
        %v2720 = vld [vmem:[%s37 + $0x14] sm:$0xf]
        %v2721 = vld [vmem:[%s37 + $0x18] sm:$0xf]
        %v2722 = vld [vmem:[%s37 + $0x1c] sm:$0xf]
        %v2723 = vld [vmem:[%s37 + $0x20] sm:$0xf]
        %v2724 = vld [vmem:[%s37 + $0x24] sm:$0xf]
        %v2725 = vld [vmem:[%s37 + $0x28] sm:$0xf]
        %v2726 = vld [vmem:[%s37 + $0x2c] sm:$0xf]
        %v2727 = vld [vmem:[%s37 + $0x30] sm:$0xf]
        %v2728 = vld [vmem:[%s37 + $0x34] sm:$0xf]
        %v2729 = vld [vmem:[%s37 + $0x38] sm:$0xf]
        %v2730 = vld [vmem:[%s37 + $0x3c] sm:$0xf]
        %v2731 = vld [vmem:[%s39] sm:$0x1]
        %v2732 = vpack.c.bf16 %v2661, %v2661
        %v2734 = vlaneseq
        %v2735 = vshrl.u32 %v2734, 7
        %v2736 = vsub.s32 0, %v2735
        %v2737 = vrot.slane %v2680, %v2736
        %v2755 = vunpack.c.l.b16 %v2664
        %v2756 = vunpack.c.l.b16 %v2665
        %v2757 = vunpack.c.l.b16 %v2666
        %v2758 = vunpack.c.l.b16 %v2667
        %v2759 = vunpack.c.l.b16 %v2668
        %v2760 = vunpack.c.l.b16 %v2669
        %v2761 = vunpack.c.l.b16 %v2670
        %v2762 = vunpack.c.l.b16 %v2671
        %v2763 = vunpack.c.l.b16 %v2672
        %v2764 = vunpack.c.l.b16 %v2673
        %v2765 = vunpack.c.l.b16 %v2674
        %v2766 = vunpack.c.l.b16 %v2675
        %v2767 = vunpack.c.l.b16 %v2676
        %v2768 = vunpack.c.l.b16 %v2677
        %v2769 = vunpack.c.l.b16 %v2678
        %v2770 = vunpack.c.l.b16 %v2679
        %v2771 = vpack.c.b16 %v2756, %v2755
        %v2772 = vpack.c.b16 %v2758, %v2757
        %v2773 = vpack.c.b16 %v2760, %v2759
        %v2774 = vpack.c.b16 %v2762, %v2761
        %v2775 = vpack.c.b16 %v2764, %v2763
        %v2776 = vpack.c.b16 %v2766, %v2765
        %v2777 = vpack.c.b16 %v2768, %v2767
        %v2778 = vpack.c.b16 %v2770, %v2769
        %2787 = vmatprep.subr.bf16.mxu0 0
        %2788 = vmatpush1.bf16.msra.mxu0 %v2771
        %2789 = vmatprep.subr.bf16.mxu0 0
        %2790 = vmatpush1.bf16.msra.mxu0 %v2772
        %2791 = vmatprep.subr.bf16.mxu0 0
        %2792 = vmatpush1.bf16.msra.mxu0 %v2773
        %2793 = vmatprep.subr.bf16.mxu0 0
        %2794 = vmatpush1.bf16.msra.mxu0 %v2774
        %2795 = vmatprep.subr.bf16.mxu0 0
        %2796 = vmatpush1.bf16.msra.mxu0 %v2775
        %2797 = vmatprep.subr.bf16.mxu0 0
        %2798 = vmatpush1.bf16.msra.mxu0 %v2776
        %2799 = vmatprep.subr.bf16.mxu0 0
        %2800 = vmatpush1.bf16.msra.mxu0 %v2777
        %2801 = vmatprep.subr.bf16.mxu0 0
        %2802 = vmatpush1.bf16.msra.mxu0 %v2778
        %2803 = vmatprep.subr.bf16.mxu0 0
        %2804 = vmatpush1.bf16.msra.mxu0 0
        %2805 = vmatprep.subr.bf16.mxu0 0
        %2806 = vmatpush1.bf16.msra.mxu0 0
        %2807 = vmatprep.subr.bf16.mxu0 0
        %2808 = vmatpush1.bf16.msra.mxu0 0
        %2809 = vmatprep.subr.bf16.mxu0 0
        %2810 = vmatpush1.bf16.msra.mxu0 0
        %2811 = vmatprep.subr.bf16.mxu0 0
        %2812 = vmatpush1.bf16.msra.mxu0 0
        %2813 = vmatprep.subr.bf16.mxu0 0
        %2814 = vmatpush1.bf16.msra.mxu0 0
        %2815 = vmatprep.subr.bf16.mxu0 0
        %2816 = vmatpush1.bf16.msra.mxu0 0
        %2817 = vmatprep.subr.bf16.mxu0 0
        %2818 = vmatpush1.bf16.msra.mxu0 0
        %2819 = vmatprep.mubr.bf16.mxu0 0
        %2820 = vmatmul.mubr.bf16.gmra.mrb[0].mxu0 %v2732
        %v2821 = vpop.f32.mrb[0].mxu0
        %v2822 = vadd.f32 %v2737, %v2821
        %v2823 = vpop.f32.mrb[0].mxu0
        %v2824 = vpop.f32.mrb[0].mxu0
        %v2825 = vpop.f32.mrb[0].mxu0
        %2826 = vdwg.mxu0
        %v2827 = vpack.c.bf16 %v2663, %v2662
        %v2829 = vlaneseq
        %v2830 = vshrl.u32 %v2829, 7
        %v2831 = vsub.s32 0, %v2830
        %v2832 = vrot.slane %v2697, %v2831
        %v2850 = vunpack.c.l.b16 %v2681
        %v2851 = vunpack.c.l.b16 %v2682
        %v2852 = vunpack.c.l.b16 %v2683
        %v2853 = vunpack.c.l.b16 %v2684
        %v2854 = vunpack.c.l.b16 %v2685
        %v2855 = vunpack.c.l.b16 %v2686
        %v2856 = vunpack.c.l.b16 %v2687
        %v2857 = vunpack.c.l.b16 %v2688
        %v2858 = vunpack.c.l.b16 %v2689
        %v2859 = vunpack.c.l.b16 %v2690
        %v2860 = vunpack.c.l.b16 %v2691
        %v2861 = vunpack.c.l.b16 %v2692
        %v2862 = vunpack.c.l.b16 %v2693
        %v2863 = vunpack.c.l.b16 %v2694
        %v2864 = vunpack.c.l.b16 %v2695
        %v2865 = vunpack.c.l.b16 %v2696
        %v2866 = vpack.c.b16 %v2851, %v2850
        %v2867 = vpack.c.b16 %v2853, %v2852
        %v2868 = vpack.c.b16 %v2855, %v2854
        %v2869 = vpack.c.b16 %v2857, %v2856
        %v2870 = vpack.c.b16 %v2859, %v2858
        %v2871 = vpack.c.b16 %v2861, %v2860
        %v2872 = vpack.c.b16 %v2863, %v2862
        %v2873 = vpack.c.b16 %v2865, %v2864
        %2882 = vmatprep.subr.bf16.mxu0 0
        %2883 = vmatpush1.bf16.msra.mxu0 %v2866
        %2884 = vmatprep.subr.bf16.mxu0 0
        %2885 = vmatpush1.bf16.msra.mxu0 %v2867
        %2886 = vmatprep.subr.bf16.mxu0 0
        %2887 = vmatpush1.bf16.msra.mxu0 %v2868
        %2888 = vmatprep.subr.bf16.mxu0 0
        %2889 = vmatpush1.bf16.msra.mxu0 %v2869
        %2890 = vmatprep.subr.bf16.mxu0 0
        %2891 = vmatpush1.bf16.msra.mxu0 %v2870
        %2892 = vmatprep.subr.bf16.mxu0 0
        %2893 = vmatpush1.bf16.msra.mxu0 %v2871
        %2894 = vmatprep.subr.bf16.mxu0 0
        %2895 = vmatpush1.bf16.msra.mxu0 %v2872
        %2896 = vmatprep.subr.bf16.mxu0 0
        %2897 = vmatpush1.bf16.msra.mxu0 %v2873
        %2898 = vmatprep.subr.bf16.mxu0 0
        %2899 = vmatpush1.bf16.msra.mxu0 0
        %2900 = vmatprep.subr.bf16.mxu0 0
        %2901 = vmatpush1.bf16.msra.mxu0 0
        %2902 = vmatprep.subr.bf16.mxu0 0
        %2903 = vmatpush1.bf16.msra.mxu0 0
        %2904 = vmatprep.subr.bf16.mxu0 0
        %2905 = vmatpush1.bf16.msra.mxu0 0
        %2906 = vmatprep.subr.bf16.mxu0 0
        %2907 = vmatpush1.bf16.msra.mxu0 0
        %2908 = vmatprep.subr.bf16.mxu0 0
        %2909 = vmatpush1.bf16.msra.mxu0 0
        %2910 = vmatprep.subr.bf16.mxu0 0
        %2911 = vmatpush1.bf16.msra.mxu0 0
        %2912 = vmatprep.subr.bf16.mxu0 0
        %2913 = vmatpush1.bf16.msra.mxu0 0
        %2914 = vmatprep.mubr.bf16.mxu0 0
        %2915 = vmatmul.mubr.bf16.gmra.mrb[0].mxu0 %v2827
        %v2916 = vpop.f32.mrb[0].mxu0
        %v2917 = vadd.f32 %v2832, %v2916
        %v2918 = vpop.f32.mrb[0].mxu0
        %v2919 = vpop.f32.mrb[0].mxu0
        %v2920 = vadd.f32 %v2832, %v2919
        %v2921 = vpop.f32.mrb[0].mxu0
        %2922 = vdwg.mxu0
        %v2923 = vpack.c.bf16 %v1256, %v1255
        %v2925 = vlaneseq
        %v2926 = vshrl.u32 %v2925, 7
        %v2927 = vsub.s32 0, %v2926
        %v2928 = vrot.slane %v2714, %v2927
        %v2946 = vunpack.c.l.b16 %v2698
        %v2947 = vunpack.c.l.b16 %v2699
        %v2948 = vunpack.c.l.b16 %v2700
        %v2949 = vunpack.c.l.b16 %v2701
        %v2950 = vunpack.c.l.b16 %v2702
        %v2951 = vunpack.c.l.b16 %v2703
        %v2952 = vunpack.c.l.b16 %v2704
        %v2953 = vunpack.c.l.b16 %v2705
        %v2954 = vunpack.c.l.b16 %v2706
        %v2955 = vunpack.c.l.b16 %v2707
        %v2956 = vunpack.c.l.b16 %v2708
        %v2957 = vunpack.c.l.b16 %v2709
        %v2958 = vunpack.c.l.b16 %v2710
        %v2959 = vunpack.c.l.b16 %v2711
        %v2960 = vunpack.c.l.b16 %v2712
        %v2961 = vunpack.c.l.b16 %v2713
        %v2962 = vpack.c.b16 %v2947, %v2946
        %v2963 = vpack.c.b16 %v2949, %v2948
        %v2964 = vpack.c.b16 %v2951, %v2950
        %v2965 = vpack.c.b16 %v2953, %v2952
        %v2966 = vpack.c.b16 %v2955, %v2954
        %v2967 = vpack.c.b16 %v2957, %v2956
        %v2968 = vpack.c.b16 %v2959, %v2958
        %v2969 = vpack.c.b16 %v2961, %v2960
        %2978 = vmatprep.subr.bf16.mxu0 0
        %2979 = vmatpush1.bf16.msra.mxu0 %v2962
        %2980 = vmatprep.subr.bf16.mxu0 0
        %2981 = vmatpush1.bf16.msra.mxu0 %v2963
        %2982 = vmatprep.subr.bf16.mxu0 0
        %2983 = vmatpush1.bf16.msra.mxu0 %v2964
        %2984 = vmatprep.subr.bf16.mxu0 0
        %2985 = vmatpush1.bf16.msra.mxu0 %v2965
        %2986 = vmatprep.subr.bf16.mxu0 0
        %2987 = vmatpush1.bf16.msra.mxu0 %v2966
        %2988 = vmatprep.subr.bf16.mxu0 0
        %2989 = vmatpush1.bf16.msra.mxu0 %v2967
        %2990 = vmatprep.subr.bf16.mxu0 0
        %2991 = vmatpush1.bf16.msra.mxu0 %v2968
        %2992 = vmatprep.subr.bf16.mxu0 0
        %2993 = vmatpush1.bf16.msra.mxu0 %v2969
        %2994 = vmatprep.subr.bf16.mxu0 0
        %2995 = vmatpush1.bf16.msra.mxu0 0
        %2996 = vmatprep.subr.bf16.mxu0 0
        %2997 = vmatpush1.bf16.msra.mxu0 0
        %2998 = vmatprep.subr.bf16.mxu0 0
        %2999 = vmatpush1.bf16.msra.mxu0 0
        %3000 = vmatprep.subr.bf16.mxu0 0
        %3001 = vmatpush1.bf16.msra.mxu0 0
        %3002 = vmatprep.subr.bf16.mxu0 0
        %3003 = vmatpush1.bf16.msra.mxu0 0
        %3004 = vmatprep.subr.bf16.mxu0 0
        %3005 = vmatpush1.bf16.msra.mxu0 0
        %3006 = vmatprep.subr.bf16.mxu0 0
        %3007 = vmatpush1.bf16.msra.mxu0 0
        %3008 = vmatprep.subr.bf16.mxu0 0
        %3009 = vmatpush1.bf16.msra.mxu0 0
        %3010 = vmatprep.mubr.bf16.mxu0 0
        %3011 = vmatmul.mubr.bf16.gmra.mrb[0].mxu0 %v2923
        %v3012 = vpop.f32.mrb[0].mxu0
        %v3013 = vadd.f32 %v2928, %v3012
        %v3014 = vpop.f32.mrb[0].mxu0
        %v3015 = vpop.f32.mrb[0].mxu0
        %v3016 = vadd.f32 %v2928, %v3015
        %v3017 = vpop.f32.mrb[0].mxu0
        %3018 = vdwg.mxu0
        %v3019 = vpack.c.bf16 %v2822, %v2822
        %v3020 = vpack.c.bf16 %v2920, %v2917
        %v3021 = vpack.c.bf16 %v3016, %v3013
        %v3023 = vsel %vm1616, %v3019, 0
        %v3026 = vsel %vm1616, %v3020, 0
        %3028 = vmatprep.subr.bf16.mxu0 0
        %3029 = vmatpush1.bf16.xpose.msra.mxu0 %v3026
        %3030 = vmatprep.subr.bf16.mxu0 0
        %3031 = vmatpush1.bf16.xpose.msra.mxu0 0
        %3032 = vmatprep.subr.bf16.mxu0 0
        %3033 = vmatpush1.bf16.xpose.msra.mxu0 0
        %3034 = vmatprep.subr.bf16.mxu0 0
        %3035 = vmatpush1.bf16.xpose.msra.mxu0 0
        %3036 = vmatprep.subr.bf16.mxu0 0
        %3037 = vmatpush1.bf16.xpose.msra.mxu0 0
        %3038 = vmatprep.subr.bf16.mxu0 0
        %3039 = vmatpush1.bf16.xpose.msra.mxu0 0
        %3040 = vmatprep.subr.bf16.mxu0 0
        %3041 = vmatpush1.bf16.xpose.msra.mxu0 0
        %3042 = vmatprep.subr.bf16.mxu0 0
        %3043 = vmatpush1.bf16.xpose.msra.mxu0 0
        %3044 = vmatprep.subr.bf16.mxu0 0
        %3045 = vmatpush1.bf16.xpose.msra.mxu0 0
        %3046 = vmatprep.subr.bf16.mxu0 0
        %3047 = vmatpush1.bf16.xpose.msra.mxu0 0
        %3048 = vmatprep.subr.bf16.mxu0 0
        %3049 = vmatpush1.bf16.xpose.msra.mxu0 0
        %3050 = vmatprep.subr.bf16.mxu0 0
        %3051 = vmatpush1.bf16.xpose.msra.mxu0 0
        %3052 = vmatprep.subr.bf16.mxu0 0
        %3053 = vmatpush1.bf16.xpose.msra.mxu0 0
        %3054 = vmatprep.subr.bf16.mxu0 0
        %3055 = vmatpush1.bf16.xpose.msra.mxu0 0
        %3056 = vmatprep.subr.bf16.mxu0 0
        %3057 = vmatpush1.bf16.xpose.msra.mxu0 0
        %3058 = vmatprep.subr.bf16.mxu0 0
        %3059 = vmatpush1.bf16.xpose.msra.mxu0 0
        %3060 = vmatprep.mubr.bf16.mxu0 0
        %3061 = vmatmul.mubr.bf16.gmra.mrb[0].mxu0 %v3023
        %v3062 = vpop.f32.mrb[0].mxu0
        %v3063 = vadd.f32 0.0, %v3062
        %v3064 = vpop.f32.mrb[0].mxu0
        %v3065 = vpop.f32.mrb[0].mxu0
        %v3066 = vpop.f32.mrb[0].mxu0
        %3067 = vdwg.mxu0
        %v3068 = vsel %vm1616, %v3063, -inf
        %3069 = vmax.xlane.f32.xlu0 %v3068
        %v3070 = vpop.xlane.xlu0 %3069
        %v3071 = vsub.f32 %v3063, %v3070
        %v3072 = vmul.f32 %v3071, 1.442695
        %v3073 = vpow.pop %v3072
        %v3074 = vsel %vm1616, %v3073, 0.0
        %3075 = vadd.xlane.f32.xlu0 %v3074
        %v3076 = vpop.xlane.xlu0 %3075
        %v3077 = vrcp.pop %v3076
        %v3078 = vmul.f32 %v3073, %v3077
        %v3079 = vpack.c.bf16 %v3078, %v3078
        %v3081 = vsel %vm1616, %v3079, 0
        %3083 = vmatprep.subr.bf16.mxu0 0
        %3084 = vmatpush1.bf16.msra.mxu0 %v3021
        %3085 = vmatprep.subr.bf16.mxu0 0
        %3086 = vmatpush1.bf16.msra.mxu0 0
        %3087 = vmatprep.subr.bf16.mxu0 0
        %3088 = vmatpush1.bf16.msra.mxu0 0
        %3089 = vmatprep.subr.bf16.mxu0 0
        %3090 = vmatpush1.bf16.msra.mxu0 0
        %3091 = vmatprep.subr.bf16.mxu0 0
        %3092 = vmatpush1.bf16.msra.mxu0 0
        %3093 = vmatprep.subr.bf16.mxu0 0
        %3094 = vmatpush1.bf16.msra.mxu0 0
        %3095 = vmatprep.subr.bf16.mxu0 0
        %3096 = vmatpush1.bf16.msra.mxu0 0
        %3097 = vmatprep.subr.bf16.mxu0 0
        %3098 = vmatpush1.bf16.msra.mxu0 0
        %3099 = vmatprep.subr.bf16.mxu0 0
        %3100 = vmatpush1.bf16.msra.mxu0 0
        %3101 = vmatprep.subr.bf16.mxu0 0
        %3102 = vmatpush1.bf16.msra.mxu0 0
        %3103 = vmatprep.subr.bf16.mxu0 0
        %3104 = vmatpush1.bf16.msra.mxu0 0
        %3105 = vmatprep.subr.bf16.mxu0 0
        %3106 = vmatpush1.bf16.msra.mxu0 0
        %3107 = vmatprep.subr.bf16.mxu0 0
        %3108 = vmatpush1.bf16.msra.mxu0 0
        %3109 = vmatprep.subr.bf16.mxu0 0
        %3110 = vmatpush1.bf16.msra.mxu0 0
        %3111 = vmatprep.subr.bf16.mxu0 0
        %3112 = vmatpush1.bf16.msra.mxu0 0
        %3113 = vmatprep.subr.bf16.mxu0 0
        %3114 = vmatpush1.bf16.msra.mxu0 0
        %3115 = vmatprep.mubr.bf16.mxu0 0
        %3116 = vmatmul.mubr.bf16.gmra.mrb[0].mxu0 %v3081
        %v3117 = vpop.f32.mrb[0].mxu0
        %v3118 = vadd.f32 0.0, %v3117
        %v3119 = vpop.f32.mrb[0].mxu0
        %v3120 = vpop.f32.mrb[0].mxu0
        %v3121 = vpop.f32.mrb[0].mxu0
        %3122 = vdwg.mxu0
        %3124 = vrot.lane.b32.xlu0 %v3019, 112
        %v3125 = vpop.permute.xlu0 %3124
        %3127 = vrot.lane.b32.xlu0 %v3020, 112
        %v3128 = vpop.permute.xlu0 %3127
        %v3130 = vsel %vm1616, %v3125, 0
        %v3133 = vsel %vm1616, %v3128, 0
        %3135 = vmatprep.subr.bf16.mxu0 0
        %3136 = vmatpush1.bf16.xpose.msra.mxu0 %v3133
        %3137 = vmatprep.subr.bf16.mxu0 0
        %3138 = vmatpush1.bf16.xpose.msra.mxu0 0
        %3139 = vmatprep.subr.bf16.mxu0 0
        %3140 = vmatpush1.bf16.xpose.msra.mxu0 0
        %3141 = vmatprep.subr.bf16.mxu0 0
        %3142 = vmatpush1.bf16.xpose.msra.mxu0 0
        %3143 = vmatprep.subr.bf16.mxu0 0
        %3144 = vmatpush1.bf16.xpose.msra.mxu0 0
        %3145 = vmatprep.subr.bf16.mxu0 0
        %3146 = vmatpush1.bf16.xpose.msra.mxu0 0
        %3147 = vmatprep.subr.bf16.mxu0 0
        %3148 = vmatpush1.bf16.xpose.msra.mxu0 0
        %3149 = vmatprep.subr.bf16.mxu0 0
        %3150 = vmatpush1.bf16.xpose.msra.mxu0 0
        %3151 = vmatprep.subr.bf16.mxu0 0
        %3152 = vmatpush1.bf16.xpose.msra.mxu0 0
        %3153 = vmatprep.subr.bf16.mxu0 0
        %3154 = vmatpush1.bf16.xpose.msra.mxu0 0
        %3155 = vmatprep.subr.bf16.mxu0 0
        %3156 = vmatpush1.bf16.xpose.msra.mxu0 0
        %3157 = vmatprep.subr.bf16.mxu0 0
        %3158 = vmatpush1.bf16.xpose.msra.mxu0 0
        %3159 = vmatprep.subr.bf16.mxu0 0
        %3160 = vmatpush1.bf16.xpose.msra.mxu0 0
        %3161 = vmatprep.subr.bf16.mxu0 0
        %3162 = vmatpush1.bf16.xpose.msra.mxu0 0
        %3163 = vmatprep.subr.bf16.mxu0 0
        %3164 = vmatpush1.bf16.xpose.msra.mxu0 0
        %3165 = vmatprep.subr.bf16.mxu0 0
        %3166 = vmatpush1.bf16.xpose.msra.mxu0 0
        %3167 = vmatprep.mubr.bf16.mxu0 0
        %3168 = vmatmul.mubr.bf16.gmra.mrb[0].mxu0 %v3130
        %v3169 = vpop.f32.mrb[0].mxu0
        %v3170 = vadd.f32 0.0, %v3169
        %v3171 = vpop.f32.mrb[0].mxu0
        %v3172 = vpop.f32.mrb[0].mxu0
        %v3173 = vpop.f32.mrb[0].mxu0
        %3174 = vdwg.mxu0
        %v3175 = vsel %vm1616, %v3170, -inf
        %3176 = vmax.xlane.f32.xlu0 %v3175
        %v3177 = vpop.xlane.xlu0 %3176
        %v3178 = vsub.f32 %v3170, %v3177
        %v3179 = vmul.f32 %v3178, 1.442695
        %v3180 = vpow.pop %v3179
        %v3181 = vsel %vm1616, %v3180, 0.0
        %3182 = vadd.xlane.f32.xlu0 %v3181
        %v3183 = vpop.xlane.xlu0 %3182
        %v3184 = vrcp.pop %v3183
        %v3185 = vmul.f32 %v3180, %v3184
        %v3186 = vpack.c.bf16 %v3185, %v3185
        %3188 = vrot.lane.b32.xlu0 %v3021, 112
        %v3189 = vpop.permute.xlu0 %3188
        %v3192 = vsel %vm1616, %v3186, 0
        %3194 = vmatprep.subr.bf16.mxu0 0
        %3195 = vmatpush1.bf16.msra.mxu0 %v3189
        %3196 = vmatprep.subr.bf16.mxu0 0
        %3197 = vmatpush1.bf16.msra.mxu0 0
        %3198 = vmatprep.subr.bf16.mxu0 0
        %3199 = vmatpush1.bf16.msra.mxu0 0
        %3200 = vmatprep.subr.bf16.mxu0 0
        %3201 = vmatpush1.bf16.msra.mxu0 0
        %3202 = vmatprep.subr.bf16.mxu0 0
        %3203 = vmatpush1.bf16.msra.mxu0 0
        %3204 = vmatprep.subr.bf16.mxu0 0
        %3205 = vmatpush1.bf16.msra.mxu0 0
        %3206 = vmatprep.subr.bf16.mxu0 0
        %3207 = vmatpush1.bf16.msra.mxu0 0
        %3208 = vmatprep.subr.bf16.mxu0 0
        %3209 = vmatpush1.bf16.msra.mxu0 0
        %3210 = vmatprep.subr.bf16.mxu0 0
        %3211 = vmatpush1.bf16.msra.mxu0 0
        %3212 = vmatprep.subr.bf16.mxu0 0
        %3213 = vmatpush1.bf16.msra.mxu0 0
        %3214 = vmatprep.subr.bf16.mxu0 0
        %3215 = vmatpush1.bf16.msra.mxu0 0
        %3216 = vmatprep.subr.bf16.mxu0 0
        %3217 = vmatpush1.bf16.msra.mxu0 0
        %3218 = vmatprep.subr.bf16.mxu0 0
        %3219 = vmatpush1.bf16.msra.mxu0 0
        %3220 = vmatprep.subr.bf16.mxu0 0
        %3221 = vmatpush1.bf16.msra.mxu0 0
        %3222 = vmatprep.subr.bf16.mxu0 0
        %3223 = vmatpush1.bf16.msra.mxu0 0
        %3224 = vmatprep.subr.bf16.mxu0 0
        %3225 = vmatpush1.bf16.msra.mxu0 0
        %3226 = vmatprep.mubr.bf16.mxu0 0
        %3227 = vmatmul.mubr.bf16.gmra.mrb[0].mxu0 %v3192
        %v3228 = vpop.f32.mrb[0].mxu0
        %v3229 = vadd.f32 0.0, %v3228
        %v3230 = vpop.f32.mrb[0].mxu0
        %v3231 = vpop.f32.mrb[0].mxu0
        %v3232 = vpop.f32.mrb[0].mxu0
        %3233 = vdwg.mxu0
        %3234 = vrot.lane.b32.xlu0 %v3019, 96
        %v3235 = vpop.permute.xlu0 %3234
        %3236 = vrot.lane.b32.xlu0 %v3020, 96
        %v3237 = vpop.permute.xlu0 %3236
        %v3239 = vsel %vm1616, %v3235, 0
        %v3242 = vsel %vm1616, %v3237, 0
        %3244 = vmatprep.subr.bf16.mxu0 0
        %3245 = vmatpush1.bf16.xpose.msra.mxu0 %v3242
        %3246 = vmatprep.subr.bf16.mxu0 0
        %3247 = vmatpush1.bf16.xpose.msra.mxu0 0
        %3248 = vmatprep.subr.bf16.mxu0 0
        %3249 = vmatpush1.bf16.xpose.msra.mxu0 0
        %3250 = vmatprep.subr.bf16.mxu0 0
        %3251 = vmatpush1.bf16.xpose.msra.mxu0 0
        %3252 = vmatprep.subr.bf16.mxu0 0
        %3253 = vmatpush1.bf16.xpose.msra.mxu0 0
        %3254 = vmatprep.subr.bf16.mxu0 0
        %3255 = vmatpush1.bf16.xpose.msra.mxu0 0
        %3256 = vmatprep.subr.bf16.mxu0 0
        %3257 = vmatpush1.bf16.xpose.msra.mxu0 0
        %3258 = vmatprep.subr.bf16.mxu0 0
        %3259 = vmatpush1.bf16.xpose.msra.mxu0 0
        %3260 = vmatprep.subr.bf16.mxu0 0
        %3261 = vmatpush1.bf16.xpose.msra.mxu0 0
        %3262 = vmatprep.subr.bf16.mxu0 0
        %3263 = vmatpush1.bf16.xpose.msra.mxu0 0
        %3264 = vmatprep.subr.bf16.mxu0 0
        %3265 = vmatpush1.bf16.xpose.msra.mxu0 0
        %3266 = vmatprep.subr.bf16.mxu0 0
        %3267 = vmatpush1.bf16.xpose.msra.mxu0 0
        %3268 = vmatprep.subr.bf16.mxu0 0
        %3269 = vmatpush1.bf16.xpose.msra.mxu0 0
        %3270 = vmatprep.subr.bf16.mxu0 0
        %3271 = vmatpush1.bf16.xpose.msra.mxu0 0
        %3272 = vmatprep.subr.bf16.mxu0 0
        %3273 = vmatpush1.bf16.xpose.msra.mxu0 0
        %3274 = vmatprep.subr.bf16.mxu0 0
        %3275 = vmatpush1.bf16.xpose.msra.mxu0 0
        %3276 = vmatprep.mubr.bf16.mxu0 0
        %3277 = vmatmul.mubr.bf16.gmra.mrb[0].mxu0 %v3239
        %v3278 = vpop.f32.mrb[0].mxu0
        %v3279 = vadd.f32 0.0, %v3278
        %v3280 = vpop.f32.mrb[0].mxu0
        %v3281 = vpop.f32.mrb[0].mxu0
        %v3282 = vpop.f32.mrb[0].mxu0
        %3283 = vdwg.mxu0
        %v3284 = vsel %vm1616, %v3279, -inf
        %3285 = vmax.xlane.f32.xlu0 %v3284
        %v3286 = vpop.xlane.xlu0 %3285
        %v3287 = vsub.f32 %v3279, %v3286
        %v3288 = vmul.f32 %v3287, 1.442695
        %v3289 = vpow.pop %v3288
        %v3290 = vsel %vm1616, %v3289, 0.0
        %3291 = vadd.xlane.f32.xlu0 %v3290
        %v3292 = vpop.xlane.xlu0 %3291
        %v3293 = vrcp.pop %v3292
        %v3294 = vmul.f32 %v3289, %v3293
        %v3295 = vpack.c.bf16 %v3294, %v3294
        %3296 = vrot.lane.b32.xlu0 %v3021, 96
        %v3297 = vpop.permute.xlu0 %3296
        %v3300 = vsel %vm1616, %v3295, 0
        %3302 = vmatprep.subr.bf16.mxu0 0
        %3303 = vmatpush1.bf16.msra.mxu0 %v3297
        %3304 = vmatprep.subr.bf16.mxu0 0
        %3305 = vmatpush1.bf16.msra.mxu0 0
        %3306 = vmatprep.subr.bf16.mxu0 0
        %3307 = vmatpush1.bf16.msra.mxu0 0
        %3308 = vmatprep.subr.bf16.mxu0 0
        %3309 = vmatpush1.bf16.msra.mxu0 0
        %3310 = vmatprep.subr.bf16.mxu0 0
        %3311 = vmatpush1.bf16.msra.mxu0 0
        %3312 = vmatprep.subr.bf16.mxu0 0
        %3313 = vmatpush1.bf16.msra.mxu0 0
        %3314 = vmatprep.subr.bf16.mxu0 0
        %3315 = vmatpush1.bf16.msra.mxu0 0
        %3316 = vmatprep.subr.bf16.mxu0 0
        %3317 = vmatpush1.bf16.msra.mxu0 0
        %3318 = vmatprep.subr.bf16.mxu0 0
        %3319 = vmatpush1.bf16.msra.mxu0 0
        %3320 = vmatprep.subr.bf16.mxu0 0
        %3321 = vmatpush1.bf16.msra.mxu0 0
        %3322 = vmatprep.subr.bf16.mxu0 0
        %3323 = vmatpush1.bf16.msra.mxu0 0
        %3324 = vmatprep.subr.bf16.mxu0 0
        %3325 = vmatpush1.bf16.msra.mxu0 0
        %3326 = vmatprep.subr.bf16.mxu0 0
        %3327 = vmatpush1.bf16.msra.mxu0 0
        %3328 = vmatprep.subr.bf16.mxu0 0
        %3329 = vmatpush1.bf16.msra.mxu0 0
        %3330 = vmatprep.subr.bf16.mxu0 0
        %3331 = vmatpush1.bf16.msra.mxu0 0
        %3332 = vmatprep.subr.bf16.mxu0 0
        %3333 = vmatpush1.bf16.msra.mxu0 0
        %3334 = vmatprep.mubr.bf16.mxu0 0
        %3335 = vmatmul.mubr.bf16.gmra.mrb[0].mxu0 %v3300
        %v3336 = vpop.f32.mrb[0].mxu0
        %v3337 = vadd.f32 0.0, %v3336
        %v3338 = vpop.f32.mrb[0].mxu0
        %v3339 = vpop.f32.mrb[0].mxu0
        %v3340 = vpop.f32.mrb[0].mxu0
        %3341 = vdwg.mxu0
        %3342 = vrot.lane.b32.xlu0 %v3019, 80
        %v3343 = vpop.permute.xlu0 %3342
        %3344 = vrot.lane.b32.xlu0 %v3020, 80
        %v3345 = vpop.permute.xlu0 %3344
        %v3347 = vsel %vm1616, %v3343, 0
        %v3350 = vsel %vm1616, %v3345, 0
        %3352 = vmatprep.subr.bf16.mxu0 0
        %3353 = vmatpush1.bf16.xpose.msra.mxu0 %v3350
        %3354 = vmatprep.subr.bf16.mxu0 0
        %3355 = vmatpush1.bf16.xpose.msra.mxu0 0
        %3356 = vmatprep.subr.bf16.mxu0 0
        %3357 = vmatpush1.bf16.xpose.msra.mxu0 0
        %3358 = vmatprep.subr.bf16.mxu0 0
        %3359 = vmatpush1.bf16.xpose.msra.mxu0 0
        %3360 = vmatprep.subr.bf16.mxu0 0
        %3361 = vmatpush1.bf16.xpose.msra.mxu0 0
        %3362 = vmatprep.subr.bf16.mxu0 0
        %3363 = vmatpush1.bf16.xpose.msra.mxu0 0
        %3364 = vmatprep.subr.bf16.mxu0 0
        %3365 = vmatpush1.bf16.xpose.msra.mxu0 0
        %3366 = vmatprep.subr.bf16.mxu0 0
        %3367 = vmatpush1.bf16.xpose.msra.mxu0 0
        %3368 = vmatprep.subr.bf16.mxu0 0
        %3369 = vmatpush1.bf16.xpose.msra.mxu0 0
        %3370 = vmatprep.subr.bf16.mxu0 0
        %3371 = vmatpush1.bf16.xpose.msra.mxu0 0
        %3372 = vmatprep.subr.bf16.mxu0 0
        %3373 = vmatpush1.bf16.xpose.msra.mxu0 0
        %3374 = vmatprep.subr.bf16.mxu0 0
        %3375 = vmatpush1.bf16.xpose.msra.mxu0 0
        %3376 = vmatprep.subr.bf16.mxu0 0
        %3377 = vmatpush1.bf16.xpose.msra.mxu0 0
        %3378 = vmatprep.subr.bf16.mxu0 0
        %3379 = vmatpush1.bf16.xpose.msra.mxu0 0
        %3380 = vmatprep.subr.bf16.mxu0 0
        %3381 = vmatpush1.bf16.xpose.msra.mxu0 0
        %3382 = vmatprep.subr.bf16.mxu0 0
        %3383 = vmatpush1.bf16.xpose.msra.mxu0 0
        %3384 = vmatprep.mubr.bf16.mxu0 0
        %3385 = vmatmul.mubr.bf16.gmra.mrb[0].mxu0 %v3347
        %v3386 = vpop.f32.mrb[0].mxu0
        %v3387 = vadd.f32 0.0, %v3386
        %v3388 = vpop.f32.mrb[0].mxu0
        %v3389 = vpop.f32.mrb[0].mxu0
        %v3390 = vpop.f32.mrb[0].mxu0
        %3391 = vdwg.mxu0
        %v3392 = vsel %vm1616, %v3387, -inf
        %3393 = vmax.xlane.f32.xlu0 %v3392
        %v3394 = vpop.xlane.xlu0 %3393
        %v3395 = vsub.f32 %v3387, %v3394
        %v3396 = vmul.f32 %v3395, 1.442695
        %v3397 = vpow.pop %v3396
        %v3398 = vsel %vm1616, %v3397, 0.0
        %3399 = vadd.xlane.f32.xlu0 %v3398
        %v3400 = vpop.xlane.xlu0 %3399
        %v3401 = vrcp.pop %v3400
        %v3402 = vmul.f32 %v3397, %v3401
        %v3403 = vpack.c.bf16 %v3402, %v3402
        %3404 = vrot.lane.b32.xlu0 %v3021, 80
        %v3405 = vpop.permute.xlu0 %3404
        %v3408 = vsel %vm1616, %v3403, 0
        %3410 = vmatprep.subr.bf16.mxu0 0
        %3411 = vmatpush1.bf16.msra.mxu0 %v3405
        %3412 = vmatprep.subr.bf16.mxu0 0
        %3413 = vmatpush1.bf16.msra.mxu0 0
        %3414 = vmatprep.subr.bf16.mxu0 0
        %3415 = vmatpush1.bf16.msra.mxu0 0
        %3416 = vmatprep.subr.bf16.mxu0 0
        %3417 = vmatpush1.bf16.msra.mxu0 0
        %3418 = vmatprep.subr.bf16.mxu0 0
        %3419 = vmatpush1.bf16.msra.mxu0 0
        %3420 = vmatprep.subr.bf16.mxu0 0
        %3421 = vmatpush1.bf16.msra.mxu0 0
        %3422 = vmatprep.subr.bf16.mxu0 0
        %3423 = vmatpush1.bf16.msra.mxu0 0
        %3424 = vmatprep.subr.bf16.mxu0 0
        %3425 = vmatpush1.bf16.msra.mxu0 0
        %3426 = vmatprep.subr.bf16.mxu0 0
        %3427 = vmatpush1.bf16.msra.mxu0 0
        %3428 = vmatprep.subr.bf16.mxu0 0
        %3429 = vmatpush1.bf16.msra.mxu0 0
        %3430 = vmatprep.subr.bf16.mxu0 0
        %3431 = vmatpush1.bf16.msra.mxu0 0
        %3432 = vmatprep.subr.bf16.mxu0 0
        %3433 = vmatpush1.bf16.msra.mxu0 0
        %3434 = vmatprep.subr.bf16.mxu0 0
        %3435 = vmatpush1.bf16.msra.mxu0 0
        %3436 = vmatprep.subr.bf16.mxu0 0
        %3437 = vmatpush1.bf16.msra.mxu0 0
        %3438 = vmatprep.subr.bf16.mxu0 0
        %3439 = vmatpush1.bf16.msra.mxu0 0
        %3440 = vmatprep.subr.bf16.mxu0 0
        %3441 = vmatpush1.bf16.msra.mxu0 0
        %3442 = vmatprep.mubr.bf16.mxu0 0
        %3443 = vmatmul.mubr.bf16.gmra.mrb[0].mxu0 %v3408
        %v3444 = vpop.f32.mrb[0].mxu0
        %v3445 = vadd.f32 0.0, %v3444
        %v3446 = vpop.f32.mrb[0].mxu0
        %v3447 = vpop.f32.mrb[0].mxu0
        %v3448 = vpop.f32.mrb[0].mxu0
        %3449 = vdwg.mxu0
        %3450 = vrot.lane.b32.xlu0 %v3019, 64
        %v3451 = vpop.permute.xlu0 %3450
        %3452 = vrot.lane.b32.xlu0 %v3020, 64
        %v3453 = vpop.permute.xlu0 %3452
        %v3455 = vsel %vm1616, %v3451, 0
        %v3458 = vsel %vm1616, %v3453, 0
        %3460 = vmatprep.subr.bf16.mxu0 0
        %3461 = vmatpush1.bf16.xpose.msra.mxu0 %v3458
        %3462 = vmatprep.subr.bf16.mxu0 0
        %3463 = vmatpush1.bf16.xpose.msra.mxu0 0
        %3464 = vmatprep.subr.bf16.mxu0 0
        %3465 = vmatpush1.bf16.xpose.msra.mxu0 0
        %3466 = vmatprep.subr.bf16.mxu0 0
        %3467 = vmatpush1.bf16.xpose.msra.mxu0 0
        %3468 = vmatprep.subr.bf16.mxu0 0
        %3469 = vmatpush1.bf16.xpose.msra.mxu0 0
        %3470 = vmatprep.subr.bf16.mxu0 0
        %3471 = vmatpush1.bf16.xpose.msra.mxu0 0
        %3472 = vmatprep.subr.bf16.mxu0 0
        %3473 = vmatpush1.bf16.xpose.msra.mxu0 0
        %3474 = vmatprep.subr.bf16.mxu0 0
        %3475 = vmatpush1.bf16.xpose.msra.mxu0 0
        %3476 = vmatprep.subr.bf16.mxu0 0
        %3477 = vmatpush1.bf16.xpose.msra.mxu0 0
        %3478 = vmatprep.subr.bf16.mxu0 0
        %3479 = vmatpush1.bf16.xpose.msra.mxu0 0
        %3480 = vmatprep.subr.bf16.mxu0 0
        %3481 = vmatpush1.bf16.xpose.msra.mxu0 0
        %3482 = vmatprep.subr.bf16.mxu0 0
        %3483 = vmatpush1.bf16.xpose.msra.mxu0 0
        %3484 = vmatprep.subr.bf16.mxu0 0
        %3485 = vmatpush1.bf16.xpose.msra.mxu0 0
        %3486 = vmatprep.subr.bf16.mxu0 0
        %3487 = vmatpush1.bf16.xpose.msra.mxu0 0
        %3488 = vmatprep.subr.bf16.mxu0 0
        %3489 = vmatpush1.bf16.xpose.msra.mxu0 0
        %3490 = vmatprep.subr.bf16.mxu0 0
        %3491 = vmatpush1.bf16.xpose.msra.mxu0 0
        %3492 = vmatprep.mubr.bf16.mxu0 0
        %3493 = vmatmul.mubr.bf16.gmra.mrb[0].mxu0 %v3455
        %v3494 = vpop.f32.mrb[0].mxu0
        %v3495 = vadd.f32 0.0, %v3494
        %v3496 = vpop.f32.mrb[0].mxu0
        %v3497 = vpop.f32.mrb[0].mxu0
        %v3498 = vpop.f32.mrb[0].mxu0
        %3499 = vdwg.mxu0
        %v3500 = vsel %vm1616, %v3495, -inf
        %3501 = vmax.xlane.f32.xlu0 %v3500
        %v3502 = vpop.xlane.xlu0 %3501
        %v3503 = vsub.f32 %v3495, %v3502
        %v3504 = vmul.f32 %v3503, 1.442695
        %v3505 = vpow.pop %v3504
        %v3506 = vsel %vm1616, %v3505, 0.0
        %3507 = vadd.xlane.f32.xlu0 %v3506
        %v3508 = vpop.xlane.xlu0 %3507
        %v3509 = vrcp.pop %v3508
        %v3510 = vmul.f32 %v3505, %v3509
        %v3511 = vpack.c.bf16 %v3510, %v3510
        %3512 = vrot.lane.b32.xlu0 %v3021, 64
        %v3513 = vpop.permute.xlu0 %3512
        %v3516 = vsel %vm1616, %v3511, 0
        %3518 = vmatprep.subr.bf16.mxu0 0
        %3519 = vmatpush1.bf16.msra.mxu0 %v3513
        %3520 = vmatprep.subr.bf16.mxu0 0
        %3521 = vmatpush1.bf16.msra.mxu0 0
        %3522 = vmatprep.subr.bf16.mxu0 0
        %3523 = vmatpush1.bf16.msra.mxu0 0
        %3524 = vmatprep.subr.bf16.mxu0 0
        %3525 = vmatpush1.bf16.msra.mxu0 0
        %3526 = vmatprep.subr.bf16.mxu0 0
        %3527 = vmatpush1.bf16.msra.mxu0 0
        %3528 = vmatprep.subr.bf16.mxu0 0
        %3529 = vmatpush1.bf16.msra.mxu0 0
        %3530 = vmatprep.subr.bf16.mxu0 0
        %3531 = vmatpush1.bf16.msra.mxu0 0
        %3532 = vmatprep.subr.bf16.mxu0 0
        %3533 = vmatpush1.bf16.msra.mxu0 0
        %3534 = vmatprep.subr.bf16.mxu0 0
        %3535 = vmatpush1.bf16.msra.mxu0 0
        %3536 = vmatprep.subr.bf16.mxu0 0
        %3537 = vmatpush1.bf16.msra.mxu0 0
        %3538 = vmatprep.subr.bf16.mxu0 0
        %3539 = vmatpush1.bf16.msra.mxu0 0
        %3540 = vmatprep.subr.bf16.mxu0 0
        %3541 = vmatpush1.bf16.msra.mxu0 0
        %3542 = vmatprep.subr.bf16.mxu0 0
        %3543 = vmatpush1.bf16.msra.mxu0 0
        %3544 = vmatprep.subr.bf16.mxu0 0
        %3545 = vmatpush1.bf16.msra.mxu0 0
        %3546 = vmatprep.subr.bf16.mxu0 0
        %3547 = vmatpush1.bf16.msra.mxu0 0
        %3548 = vmatprep.subr.bf16.mxu0 0
        %3549 = vmatpush1.bf16.msra.mxu0 0
        %3550 = vmatprep.mubr.bf16.mxu0 0
        %3551 = vmatmul.mubr.bf16.gmra.mrb[0].mxu0 %v3516
        %v3552 = vpop.f32.mrb[0].mxu0
        %v3553 = vadd.f32 0.0, %v3552
        %v3554 = vpop.f32.mrb[0].mxu0
        %v3555 = vpop.f32.mrb[0].mxu0
        %v3556 = vpop.f32.mrb[0].mxu0
        %3557 = vdwg.mxu0
        %3558 = vrot.lane.b32.xlu0 %v3019, 48
        %v3559 = vpop.permute.xlu0 %3558
        %3560 = vrot.lane.b32.xlu0 %v3020, 48
        %v3561 = vpop.permute.xlu0 %3560
        %v3563 = vsel %vm1616, %v3559, 0
        %v3566 = vsel %vm1616, %v3561, 0
        %3568 = vmatprep.subr.bf16.mxu0 0
        %3569 = vmatpush1.bf16.xpose.msra.mxu0 %v3566
        %3570 = vmatprep.subr.bf16.mxu0 0
        %3571 = vmatpush1.bf16.xpose.msra.mxu0 0
        %3572 = vmatprep.subr.bf16.mxu0 0
        %3573 = vmatpush1.bf16.xpose.msra.mxu0 0
        %3574 = vmatprep.subr.bf16.mxu0 0
        %3575 = vmatpush1.bf16.xpose.msra.mxu0 0
        %3576 = vmatprep.subr.bf16.mxu0 0
        %3577 = vmatpush1.bf16.xpose.msra.mxu0 0
        %3578 = vmatprep.subr.bf16.mxu0 0
        %3579 = vmatpush1.bf16.xpose.msra.mxu0 0
        %3580 = vmatprep.subr.bf16.mxu0 0
        %3581 = vmatpush1.bf16.xpose.msra.mxu0 0
        %3582 = vmatprep.subr.bf16.mxu0 0
        %3583 = vmatpush1.bf16.xpose.msra.mxu0 0
        %3584 = vmatprep.subr.bf16.mxu0 0
        %3585 = vmatpush1.bf16.xpose.msra.mxu0 0
        %3586 = vmatprep.subr.bf16.mxu0 0
        %3587 = vmatpush1.bf16.xpose.msra.mxu0 0
        %3588 = vmatprep.subr.bf16.mxu0 0
        %3589 = vmatpush1.bf16.xpose.msra.mxu0 0
        %3590 = vmatprep.subr.bf16.mxu0 0
        %3591 = vmatpush1.bf16.xpose.msra.mxu0 0
        %3592 = vmatprep.subr.bf16.mxu0 0
        %3593 = vmatpush1.bf16.xpose.msra.mxu0 0
        %3594 = vmatprep.subr.bf16.mxu0 0
        %3595 = vmatpush1.bf16.xpose.msra.mxu0 0
        %3596 = vmatprep.subr.bf16.mxu0 0
        %3597 = vmatpush1.bf16.xpose.msra.mxu0 0
        %3598 = vmatprep.subr.bf16.mxu0 0
        %3599 = vmatpush1.bf16.xpose.msra.mxu0 0
        %3600 = vmatprep.mubr.bf16.mxu0 0
        %3601 = vmatmul.mubr.bf16.gmra.mrb[0].mxu0 %v3563
        %v3602 = vpop.f32.mrb[0].mxu0
        %v3603 = vadd.f32 0.0, %v3602
        %v3604 = vpop.f32.mrb[0].mxu0
        %v3605 = vpop.f32.mrb[0].mxu0
        %v3606 = vpop.f32.mrb[0].mxu0
        %3607 = vdwg.mxu0
        %v3608 = vsel %vm1616, %v3603, -inf
        %3609 = vmax.xlane.f32.xlu0 %v3608
        %v3610 = vpop.xlane.xlu0 %3609
        %v3611 = vsub.f32 %v3603, %v3610
        %v3612 = vmul.f32 %v3611, 1.442695
        %v3613 = vpow.pop %v3612
        %v3614 = vsel %vm1616, %v3613, 0.0
        %3615 = vadd.xlane.f32.xlu0 %v3614
        %v3616 = vpop.xlane.xlu0 %3615
        %v3617 = vrcp.pop %v3616
        %v3618 = vmul.f32 %v3613, %v3617
        %v3619 = vpack.c.bf16 %v3618, %v3618
        %3620 = vrot.lane.b32.xlu0 %v3021, 48
        %v3621 = vpop.permute.xlu0 %3620
        %v3624 = vsel %vm1616, %v3619, 0
        %3626 = vmatprep.subr.bf16.mxu0 0
        %3627 = vmatpush1.bf16.msra.mxu0 %v3621
        %3628 = vmatprep.subr.bf16.mxu0 0
        %3629 = vmatpush1.bf16.msra.mxu0 0
        %3630 = vmatprep.subr.bf16.mxu0 0
        %3631 = vmatpush1.bf16.msra.mxu0 0
        %3632 = vmatprep.subr.bf16.mxu0 0
        %3633 = vmatpush1.bf16.msra.mxu0 0
        %3634 = vmatprep.subr.bf16.mxu0 0
        %3635 = vmatpush1.bf16.msra.mxu0 0
        %3636 = vmatprep.subr.bf16.mxu0 0
        %3637 = vmatpush1.bf16.msra.mxu0 0
        %3638 = vmatprep.subr.bf16.mxu0 0
        %3639 = vmatpush1.bf16.msra.mxu0 0
        %3640 = vmatprep.subr.bf16.mxu0 0
        %3641 = vmatpush1.bf16.msra.mxu0 0
        %3642 = vmatprep.subr.bf16.mxu0 0
        %3643 = vmatpush1.bf16.msra.mxu0 0
        %3644 = vmatprep.subr.bf16.mxu0 0
        %3645 = vmatpush1.bf16.msra.mxu0 0
        %3646 = vmatprep.subr.bf16.mxu0 0
        %3647 = vmatpush1.bf16.msra.mxu0 0
        %3648 = vmatprep.subr.bf16.mxu0 0
        %3649 = vmatpush1.bf16.msra.mxu0 0
        %3650 = vmatprep.subr.bf16.mxu0 0
        %3651 = vmatpush1.bf16.msra.mxu0 0
        %3652 = vmatprep.subr.bf16.mxu0 0
        %3653 = vmatpush1.bf16.msra.mxu0 0
        %3654 = vmatprep.subr.bf16.mxu0 0
        %3655 = vmatpush1.bf16.msra.mxu0 0
        %3656 = vmatprep.subr.bf16.mxu0 0
        %3657 = vmatpush1.bf16.msra.mxu0 0
        %3658 = vmatprep.mubr.bf16.mxu0 0
        %3659 = vmatmul.mubr.bf16.gmra.mrb[0].mxu0 %v3624
        %v3660 = vpop.f32.mrb[0].mxu0
        %v3661 = vadd.f32 0.0, %v3660
        %v3662 = vpop.f32.mrb[0].mxu0
        %v3663 = vpop.f32.mrb[0].mxu0
        %v3664 = vpop.f32.mrb[0].mxu0
        %3665 = vdwg.mxu0
        %3666 = vrot.lane.b32.xlu0 %v3019, 32
        %v3667 = vpop.permute.xlu0 %3666
        %3668 = vrot.lane.b32.xlu0 %v3020, 32
        %v3669 = vpop.permute.xlu0 %3668
        %v3671 = vsel %vm1616, %v3667, 0
        %v3674 = vsel %vm1616, %v3669, 0
        %3676 = vmatprep.subr.bf16.mxu0 0
        %3677 = vmatpush1.bf16.xpose.msra.mxu0 %v3674
        %3678 = vmatprep.subr.bf16.mxu0 0
        %3679 = vmatpush1.bf16.xpose.msra.mxu0 0
        %3680 = vmatprep.subr.bf16.mxu0 0
        %3681 = vmatpush1.bf16.xpose.msra.mxu0 0
        %3682 = vmatprep.subr.bf16.mxu0 0
        %3683 = vmatpush1.bf16.xpose.msra.mxu0 0
        %3684 = vmatprep.subr.bf16.mxu0 0
        %3685 = vmatpush1.bf16.xpose.msra.mxu0 0
        %3686 = vmatprep.subr.bf16.mxu0 0
        %3687 = vmatpush1.bf16.xpose.msra.mxu0 0
        %3688 = vmatprep.subr.bf16.mxu0 0
        %3689 = vmatpush1.bf16.xpose.msra.mxu0 0
        %3690 = vmatprep.subr.bf16.mxu0 0
        %3691 = vmatpush1.bf16.xpose.msra.mxu0 0
        %3692 = vmatprep.subr.bf16.mxu0 0
        %3693 = vmatpush1.bf16.xpose.msra.mxu0 0
        %3694 = vmatprep.subr.bf16.mxu0 0
        %3695 = vmatpush1.bf16.xpose.msra.mxu0 0
        %3696 = vmatprep.subr.bf16.mxu0 0
        %3697 = vmatpush1.bf16.xpose.msra.mxu0 0
        %3698 = vmatprep.subr.bf16.mxu0 0
        %3699 = vmatpush1.bf16.xpose.msra.mxu0 0
        %3700 = vmatprep.subr.bf16.mxu0 0
        %3701 = vmatpush1.bf16.xpose.msra.mxu0 0
        %3702 = vmatprep.subr.bf16.mxu0 0
        %3703 = vmatpush1.bf16.xpose.msra.mxu0 0
        %3704 = vmatprep.subr.bf16.mxu0 0
        %3705 = vmatpush1.bf16.xpose.msra.mxu0 0
        %3706 = vmatprep.subr.bf16.mxu0 0
        %3707 = vmatpush1.bf16.xpose.msra.mxu0 0
        %3708 = vmatprep.mubr.bf16.mxu0 0
        %3709 = vmatmul.mubr.bf16.gmra.mrb[0].mxu0 %v3671
        %v3710 = vpop.f32.mrb[0].mxu0
        %v3711 = vadd.f32 0.0, %v3710
        %v3712 = vpop.f32.mrb[0].mxu0
        %v3713 = vpop.f32.mrb[0].mxu0
        %v3714 = vpop.f32.mrb[0].mxu0
        %3715 = vdwg.mxu0
        %v3716 = vsel %vm1616, %v3711, -inf
        %3717 = vmax.xlane.f32.xlu0 %v3716
        %v3718 = vpop.xlane.xlu0 %3717
        %v3719 = vsub.f32 %v3711, %v3718
        %v3720 = vmul.f32 %v3719, 1.442695
        %v3721 = vpow.pop %v3720
        %v3722 = vsel %vm1616, %v3721, 0.0
        %3723 = vadd.xlane.f32.xlu0 %v3722
        %v3724 = vpop.xlane.xlu0 %3723
        %v3725 = vrcp.pop %v3724
        %v3726 = vmul.f32 %v3721, %v3725
        %v3727 = vpack.c.bf16 %v3726, %v3726
        %3728 = vrot.lane.b32.xlu0 %v3021, 32
        %v3729 = vpop.permute.xlu0 %3728
        %v3732 = vsel %vm1616, %v3727, 0
        %3734 = vmatprep.subr.bf16.mxu0 0
        %3735 = vmatpush1.bf16.msra.mxu0 %v3729
        %3736 = vmatprep.subr.bf16.mxu0 0
        %3737 = vmatpush1.bf16.msra.mxu0 0
        %3738 = vmatprep.subr.bf16.mxu0 0
        %3739 = vmatpush1.bf16.msra.mxu0 0
        %3740 = vmatprep.subr.bf16.mxu0 0
        %3741 = vmatpush1.bf16.msra.mxu0 0
        %3742 = vmatprep.subr.bf16.mxu0 0
        %3743 = vmatpush1.bf16.msra.mxu0 0
        %3744 = vmatprep.subr.bf16.mxu0 0
        %3745 = vmatpush1.bf16.msra.mxu0 0
        %3746 = vmatprep.subr.bf16.mxu0 0
        %3747 = vmatpush1.bf16.msra.mxu0 0
        %3748 = vmatprep.subr.bf16.mxu0 0
        %3749 = vmatpush1.bf16.msra.mxu0 0
        %3750 = vmatprep.subr.bf16.mxu0 0
        %3751 = vmatpush1.bf16.msra.mxu0 0
        %3752 = vmatprep.subr.bf16.mxu0 0
        %3753 = vmatpush1.bf16.msra.mxu0 0
        %3754 = vmatprep.subr.bf16.mxu0 0
        %3755 = vmatpush1.bf16.msra.mxu0 0
        %3756 = vmatprep.subr.bf16.mxu0 0
        %3757 = vmatpush1.bf16.msra.mxu0 0
        %3758 = vmatprep.subr.bf16.mxu0 0
        %3759 = vmatpush1.bf16.msra.mxu0 0
        %3760 = vmatprep.subr.bf16.mxu0 0
        %3761 = vmatpush1.bf16.msra.mxu0 0
        %3762 = vmatprep.subr.bf16.mxu0 0
        %3763 = vmatpush1.bf16.msra.mxu0 0
        %3764 = vmatprep.subr.bf16.mxu0 0
        %3765 = vmatpush1.bf16.msra.mxu0 0
        %3766 = vmatprep.mubr.bf16.mxu0 0
        %3767 = vmatmul.mubr.bf16.gmra.mrb[0].mxu0 %v3732
        %v3768 = vpop.f32.mrb[0].mxu0
        %v3769 = vadd.f32 0.0, %v3768
        %v3770 = vpop.f32.mrb[0].mxu0
        %v3771 = vpop.f32.mrb[0].mxu0
        %v3772 = vpop.f32.mrb[0].mxu0
        %3773 = vdwg.mxu0
        %3774 = vrot.lane.b32.xlu0 %v3019, 16
        %v3775 = vpop.permute.xlu0 %3774
        %3776 = vrot.lane.b32.xlu0 %v3020, 16
        %v3777 = vpop.permute.xlu0 %3776
        %v3779 = vsel %vm1616, %v3775, 0
        %v3782 = vsel %vm1616, %v3777, 0
        %3784 = vmatprep.subr.bf16.mxu0 0
        %3785 = vmatpush1.bf16.xpose.msra.mxu0 %v3782
        %3786 = vmatprep.subr.bf16.mxu0 0
        %3787 = vmatpush1.bf16.xpose.msra.mxu0 0
        %3788 = vmatprep.subr.bf16.mxu0 0
        %3789 = vmatpush1.bf16.xpose.msra.mxu0 0
        %3790 = vmatprep.subr.bf16.mxu0 0
        %3791 = vmatpush1.bf16.xpose.msra.mxu0 0
        %3792 = vmatprep.subr.bf16.mxu0 0
        %3793 = vmatpush1.bf16.xpose.msra.mxu0 0
        %3794 = vmatprep.subr.bf16.mxu0 0
        %3795 = vmatpush1.bf16.xpose.msra.mxu0 0
        %3796 = vmatprep.subr.bf16.mxu0 0
        %3797 = vmatpush1.bf16.xpose.msra.mxu0 0
        %3798 = vmatprep.subr.bf16.mxu0 0
        %3799 = vmatpush1.bf16.xpose.msra.mxu0 0
        %3800 = vmatprep.subr.bf16.mxu0 0
        %3801 = vmatpush1.bf16.xpose.msra.mxu0 0
        %3802 = vmatprep.subr.bf16.mxu0 0
        %3803 = vmatpush1.bf16.xpose.msra.mxu0 0
        %3804 = vmatprep.subr.bf16.mxu0 0
        %3805 = vmatpush1.bf16.xpose.msra.mxu0 0
        %3806 = vmatprep.subr.bf16.mxu0 0
        %3807 = vmatpush1.bf16.xpose.msra.mxu0 0
        %3808 = vmatprep.subr.bf16.mxu0 0
        %3809 = vmatpush1.bf16.xpose.msra.mxu0 0
        %3810 = vmatprep.subr.bf16.mxu0 0
        %3811 = vmatpush1.bf16.xpose.msra.mxu0 0
        %3812 = vmatprep.subr.bf16.mxu0 0
        %3813 = vmatpush1.bf16.xpose.msra.mxu0 0
        %3814 = vmatprep.subr.bf16.mxu0 0
        %3815 = vmatpush1.bf16.xpose.msra.mxu0 0
        %3816 = vmatprep.mubr.bf16.mxu0 0
        %3817 = vmatmul.mubr.bf16.gmra.mrb[0].mxu0 %v3779
        %v3818 = vpop.f32.mrb[0].mxu0
        %v3819 = vadd.f32 0.0, %v3818
        %v3820 = vpop.f32.mrb[0].mxu0
        %v3821 = vpop.f32.mrb[0].mxu0
        %v3822 = vpop.f32.mrb[0].mxu0
        %3823 = vdwg.mxu0
        %v3824 = vsel %vm1616, %v3819, -inf
        %3825 = vmax.xlane.f32.xlu0 %v3824
        %v3826 = vpop.xlane.xlu0 %3825
        %v3827 = vsub.f32 %v3819, %v3826
        %v3828 = vmul.f32 %v3827, 1.442695
        %v3829 = vpow.pop %v3828
        %v3830 = vsel %vm1616, %v3829, 0.0
        %3831 = vadd.xlane.f32.xlu0 %v3830
        %v3832 = vpop.xlane.xlu0 %3831
        %v3833 = vrcp.pop %v3832
        %v3834 = vmul.f32 %v3829, %v3833
        %v3835 = vpack.c.bf16 %v3834, %v3834
        %3836 = vrot.lane.b32.xlu0 %v3021, 16
        %v3837 = vpop.permute.xlu0 %3836
        %v3840 = vsel %vm1616, %v3835, 0
        %3842 = vmatprep.subr.bf16.mxu0 0
        %3843 = vmatpush1.bf16.msra.mxu0 %v3837
        %3844 = vmatprep.subr.bf16.mxu0 0
        %3845 = vmatpush1.bf16.msra.mxu0 0
        %3846 = vmatprep.subr.bf16.mxu0 0
        %3847 = vmatpush1.bf16.msra.mxu0 0
        %3848 = vmatprep.subr.bf16.mxu0 0
        %3849 = vmatpush1.bf16.msra.mxu0 0
        %3850 = vmatprep.subr.bf16.mxu0 0
        %3851 = vmatpush1.bf16.msra.mxu0 0
        %3852 = vmatprep.subr.bf16.mxu0 0
        %3853 = vmatpush1.bf16.msra.mxu0 0
        %3854 = vmatprep.subr.bf16.mxu0 0
        %3855 = vmatpush1.bf16.msra.mxu0 0
        %3856 = vmatprep.subr.bf16.mxu0 0
        %3857 = vmatpush1.bf16.msra.mxu0 0
        %3858 = vmatprep.subr.bf16.mxu0 0
        %3859 = vmatpush1.bf16.msra.mxu0 0
        %3860 = vmatprep.subr.bf16.mxu0 0
        %3861 = vmatpush1.bf16.msra.mxu0 0
        %3862 = vmatprep.subr.bf16.mxu0 0
        %3863 = vmatpush1.bf16.msra.mxu0 0
        %3864 = vmatprep.subr.bf16.mxu0 0
        %3865 = vmatpush1.bf16.msra.mxu0 0
        %3866 = vmatprep.subr.bf16.mxu0 0
        %3867 = vmatpush1.bf16.msra.mxu0 0
        %3868 = vmatprep.subr.bf16.mxu0 0
        %3869 = vmatpush1.bf16.msra.mxu0 0
        %3870 = vmatprep.subr.bf16.mxu0 0
        %3871 = vmatpush1.bf16.msra.mxu0 0
        %3872 = vmatprep.subr.bf16.mxu0 0
        %3873 = vmatpush1.bf16.msra.mxu0 0
        %3874 = vmatprep.mubr.bf16.mxu0 0
        %3875 = vmatmul.mubr.bf16.gmra.mrb[0].mxu0 %v3840
        %v3876 = vpop.f32.mrb[0].mxu0
        %v3877 = vadd.f32 0.0, %v3876
        %v3878 = vpop.f32.mrb[0].mxu0
        %v3879 = vpop.f32.mrb[0].mxu0
        %v3880 = vpop.f32.mrb[0].mxu0
        %3881 = vdwg.mxu0
        %3883 = vrot.lane.b32.xlu0 %v3229, 16
        %v3884 = vpop.permute.xlu0 %3883
        %3887 = vrot.lane.b32.xlu0 %v3337, 32
        %v3888 = vpop.permute.xlu0 %3887
        %3891 = vrot.lane.b32.xlu0 %v3445, 48
        %v3892 = vpop.permute.xlu0 %3891
        %3895 = vrot.lane.b32.xlu0 %v3553, 64
        %v3896 = vpop.permute.xlu0 %3895
        %3899 = vrot.lane.b32.xlu0 %v3661, 80
        %v3900 = vpop.permute.xlu0 %3899
        %3903 = vrot.lane.b32.xlu0 %v3769, 96
        %v3904 = vpop.permute.xlu0 %3903
        %3907 = vrot.lane.b32.xlu0 %v3877, 112
        %v3908 = vpop.permute.xlu0 %3907
        %v3910 = vsel %vm1616, %v3118, %v3884
        %v3911 = vsel %vm2525, %v3910, %v3888
        %v3912 = vsel %vm2527, %v3911, %v3892
        %v3913 = vsel %vm2529, %v3912, %v3896
        %v3914 = vsel %vm2531, %v3913, %v3900
        %v3915 = vsel %vm2533, %v3914, %v3904
        %v3916 = vsel %vm2535, %v3915, %v3908
        %v3917 = vpack.c.bf16 %v3916, %v3916
        %v3919 = vlaneseq
        %v3920 = vshrl.u32 %v3919, 7
        %v3921 = vsub.s32 0, %v3920
        %v3922 = vrot.slane %v2731, %v3921
        %v3940 = vunpack.c.l.b16 %v2715
        %v3941 = vunpack.c.l.b16 %v2716
        %v3942 = vunpack.c.l.b16 %v2717
        %v3943 = vunpack.c.l.b16 %v2718
        %v3944 = vunpack.c.l.b16 %v2719
        %v3945 = vunpack.c.l.b16 %v2720
        %v3946 = vunpack.c.l.b16 %v2721
        %v3947 = vunpack.c.l.b16 %v2722
        %v3948 = vunpack.c.l.b16 %v2723
        %v3949 = vunpack.c.l.b16 %v2724
        %v3950 = vunpack.c.l.b16 %v2725
        %v3951 = vunpack.c.l.b16 %v2726
        %v3952 = vunpack.c.l.b16 %v2727
        %v3953 = vunpack.c.l.b16 %v2728
        %v3954 = vunpack.c.l.b16 %v2729
        %v3955 = vunpack.c.l.b16 %v2730
        %v3956 = vpack.c.b16 %v3941, %v3940
        %v3957 = vpack.c.b16 %v3943, %v3942
        %v3958 = vpack.c.b16 %v3945, %v3944
        %v3959 = vpack.c.b16 %v3947, %v3946
        %v3960 = vpack.c.b16 %v3949, %v3948
        %v3961 = vpack.c.b16 %v3951, %v3950
        %v3962 = vpack.c.b16 %v3953, %v3952
        %v3963 = vpack.c.b16 %v3955, %v3954
        %3972 = vmatprep.subr.bf16.mxu0 0
        %3973 = vmatpush1.bf16.msra.mxu0 %v3956
        %3974 = vmatprep.subr.bf16.mxu0 0
        %3975 = vmatpush1.bf16.msra.mxu0 %v3957
        %3976 = vmatprep.subr.bf16.mxu0 0
        %3977 = vmatpush1.bf16.msra.mxu0 %v3958
        %3978 = vmatprep.subr.bf16.mxu0 0
        %3979 = vmatpush1.bf16.msra.mxu0 %v3959
        %3980 = vmatprep.subr.bf16.mxu0 0
        %3981 = vmatpush1.bf16.msra.mxu0 %v3960
        %3982 = vmatprep.subr.bf16.mxu0 0
        %3983 = vmatpush1.bf16.msra.mxu0 %v3961
        %3984 = vmatprep.subr.bf16.mxu0 0
        %3985 = vmatpush1.bf16.msra.mxu0 %v3962
        %3986 = vmatprep.subr.bf16.mxu0 0
        %3987 = vmatpush1.bf16.msra.mxu0 %v3963
        %3988 = vmatprep.subr.bf16.mxu0 0
        %3989 = vmatpush1.bf16.msra.mxu0 0
        %3990 = vmatprep.subr.bf16.mxu0 0
        %3991 = vmatpush1.bf16.msra.mxu0 0
        %3992 = vmatprep.subr.bf16.mxu0 0
        %3993 = vmatpush1.bf16.msra.mxu0 0
        %3994 = vmatprep.subr.bf16.mxu0 0
        %3995 = vmatpush1.bf16.msra.mxu0 0
        %3996 = vmatprep.subr.bf16.mxu0 0
        %3997 = vmatpush1.bf16.msra.mxu0 0
        %3998 = vmatprep.subr.bf16.mxu0 0
        %3999 = vmatpush1.bf16.msra.mxu0 0
        %4000 = vmatprep.subr.bf16.mxu0 0
        %4001 = vmatpush1.bf16.msra.mxu0 0
        %4002 = vmatprep.subr.bf16.mxu0 0
        %4003 = vmatpush1.bf16.msra.mxu0 0
        %4004 = vmatprep.mubr.bf16.mxu0 0
        %4005 = vmatmul.mubr.bf16.gmra.mrb[0].mxu0 %v3917
        %v4006 = vpop.f32.mrb[0].mxu0
        %v4007 = vadd.f32 %v3922, %v4006
        %v4008 = vpop.f32.mrb[0].mxu0
        %v4009 = vpop.f32.mrb[0].mxu0
        %v4010 = vpop.f32.mrb[0].mxu0
        %4011 = vdwg.mxu0
        %v4012 = vadd.f32 %v2660, %v4007
        %v4013 = vld [vmem:[%s53] sm:$0x1]
        %v4014 = vld [vmem:[%s55] sm:$0x1]
        %4015 = vadd.xlane.f32.xlu0 %v4012
        %v4016 = vpop.xlane.xlu0 %4015
        %v4017 = vmul.f32 %v4016, %v2637
        %v4018 = vsub.f32 %v4012, %v4017
        %v4019 = vmul.f32 %v4018, %v4018
        %4020 = vadd.xlane.f32.xlu0 %v4019
        %v4021 = vpop.xlane.xlu0 %4020
        %v4022 = vmul.f32 %v4021, %v2637
        %v4023 = vadd.f32 %v4022, 1e-05
        %v4024 = vrsqrt.pop %v4023
        %v4025 = vmul.f32 %v4018, %v4024
        %v4027 = vlaneseq
        %v4028 = vshrl.u32 %v4027, 7
        %v4029 = vsub.s32 0, %v4028
        %v4030 = vrot.slane %v4013, %v4029
        %v4032 = vmul.f32 %v4025, %v4030
        %v4034 = vlaneseq
        %v4035 = vshrl.u32 %v4034, 7
        %v4036 = vsub.s32 0, %v4035
        %v4037 = vrot.slane %v4014, %v4036
        %v4039 = vadd.f32 %v4032, %v4037
        %v4040 = vpack.c.bf16 %v4039, %v4039
        %v4041 = vld [vmem:[#allocation28] sm:$0xff]
        %v4042 = vld [vmem:[#allocation28 + $0x8] sm:$0xff]
        %v4043 = vld [vmem:[#allocation28 + $0x10] sm:$0xff]
        %v4044 = vld [vmem:[#allocation28 + $0x18] sm:$0xff]
        %v4045 = vld [vmem:[#allocation28 + $0x20] sm:$0xff]
        %v4046 = vld [vmem:[#allocation28 + $0x28] sm:$0xff]
        %v4047 = vld [vmem:[#allocation28 + $0x30] sm:$0xff]
        %v4048 = vld [vmem:[#allocation28 + $0x38] sm:$0xff]
        %v4049 = vld [vmem:[#allocation28 + $0x40] sm:$0xff]
        %v4050 = vld [vmem:[#allocation28 + $0x48] sm:$0xff]
        %v4051 = vld [vmem:[#allocation28 + $0x50] sm:$0xff]
        %v4052 = vld [vmem:[#allocation28 + $0x58] sm:$0xff]
        %v4053 = vld [vmem:[#allocation28 + $0x60] sm:$0xff]
        %v4054 = vld [vmem:[#allocation28 + $0x68] sm:$0xff]
        %v4055 = vld [vmem:[#allocation28 + $0x70] sm:$0xff]
        %v4056 = vld [vmem:[#allocation28 + $0x78] sm:$0xff]
        %v4057 = vld [vmem:[%s43] sm:$0x3]
        %v4059 = vlaneseq
        %v4060 = vshrl.u32 %v4059, 7
        %v4061 = vsub.s32 0, %v4060
        %v4062 = vrot.slane %v4057, %v4061
        %v4063 = vlaneseq
        %v4064 = vshrl.u32 %v4063, 7
        %v4065 = vsub.s32 1, %v4064
        %v4066 = vrot.slane %v4057, %v4065
        %v4085 = vunpack.c.l.b16 %v4041
        %v4086 = vunpack.c.h.b16 %v4041
        %v4087 = vunpack.c.l.b16 %v4042
        %v4088 = vunpack.c.h.b16 %v4042
        %v4089 = vunpack.c.l.b16 %v4043
        %v4090 = vunpack.c.h.b16 %v4043
        %v4091 = vunpack.c.l.b16 %v4044
        %v4092 = vunpack.c.h.b16 %v4044
        %v4093 = vunpack.c.l.b16 %v4045
        %v4094 = vunpack.c.h.b16 %v4045
        %v4095 = vunpack.c.l.b16 %v4046
        %v4096 = vunpack.c.h.b16 %v4046
        %v4097 = vunpack.c.l.b16 %v4047
        %v4098 = vunpack.c.h.b16 %v4047
        %v4099 = vunpack.c.l.b16 %v4048
        %v4100 = vunpack.c.h.b16 %v4048
        %v4101 = vunpack.c.l.b16 %v4049
        %v4102 = vunpack.c.h.b16 %v4049
        %v4103 = vunpack.c.l.b16 %v4050
        %v4104 = vunpack.c.h.b16 %v4050
        %v4105 = vunpack.c.l.b16 %v4051
        %v4106 = vunpack.c.h.b16 %v4051
        %v4107 = vunpack.c.l.b16 %v4052
        %v4108 = vunpack.c.h.b16 %v4052
        %v4109 = vunpack.c.l.b16 %v4053
        %v4110 = vunpack.c.h.b16 %v4053
        %v4111 = vunpack.c.l.b16 %v4054
        %v4112 = vunpack.c.h.b16 %v4054
        %v4113 = vunpack.c.l.b16 %v4055
        %v4114 = vunpack.c.h.b16 %v4055
        %v4115 = vunpack.c.l.b16 %v4056
        %v4116 = vunpack.c.h.b16 %v4056
        %v4117 = vpack.c.b16 %v4087, %v4085
        %v4118 = vpack.c.b16 %v4088, %v4086
        %v4119 = vpack.c.b16 %v4091, %v4089
        %v4120 = vpack.c.b16 %v4092, %v4090
        %v4121 = vpack.c.b16 %v4095, %v4093
        %v4122 = vpack.c.b16 %v4096, %v4094
        %v4123 = vpack.c.b16 %v4099, %v4097
        %v4124 = vpack.c.b16 %v4100, %v4098
        %v4125 = vpack.c.b16 %v4103, %v4101
        %v4126 = vpack.c.b16 %v4104, %v4102
        %v4127 = vpack.c.b16 %v4107, %v4105
        %v4128 = vpack.c.b16 %v4108, %v4106
        %v4129 = vpack.c.b16 %v4111, %v4109
        %v4130 = vpack.c.b16 %v4112, %v4110
        %v4131 = vpack.c.b16 %v4115, %v4113
        %v4132 = vpack.c.b16 %v4116, %v4114
        %4149 = vmatprep.subr.bf16.mxu0 %v4118
        %4150 = vmatpush1.bf16.msra.mxu0 %v4117
        %4151 = vmatprep.subr.bf16.mxu0 %v4120
        %4152 = vmatpush1.bf16.msra.mxu0 %v4119
        %4153 = vmatprep.subr.bf16.mxu0 %v4122
        %4154 = vmatpush1.bf16.msra.mxu0 %v4121
        %4155 = vmatprep.subr.bf16.mxu0 %v4124
        %4156 = vmatpush1.bf16.msra.mxu0 %v4123
        %4157 = vmatprep.subr.bf16.mxu0 %v4126
        %4158 = vmatpush1.bf16.msra.mxu0 %v4125
        %4159 = vmatprep.subr.bf16.mxu0 %v4128
        %4160 = vmatpush1.bf16.msra.mxu0 %v4127
        %4161 = vmatprep.subr.bf16.mxu0 %v4130
        %4162 = vmatpush1.bf16.msra.mxu0 %v4129
        %4163 = vmatprep.subr.bf16.mxu0 %v4132
        %4164 = vmatpush1.bf16.msra.mxu0 %v4131
        %4165 = vmatprep.subr.bf16.mxu0 0
        %4166 = vmatpush1.bf16.msra.mxu0 0
        %4167 = vmatprep.subr.bf16.mxu0 0
        %4168 = vmatpush1.bf16.msra.mxu0 0
        %4169 = vmatprep.subr.bf16.mxu0 0
        %4170 = vmatpush1.bf16.msra.mxu0 0
        %4171 = vmatprep.subr.bf16.mxu0 0
        %4172 = vmatpush1.bf16.msra.mxu0 0
        %4173 = vmatprep.subr.bf16.mxu0 0
        %4174 = vmatpush1.bf16.msra.mxu0 0
        %4175 = vmatprep.subr.bf16.mxu0 0
        %4176 = vmatpush1.bf16.msra.mxu0 0
        %4177 = vmatprep.subr.bf16.mxu0 0
        %4178 = vmatpush1.bf16.msra.mxu0 0
        %4179 = vmatprep.subr.bf16.mxu0 0
        %4180 = vmatpush1.bf16.msra.mxu0 0
        %4181 = vmatprep.mubr.bf16.mxu0 0
        %4182 = vmatmul.mubr.bf16.gmra.mrb[0].mxu0 %v4040
        %v4183 = vpop.f32.mrb[0].mxu0
        %v4184 = vadd.f32 %v4062, %v4183
        %v4185 = vpop.f32.mrb[0].mxu0
        %v4186 = vadd.f32 %v4066, %v4185
        %v4187 = vpop.f32.mrb[0].mxu0
        %v4188 = vpop.f32.mrb[0].mxu0
        %4189 = vdwg.mxu0
        %v4190 = vmax.f32 %v4184, 0.0
        %v4191 = vmax.f32 %v4186, 0.0
        %v4192 = vpack.c.bf16 %v4190, %v4190
        %v4193 = vpack.c.bf16 %v4191, %v4191
        %v4194 = vld [vmem:[#allocation29] sm:$0xf]
        %v4195 = vld [vmem:[#allocation29 + $0x4] sm:$0xf]
        %v4196 = vld [vmem:[#allocation29 + $0x8] sm:$0xf]
        %v4197 = vld [vmem:[#allocation29 + $0xc] sm:$0xf]
        %v4198 = vld [vmem:[#allocation29 + $0x10] sm:$0xf]
        %v4199 = vld [vmem:[#allocation29 + $0x14] sm:$0xf]
        %v4200 = vld [vmem:[#allocation29 + $0x18] sm:$0xf]
        %v4201 = vld [vmem:[#allocation29 + $0x1c] sm:$0xf]
        %v4202 = vld [vmem:[#allocation29 + $0x20] sm:$0xf]
        %v4203 = vld [vmem:[#allocation29 + $0x24] sm:$0xf]
        %v4204 = vld [vmem:[#allocation29 + $0x28] sm:$0xf]
        %v4205 = vld [vmem:[#allocation29 + $0x2c] sm:$0xf]
        %v4206 = vld [vmem:[#allocation29 + $0x30] sm:$0xf]
        %v4207 = vld [vmem:[#allocation29 + $0x34] sm:$0xf]
        %v4208 = vld [vmem:[#allocation29 + $0x38] sm:$0xf]
        %v4209 = vld [vmem:[#allocation29 + $0x3c] sm:$0xf]
        %v4210 = vld [vmem:[#allocation29 + $0x40] sm:$0xf]
        %v4211 = vld [vmem:[#allocation29 + $0x44] sm:$0xf]
        %v4212 = vld [vmem:[#allocation29 + $0x48] sm:$0xf]
        %v4213 = vld [vmem:[#allocation29 + $0x4c] sm:$0xf]
        %v4214 = vld [vmem:[#allocation29 + $0x50] sm:$0xf]
        %v4215 = vld [vmem:[#allocation29 + $0x54] sm:$0xf]
        %v4216 = vld [vmem:[#allocation29 + $0x58] sm:$0xf]
        %v4217 = vld [vmem:[#allocation29 + $0x5c] sm:$0xf]
        %v4218 = vld [vmem:[#allocation29 + $0x60] sm:$0xf]
        %v4219 = vld [vmem:[#allocation29 + $0x64] sm:$0xf]
        %v4220 = vld [vmem:[#allocation29 + $0x68] sm:$0xf]
        %v4221 = vld [vmem:[#allocation29 + $0x6c] sm:$0xf]
        %v4222 = vld [vmem:[#allocation29 + $0x70] sm:$0xf]
        %v4223 = vld [vmem:[#allocation29 + $0x74] sm:$0xf]
        %v4224 = vld [vmem:[#allocation29 + $0x78] sm:$0xf]
        %v4225 = vld [vmem:[#allocation29 + $0x7c] sm:$0xf]
        %v4226 = vld [vmem:[%s47] sm:$0x1]
        %v4228 = vlaneseq
        %v4229 = vshrl.u32 %v4228, 7
        %v4230 = vsub.s32 0, %v4229
        %v4231 = vrot.slane %v4226, %v4230
        %v4265 = vunpack.c.l.b16 %v4194
        %v4266 = vunpack.c.l.b16 %v4195
        %v4267 = vunpack.c.l.b16 %v4196
        %v4268 = vunpack.c.l.b16 %v4197
        %v4269 = vunpack.c.l.b16 %v4198
        %v4270 = vunpack.c.l.b16 %v4199
        %v4271 = vunpack.c.l.b16 %v4200
        %v4272 = vunpack.c.l.b16 %v4201
        %v4273 = vunpack.c.l.b16 %v4202
        %v4274 = vunpack.c.l.b16 %v4203
        %v4275 = vunpack.c.l.b16 %v4204
        %v4276 = vunpack.c.l.b16 %v4205
        %v4277 = vunpack.c.l.b16 %v4206
        %v4278 = vunpack.c.l.b16 %v4207
        %v4279 = vunpack.c.l.b16 %v4208
        %v4280 = vunpack.c.l.b16 %v4209
        %v4281 = vunpack.c.l.b16 %v4210
        %v4282 = vunpack.c.l.b16 %v4211
        %v4283 = vunpack.c.l.b16 %v4212
        %v4284 = vunpack.c.l.b16 %v4213
        %v4285 = vunpack.c.l.b16 %v4214
        %v4286 = vunpack.c.l.b16 %v4215
        %v4287 = vunpack.c.l.b16 %v4216
        %v4288 = vunpack.c.l.b16 %v4217
        %v4289 = vunpack.c.l.b16 %v4218
        %v4290 = vunpack.c.l.b16 %v4219
        %v4291 = vunpack.c.l.b16 %v4220
        %v4292 = vunpack.c.l.b16 %v4221
        %v4293 = vunpack.c.l.b16 %v4222
        %v4294 = vunpack.c.l.b16 %v4223
        %v4295 = vunpack.c.l.b16 %v4224
        %v4296 = vunpack.c.l.b16 %v4225
        %v4297 = vpack.c.b16 %v4266, %v4265
        %v4298 = vpack.c.b16 %v4268, %v4267
        %v4299 = vpack.c.b16 %v4270, %v4269
        %v4300 = vpack.c.b16 %v4272, %v4271
        %v4301 = vpack.c.b16 %v4274, %v4273
        %v4302 = vpack.c.b16 %v4276, %v4275
        %v4303 = vpack.c.b16 %v4278, %v4277
        %v4304 = vpack.c.b16 %v4280, %v4279
        %v4305 = vpack.c.b16 %v4282, %v4281
        %v4306 = vpack.c.b16 %v4284, %v4283
        %v4307 = vpack.c.b16 %v4286, %v4285
        %v4308 = vpack.c.b16 %v4288, %v4287
        %v4309 = vpack.c.b16 %v4290, %v4289
        %v4310 = vpack.c.b16 %v4292, %v4291
        %v4311 = vpack.c.b16 %v4294, %v4293
        %v4312 = vpack.c.b16 %v4296, %v4295
        %4329 = vmatprep.subr.bf16.mxu0 0
        %4330 = vmatpush1.bf16.msra.mxu0 %v4297
        %4331 = vmatprep.subr.bf16.mxu0 0
        %4332 = vmatpush1.bf16.msra.mxu0 %v4298
        %4333 = vmatprep.subr.bf16.mxu0 0
        %4334 = vmatpush1.bf16.msra.mxu0 %v4299
        %4335 = vmatprep.subr.bf16.mxu0 0
        %4336 = vmatpush1.bf16.msra.mxu0 %v4300
        %4337 = vmatprep.subr.bf16.mxu0 0
        %4338 = vmatpush1.bf16.msra.mxu0 %v4301
        %4339 = vmatprep.subr.bf16.mxu0 0
        %4340 = vmatpush1.bf16.msra.mxu0 %v4302
        %4341 = vmatprep.subr.bf16.mxu0 0
        %4342 = vmatpush1.bf16.msra.mxu0 %v4303
        %4343 = vmatprep.subr.bf16.mxu0 0
        %4344 = vmatpush1.bf16.msra.mxu0 %v4304
        %4345 = vmatprep.subr.bf16.mxu0 0
        %4346 = vmatpush1.bf16.msra.mxu0 %v4305
        %4347 = vmatprep.subr.bf16.mxu0 0
        %4348 = vmatpush1.bf16.msra.mxu0 %v4306
        %4349 = vmatprep.subr.bf16.mxu0 0
        %4350 = vmatpush1.bf16.msra.mxu0 %v4307
        %4351 = vmatprep.subr.bf16.mxu0 0
        %4352 = vmatpush1.bf16.msra.mxu0 %v4308
        %4353 = vmatprep.subr.bf16.mxu0 0
        %4354 = vmatpush1.bf16.msra.mxu0 %v4309
        %4355 = vmatprep.subr.bf16.mxu0 0
        %4356 = vmatpush1.bf16.msra.mxu0 %v4310
        %4357 = vmatprep.subr.bf16.mxu0 0
        %4358 = vmatpush1.bf16.msra.mxu0 %v4311
        %4359 = vmatprep.subr.bf16.mxu0 0
        %4360 = vmatpush1.bf16.msra.mxu0 %v4312
        %4361 = vmatprep.mubr.bf16.mxu0 %v4193
        %4362 = vmatmul.mubr.bf16.gmra.mrb[0].mxu0 %v4192
        %v4363 = vpop.f32.mrb[0].mxu0
        %v4364 = vadd.f32 %v4231, %v4363
        %v4365 = vpop.f32.mrb[0].mxu0
        %v4366 = vpop.f32.mrb[0].mxu0
        %v4367 = vpop.f32.mrb[0].mxu0
        %4368 = vdwg.mxu0
        %v4369 = vadd.f32 %v4039, %v4364
        %v4370 = vld [vmem:[%s57] sm:$0x1]
        %v4371 = vld [vmem:[%s59] sm:$0x1]
        %4372 = vadd.xlane.f32.xlu0 %v4369
        %v4373 = vpop.xlane.xlu0 %4372
        %v4374 = vmul.f32 %v4373, %v2637
        %v4375 = vsub.f32 %v4369, %v4374
        %v4376 = vmul.f32 %v4375, %v4375
        %4377 = vadd.xlane.f32.xlu0 %v4376
        %v4378 = vpop.xlane.xlu0 %4377
        %v4379 = vmul.f32 %v4378, %v2637
        %v4380 = vadd.f32 %v4379, 1e-05
        %v4381 = vrsqrt.pop %v4380
        %v4382 = vmul.f32 %v4375, %v4381
        %v4384 = vlaneseq
        %v4385 = vshrl.u32 %v4384, 7
        %v4386 = vsub.s32 0, %v4385
        %v4387 = vrot.slane %v4370, %v4386
        %v4389 = vmul.f32 %v4382, %v4387
        %v4391 = vlaneseq
        %v4392 = vshrl.u32 %v4391, 7
        %v4393 = vsub.s32 0, %v4392
        %v4394 = vrot.slane %v4371, %v4393
        %v4396 = vadd.f32 %v4389, %v4394
        %4397 = vst [vmem:[%s1252] sm:$0xff] %v4396
        %s4398 = sand.u32 %s749, 1
        %s4399 = scalar_lea.sflag [#allocation4], %s4398
        %s4400 = sand.u32 %s749, 1
        %s4401 = smul.addr %s4400, 8
        %s4402 = scalar_lea.vmem [#allocation31], %s4401
        // Predicated region
        $region213: #{tpu_custom_call.1} parent=139 // pred_check
          %p4403 = pneg %p759
        $region214: #{tpu_custom_call.1} parent=139 // pred_check_branch
          %4405 = sbr.rel (%p4403) target = $region216
        $region215: #{tpu_custom_call.1} parent=139 // pred_region
          %s4407 = ssub.s32 128, 128
          %4408 = vsyncadd %s4399, %s4407
          %s4409 = smul.addr %s91, 128
          %s4410 = scalar_lea.hbm %s61, %s4409
          %s4412 = sshll.u32 %s4402, 4
          %s4413 = int_to_ptr.vmem [resolvable:$true] %s4412
          %4415 = dma.vmem_to_hbm [thread:$0]  %s4413, 128, %s4410, %s4399
        $region216: #{tpu_custom_call.1} parent=139 // pred_fallthru
          _
      $region140: #{tpu_custom_call.1} parent=5 // pred_fallthru
        _
      %p4416 = scmp.le.s32.totalorder 2, %s86
      // Predicated region
      $region217: #{tpu_custom_call.1} parent=5 // pred_check
        %p4417 = pneg %p4416
      $region218: #{tpu_custom_call.1} parent=5 // pred_check_branch
        %4419 = sbr.rel (%p4417) target = $region220
      $region219: #{tpu_custom_call.1} parent=5 // pred_region
        %s4420 = ssub.s32 %s86, 2
        // Predicated region
        $region221: #{tpu_custom_call.1} parent=219 // pred_check
          %p4421 = pneg %p765
        $region222: #{tpu_custom_call.1} parent=219 // pred_check_branch
          %4423 = sbr.rel (%p4421) target = $region224
        $region223: #{tpu_custom_call.1} parent=219 // pred_region
          %s4424 = sand.u32 %s750, 1
          %s4425 = scalar_lea.sflag [#allocation4], %s4424
          %s4426 = sand.u32 %s750, 1
          %s4427 = smul.addr %s4426, 8
          %s4428 = scalar_lea.vmem [#allocation31], %s4427
          %4429 = dma.done %s4425, 128
        $region224: #{tpu_custom_call.1} parent=219 // pred_fallthru
          _
      $region220: #{tpu_custom_call.1} parent=5 // pred_fallthru
        _
    $region6: #{tpu_custom_call.1} parent=1 // loop_footer
      %s90 = sadd.s32 1, %s86
    $region7: #{tpu_custom_call.1} parent=1 // loop_footer_branch
      %85 = sbr.rel target = $region3
    $region8: #{tpu_custom_call.1} parent=1 // loop_exit
      _
    %4430 = vsyncpa [#allocation3], 1
    %s4431 = scalar_lea.sflag [#allocation3], 1
    %4432 = vsyncpa %s4431, 1
    %4433 = vsyncpa [#allocation6], 1
    %s4434 = scalar_lea.sflag [#allocation6], 1
    %4435 = vsyncpa %s4434, 1
    %4436 = vsyncpa [#allocation9], 1
    %s4437 = scalar_lea.sflag [#allocation9], 1
    %4438 = vsyncpa %s4437, 1
    %4439 = vsyncpa [#allocation12], 1
    %4440 = vsyncpa [#allocation15], 1
    %4441 = vsyncpa [#allocation18], 1
    %4442 = vsyncpa [#allocation21], 1
    %4443 = vsyncpa [#allocation24], 1
    %4444 = vsyncpa [#allocation27], 1
    %4445 = vsyncpa [#allocation30], 1
    %4446 = vsyncpa [#allocation4], 1
    %s4447 = scalar_lea.sflag [#allocation4], 1
    %4448 = vsyncpa %s4447, 1

</llo_original>
